<compile_context>
chip_gen: v5e
topology: v5e:2x2
jax: 0.10.0
libtpu: 0.0.40
codegen_flags: <defaults>
</compile_context>

<pallas_src>
import functools

import jax
import jax.numpy as jnp
from jax.experimental import pallas as pl
from jax.experimental.pallas import tpu as pltpu


def _round_up(x, m):
    return (x + m - 1) // m * m


def _lstm_bidir_kernel(ids_ref, emb_ref, w_ih_ref, whh_f_ref, whh_b_ref,
                       b_gates_ref, w_label_ref, b_label_ref, out_ref, xw_ref,
                       *, seq_len, batch, hidden_size, out_size, unroll):
    T, B, H = seq_len, batch, hidden_size
    cdt = emb_ref.dtype                                 # matmul operand dtype
    prec = (jax.lax.Precision.HIGHEST
            if jnp.dtype(cdt) == jnp.dtype(jnp.float32) else None)

    # ---- Fused embedding gather + hoisted input projection (outside loop) ---
    # one_hot(ids) @ table expresses the gather as a single MXU matmul
    # (V_pad = 128 here, trivially VMEM resident).
    v_pad = emb_ref.shape[0]
    ids = ids_ref[...]                                  # (T*B, 1) int32
    iota_v = jax.lax.broadcasted_iota(jnp.int32, (T * B, v_pad), 1)
    onehot = (ids == iota_v).astype(jnp.float32).astype(cdt)
    x = jnp.dot(onehot, emb_ref[...], precision=prec,
                preferred_element_type=jnp.float32).astype(cdt)   # (T*B, E_pad)
    # Both directions' input projections + folded biases in one matmul; only
    # the recurrent (B, H) @ (H, 4H) dot remains inside the serial loop.
    xw_ref[...] = (jnp.dot(x, w_ih_ref[...], precision=prec,
                           preferred_element_type=jnp.float32)
                   + b_gates_ref[...])                  # (T*B, 8H) f32

    # Loop-invariant loads hoisted (JAX does not CSE inside fori_loop bodies).
    whh_f = whh_f_ref[...]
    whh_b = whh_b_ref[...]

    def gate_update(gates, c):
        # PyTorch gate order: i, f, g, o.
        i = jax.nn.sigmoid(gates[:, 0 * H:1 * H])
        f = jax.nn.sigmoid(gates[:, 1 * H:2 * H])
        g = jnp.tanh(gates[:, 2 * H:3 * H])
        o = jax.nn.sigmoid(gates[:, 3 * H:4 * H])
        c_new = f * c + i * g
        h_new = o * jnp.tanh(c_new)
        return h_new, c_new

    def step(t, carry):
        hf, cf, hb, cb = carry                          # f32 (B, H) each
        row_f = pl.multiple_of(t * B, 8)                # tile-aligned starts
        row_b = pl.multiple_of((T - 1 - t) * B, 8)
        g_f = (jnp.dot(hf.astype(cdt), whh_f, precision=prec,
                       preferred_element_type=jnp.float32)
               + xw_ref[pl.ds(row_f, B), :4 * H])
        g_b = (jnp.dot(hb.astype(cdt), whh_b, precision=prec,
                       preferred_element_type=jnp.float32)
               + xw_ref[pl.ds(row_b, B), 4 * H:])
        hf, cf = gate_update(g_f, cf)
        hb, cb = gate_update(g_b, cb)
        return hf, cf, hb, cb

    zeros = jnp.zeros((B, H), jnp.float32)              # PyTorch zero init
    hf, _, hb, _ = jax.lax.fori_loop(0, T, step, (zeros, zeros, zeros, zeros),
                                     unroll=unroll)

    # Final Linear over concat([h_fwd_final, h_bwd_final], dim=1) with
    # dropout(p=0) == identity.  (Backward final state = after consuming x[0],
    # matching PyTorch's hidden[-1, 1, :, :].)
    w_lab = w_label_ref[...]                            # (OUT, 2H) f32
    b_lab = b_label_ref[...]                            # (1, OUT) f32
    if out_size == 1:
        # OUT == 1: VPU multiply + lane reduction beats an MXU push/pop.
        out_ref[...] = (jnp.sum(hf * w_lab[:, :H], axis=1, keepdims=True)
                        + jnp.sum(hb * w_lab[:, H:], axis=1, keepdims=True)
                        + b_lab)
    else:
        h_cat = jnp.concatenate([hf, hb], axis=1)       # (B, 2H)
        out_ref[...] = jax.lax.dot_general(
            h_cat, w_lab, (((1,), (1,)), ((), ())),
            preferred_element_type=jnp.float32) + b_lab


def lstm_classifier_forward(sentence, params, *, hidden_size,
                            compute_dtype=jnp.float32):
    """sentence: int32 (T, B) token ids.  Returns f32 logits (B, output_size)."""
    H = hidden_size
    T, B = sentence.shape
    V, E = params["embedding"].shape
    OUT = params["b_label"].shape[-1]
    assert (4 * H) % 128 == 0, "4*hidden_size must be lane-tile aligned"

    B_pad = _round_up(B, 8)       # f32 sublane tile
    V_pad = _round_up(V, 128)     # one-hot contraction (K) tile
    E_pad = _round_up(E, 128)     # input-projection contraction (K) tile
    cdt = compute_dtype

    # Token ids, batch-padded with 0 (padded rows are dropped at the end).
    ids = jnp.zeros((T, B_pad), jnp.int32).at[:, :B].set(sentence)
    ids = ids.reshape(T * B_pad, 1)

    # Zero-padded embedding table (padded rows/cols contribute nothing).
    emb = jnp.zeros((V_pad, E_pad), cdt).at[:V, :E].set(
        params["embedding"].astype(cdt))

    # Input-projection weights of both directions stacked along lanes,
    # rows zero-padded to E_pad.
    w_ih = jnp.zeros((E_pad, 8 * H), cdt)
    w_ih = w_ih.at[:E, :4 * H].set(params["wih_f"].astype(cdt))
    w_ih = w_ih.at[:E, 4 * H:].set(params["wih_b"].astype(cdt))

    whh_f = params["whh_f"].astype(cdt)                          # (H, 4H)
    whh_b = params["whh_b"].astype(cdt)                          # (H, 4H)
    b_gates = jnp.concatenate([params["b_f"], params["b_b"]],
                              axis=1).astype(jnp.float32)        # (1, 8H)
    w_label = params["w_label"].astype(jnp.float32).T            # (OUT, 2H)
    b_label = params["b_label"].astype(jnp.float32)              # (1, OUT)

    kernel = functools.partial(
        _lstm_bidir_kernel, seq_len=T, batch=B_pad, hidden_size=H,
        out_size=OUT, unroll=True if T <= 16 else 8)

    operands = (ids, emb, w_ih, whh_f, whh_b, b_gates, w_label, b_label)
    scratch_bytes = T * B_pad * 8 * H * 4
    out_bytes = B_pad * OUT * 4
    vmem_needed = (2 * sum(int(a.size) * a.dtype.itemsize for a in operands)
                   + scratch_bytes + 2 * out_bytes + (2 << 20))
    # Budget from actual shapes; clamp well below v7x's 64 MiB physical VMEM.
    vmem_limit = int(min(max(vmem_needed, 4 << 20), 48 << 20))

    out = pl.pallas_call(
        kernel,
        out_shape=jax.ShapeDtypeStruct((B_pad, OUT), jnp.float32),
        scratch_shapes=[pltpu.VMEM((T * B_pad, 8 * H), jnp.float32)],
        compiler_params=pltpu.CompilerParams(vmem_limit_bytes=vmem_limit),
    )(*operands)
    return out[:B]


def reference_forward(sentence, params, *, hidden_size):
    """Pure-JAX reference (lax.scan) mirroring PyTorch LSTMClassifier.forward."""
    emb = params["embedding"][sentence].astype(jnp.float32)      # (T, B, E)
    H = hidden_size
    B = emb.shape[1]
    hi = jax.lax.Precision.HIGHEST

    def make_step(wih, whh, b):
        def step(carry, x):
            h, c = carry
            gates = (jnp.dot(x, wih, precision=hi)
                     + jnp.dot(h, whh, precision=hi) + b)
            i = jax.nn.sigmoid(gates[:, :H])
            f = jax.nn.sigmoid(gates[:, H:2 * H])
            g = jnp.tanh(gates[:, 2 * H:3 * H])
            o = jax.nn.sigmoid(gates[:, 3 * H:])
            c = f * c + i * g
            h = o * jnp.tanh(c)
            return (h, c), None
        return step

    init = (jnp.zeros((B, H), jnp.float32), jnp.zeros((B, H), jnp.float32))
    (hf, _), _ = jax.lax.scan(
        make_step(params["wih_f"], params["whh_f"], params["b_f"]), init, emb)
    (hb, _), _ = jax.lax.scan(
        make_step(params["wih_b"], params["whh_b"], params["b_b"]), init,
        emb[::-1])
    concat = jnp.concatenate([hf, hb], axis=1)
    return jnp.dot(concat, params["w_label"], precision=hi) + params["b_label"]


if __name__ == "__main__":
    T, B = 8, 2                  # seq_len, batch
    V, E = 50, 100               # vocab_size, embedding_dim (module default)
    H, OUT = 32, 1               # hidden_size (small), output_size=1

    key = jax.random.PRNGKey(0)
    ks = jax.random.split(key, 10)
    scale = 0.1
    params = {
        # nn.Embedding(vocab_size, embedding_dim)
        "embedding": jax.random.normal(ks[0], (V, E), jnp.float32),
        # nn.LSTM(E, H, bidirectional=True): weights stored pre-transposed,
        # bias = b_ih + b_hh folded into one (1, 4H) tensor per direction.
        "wih_f": scale * jax.random.normal(ks[1], (E, 4 * H), jnp.float32),
        "whh_f": scale * jax.random.normal(ks[2], (H, 4 * H), jnp.float32),
        "b_f": scale * jax.random.normal(ks[3], (1, 4 * H), jnp.float32),
        "wih_b": scale * jax.random.normal(ks[4], (E, 4 * H), jnp.float32),
        "whh_b": scale * jax.random.normal(ks[5], (H, 4 * H), jnp.float32),
        "b_b": scale * jax.random.normal(ks[6], (1, 4 * H), jnp.float32),
        # nn.Linear(2H, 1): stored as (2H, OUT) + (1, OUT)
        "w_label": scale * jax.random.normal(ks[7], (2 * H, OUT), jnp.float32),
        "b_label": scale * jax.random.normal(ks[8], (1, OUT), jnp.float32),
    }
    sentence = jax.random.randint(ks[9], (T, B), 0, V, dtype=jnp.int32)

    ref = reference_forward(sentence, params, hidden_size=H)

    # f32 matmul-operand path — tight tolerance vs. the lax.scan reference.
    out_f32 = jax.block_until_ready(
        lstm_classifier_forward(sentence, params, hidden_size=H,
                                compute_dtype=jnp.float32))
    assert out_f32.shape == (B, OUT), out_f32.shape
    assert jnp.allclose(out_f32, ref, atol=2e-3, rtol=2e-3), (out_f32, ref)

    # bf16 matmul-operand path (MXU-native on v5e/v6e/v7x); state stays f32.
    out_bf16 = jax.block_until_ready(
        lstm_classifier_forward(sentence, params, hidden_size=H,
                                compute_dtype=jnp.bfloat16))
    assert out_bf16.shape == (B, OUT), out_bf16.shape
    assert jnp.allclose(out_bf16, ref, atol=3e-2, rtol=3e-2), (out_bf16, ref)

    print("KERNEL_OK")
</pallas_src>

<mosaic_0001>
module attributes {stable_mosaic.version = 11 : i64} {
  func.func @_lstm_bidir_kernel(%arg0: memref<64x1xi32, #tpu.memory_space<vmem>>, %arg1: memref<128x128xf32, #tpu.memory_space<vmem>>, %arg2: memref<128x256xf32, #tpu.memory_space<vmem>>, %arg3: memref<32x128xf32, #tpu.memory_space<vmem>>, %arg4: memref<32x128xf32, #tpu.memory_space<vmem>>, %arg5: memref<1x256xf32, #tpu.memory_space<vmem>>, %arg6: memref<1x64xf32, #tpu.memory_space<vmem>>, %arg7: memref<1x1xf32, #tpu.memory_space<vmem>>, %arg8: memref<8x1xf32, #tpu.memory_space<vmem>>, %arg9: memref<64x256xf32, #tpu.memory_space<vmem>>) attributes {dimension_semantics = [], scalar_prefetch = 0 : i64, scratch_operands = 1 : i64, tpu.core_type = #tpu.core_type<tc>} {
    %c0 = arith.constant 0 : index
    %c0_0 = arith.constant 0 : index
    %0 = vector.load %arg0[%c0, %c0_0] : memref<64x1xi32, #tpu.memory_space<vmem>>, vector<64x1xi32>
    %1 = tpu.iota {dimensions = array<i32: 1>} : vector<64x128xi32>
    %2 = vector.broadcast %0 : vector<64x1xi32> to vector<64x128xi32>
    %3 = arith.cmpi eq, %2, %1 : vector<64x128xi32>
    %4 = arith.extui %3 : vector<64x128xi1> to vector<64x128xi32>
    %5 = arith.sitofp %4 : vector<64x128xi32> to vector<64x128xf32>
    %c0_1 = arith.constant 0 : index
    %c0_2 = arith.constant 0 : index
    %6 = vector.load %arg1[%c0_1, %c0_2] : memref<128x128xf32, #tpu.memory_space<vmem>>, vector<128x128xf32>
    %cst = arith.constant dense<0.000000e+00> : vector<64x128xf32>
    %7 = tpu.matmul %5, %6, %cst {dimension_numbers = #tpu.dot_dimension_numbers<[1], [0], [0], [1], [0, 0, 1, 1], [], []>, precision = #tpu.contract_precision<fp32>} : vector<64x128xf32>, vector<128x128xf32>, vector<64x128xf32> -> vector<64x128xf32>
    %c0_3 = arith.constant 0 : index
    %c0_4 = arith.constant 0 : index
    %8 = vector.load %arg2[%c0_3, %c0_4] : memref<128x256xf32, #tpu.memory_space<vmem>>, vector<128x256xf32>
    %cst_5 = arith.constant dense<0.000000e+00> : vector<64x256xf32>
    %9 = tpu.matmul %7, %8, %cst_5 {dimension_numbers = #tpu.dot_dimension_numbers<[1], [0], [0], [1], [0, 0, 1, 1], [], []>, precision = #tpu.contract_precision<fp32>} : vector<64x128xf32>, vector<128x256xf32>, vector<64x256xf32> -> vector<64x256xf32>
    %c0_6 = arith.constant 0 : index
    %c0_7 = arith.constant 0 : index
    %10 = vector.load %arg5[%c0_6, %c0_7] : memref<1x256xf32, #tpu.memory_space<vmem>>, vector<1x256xf32>
    %11 = vector.broadcast %10 : vector<1x256xf32> to vector<64x256xf32>
    %12 = arith.addf %9, %11 : vector<64x256xf32>
    %c0_8 = arith.constant 0 : index
    %c0_9 = arith.constant 0 : index
    %13 = vector.load %arg9[%c0_8, %c0_9] : memref<64x256xf32, #tpu.memory_space<vmem>>, vector<64x256xf32>
    tpu.vector_store %arg9[%c0_8, %c0_9], %12 {strides = array<i32>} : memref<64x256xf32, #tpu.memory_space<vmem>>, vector<64x256xf32>,
    %c0_10 = arith.constant 0 : index
    %c0_11 = arith.constant 0 : index
    %14 = vector.load %arg3[%c0_10, %c0_11] : memref<32x128xf32, #tpu.memory_space<vmem>>, vector<32x128xf32>
    %c0_12 = arith.constant 0 : index
    %c0_13 = arith.constant 0 : index
    %15 = vector.load %arg4[%c0_12, %c0_13] : memref<32x128xf32, #tpu.memory_space<vmem>>, vector<32x128xf32>
    %cst_14 = arith.constant 0.000000e+00 : f32
    %16 = vector.broadcast %cst_14 : f32 to vector<8x32xf32>
    %c0_i32 = arith.constant 0 : i32
    %c8_i32 = arith.constant 8 : i32
    %17 = arith.muli %c0_i32, %c8_i32 : i32
    %18 = tpu.assume_multiple %17, 8 : i32
    %c7_i32 = arith.constant 7 : i32
    %19 = arith.subi %c7_i32, %c0_i32 : i32
    %c8_i32_15 = arith.constant 8 : i32
    %20 = arith.muli %19, %c8_i32_15 : i32
    %21 = tpu.assume_multiple %20, 8 : i32
    %cst_16 = arith.constant dense<0.000000e+00> : vector<8x128xf32>
    %22 = tpu.matmul %16, %14, %cst_16 {dimension_numbers = #tpu.dot_dimension_numbers<[1], [0], [0], [1], [0, 0, 1, 1], [], []>, precision = #tpu.contract_precision<fp32>} : vector<8x32xf32>, vector<32x128xf32>, vector<8x128xf32> -> vector<8x128xf32>
    %23 = arith.index_cast %18 : i32 to index
    %c0_17 = arith.constant 0 : index
    %24 = vector.load %arg9[%23, %c0_17] : memref<64x256xf32, #tpu.memory_space<vmem>>, vector<8x128xf32>
    %25 = arith.addf %22, %24 : vector<8x128xf32>
    %cst_18 = arith.constant dense<0.000000e+00> : vector<8x128xf32>
    %26 = tpu.matmul %16, %15, %cst_18 {dimension_numbers = #tpu.dot_dimension_numbers<[1], [0], [0], [1], [0, 0, 1, 1], [], []>, precision = #tpu.contract_precision<fp32>} : vector<8x32xf32>, vector<32x128xf32>, vector<8x128xf32> -> vector<8x128xf32>
    %27 = arith.index_cast %21 : i32 to index
    %c128 = arith.constant 128 : index
    %28 = vector.load %arg9[%27, %c128] : memref<64x256xf32, #tpu.memory_space<vmem>>, vector<8x128xf32>
    %29 = arith.addf %26, %28 : vector<8x128xf32>
    %30 = vector.extract_strided_slice %25 {offsets = [0, 0], sizes = [8, 32], strides = [1, 1]} : vector<8x128xf32> to vector<8x32xf32>
    %31 = arith.negf %30 : vector<8x32xf32>
    %32 = math.exp %31 : vector<8x32xf32>
    %cst_19 = arith.constant 1.000000e+00 : f32
    %33 = vector.broadcast %cst_19 : f32 to vector<8x32xf32>
    %34 = arith.addf %33, %32 : vector<8x32xf32>
    %35 = arith.divf %33, %34 : vector<8x32xf32>
    %36 = vector.extract_strided_slice %25 {offsets = [0, 32], sizes = [8, 32], strides = [1, 1]} : vector<8x128xf32> to vector<8x32xf32>
    %37 = arith.negf %36 : vector<8x32xf32>
    %38 = math.exp %37 : vector<8x32xf32>
    %cst_20 = arith.constant 1.000000e+00 : f32
    %39 = vector.broadcast %cst_20 : f32 to vector<8x32xf32>
    %40 = arith.addf %39, %38 : vector<8x32xf32>
    %41 = arith.divf %39, %40 : vector<8x32xf32>
    %42 = vector.extract_strided_slice %25 {offsets = [0, 64], sizes = [8, 32], strides = [1, 1]} : vector<8x128xf32> to vector<8x32xf32>
    %43 = math.tanh %42 : vector<8x32xf32>
    %44 = vector.extract_strided_slice %25 {offsets = [0, 96], sizes = [8, 32], strides = [1, 1]} : vector<8x128xf32> to vector<8x32xf32>
    %45 = arith.negf %44 : vector<8x32xf32>
    %46 = math.exp %45 : vector<8x32xf32>
    %cst_21 = arith.constant 1.000000e+00 : f32
    %47 = vector.broadcast %cst_21 : f32 to vector<8x32xf32>
    %48 = arith.addf %47, %46 : vector<8x32xf32>
    %49 = arith.divf %47, %48 : vector<8x32xf32>
    %50 = arith.mulf %41, %16 : vector<8x32xf32>
    %51 = arith.mulf %35, %43 : vector<8x32xf32>
    %52 = arith.addf %50, %51 : vector<8x32xf32>
    %53 = math.tanh %52 : vector<8x32xf32>
    %54 = arith.mulf %49, %53 : vector<8x32xf32>
    %55 = vector.extract_strided_slice %29 {offsets = [0, 0], sizes = [8, 32], strides = [1, 1]} : vector<8x128xf32> to vector<8x32xf32>
    %56 = arith.negf %55 : vector<8x32xf32>
    %57 = math.exp %56 : vector<8x32xf32>
    %cst_22 = arith.constant 1.000000e+00 : f32
    %58 = vector.broadcast %cst_22 : f32 to vector<8x32xf32>
    %59 = arith.addf %58, %57 : vector<8x32xf32>
    %60 = arith.divf %58, %59 : vector<8x32xf32>
    %61 = vector.extract_strided_slice %29 {offsets = [0, 32], sizes = [8, 32], strides = [1, 1]} : vector<8x128xf32> to vector<8x32xf32>
    %62 = arith.negf %61 : vector<8x32xf32>
    %63 = math.exp %62 : vector<8x32xf32>
    %cst_23 = arith.constant 1.000000e+00 : f32
    %64 = vector.broadcast %cst_23 : f32 to vector<8x32xf32>
    %65 = arith.addf %64, %63 : vector<8x32xf32>
    %66 = arith.divf %64, %65 : vector<8x32xf32>
    %67 = vector.extract_strided_slice %29 {offsets = [0, 64], sizes = [8, 32], strides = [1, 1]} : vector<8x128xf32> to vector<8x32xf32>
    %68 = math.tanh %67 : vector<8x32xf32>
    %69 = vector.extract_strided_slice %29 {offsets = [0, 96], sizes = [8, 32], strides = [1, 1]} : vector<8x128xf32> to vector<8x32xf32>
    %70 = arith.negf %69 : vector<8x32xf32>
    %71 = math.exp %70 : vector<8x32xf32>
    %cst_24 = arith.constant 1.000000e+00 : f32
    %72 = vector.broadcast %cst_24 : f32 to vector<8x32xf32>
    %73 = arith.addf %72, %71 : vector<8x32xf32>
    %74 = arith.divf %72, %73 : vector<8x32xf32>
    %75 = arith.mulf %66, %16 : vector<8x32xf32>
    %76 = arith.mulf %60, %68 : vector<8x32xf32>
    %77 = arith.addf %75, %76 : vector<8x32xf32>
    %78 = math.tanh %77 : vector<8x32xf32>
    %79 = arith.mulf %74, %78 : vector<8x32xf32>
    %c1_i32 = arith.constant 1 : i32
    %c8_i32_25 = arith.constant 8 : i32
    %80 = arith.muli %c1_i32, %c8_i32_25 : i32
    %81 = tpu.assume_multiple %80, 8 : i32
    %c7_i32_26 = arith.constant 7 : i32
    %82 = arith.subi %c7_i32_26, %c1_i32 : i32
    %c8_i32_27 = arith.constant 8 : i32
    %83 = arith.muli %82, %c8_i32_27 : i32
    %84 = tpu.assume_multiple %83, 8 : i32
    %cst_28 = arith.constant dense<0.000000e+00> : vector<8x128xf32>
    %85 = tpu.matmul %54, %14, %cst_28 {dimension_numbers = #tpu.dot_dimension_numbers<[1], [0], [0], [1], [0, 0, 1, 1], [], []>, precision = #tpu.contract_precision<fp32>} : vector<8x32xf32>, vector<32x128xf32>, vector<8x128xf32> -> vector<8x128xf32>
    %86 = arith.index_cast %81 : i32 to index
    %c0_29 = arith.constant 0 : index
    %87 = vector.load %arg9[%86, %c0_29] : memref<64x256xf32, #tpu.memory_space<vmem>>, vector<8x128xf32>
    %88 = arith.addf %85, %87 : vector<8x128xf32>
    %cst_30 = arith.constant dense<0.000000e+00> : vector<8x128xf32>
    %89 = tpu.matmul %79, %15, %cst_30 {dimension_numbers = #tpu.dot_dimension_numbers<[1], [0], [0], [1], [0, 0, 1, 1], [], []>, precision = #tpu.contract_precision<fp32>} : vector<8x32xf32>, vector<32x128xf32>, vector<8x128xf32> -> vector<8x128xf32>
    %90 = arith.index_cast %84 : i32 to index
    %c128_31 = arith.constant 128 : index
    %91 = vector.load %arg9[%90, %c128_31] : memref<64x256xf32, #tpu.memory_space<vmem>>, vector<8x128xf32>
    %92 = arith.addf %89, %91 : vector<8x128xf32>
    %93 = vector.extract_strided_slice %88 {offsets = [0, 0], sizes = [8, 32], strides = [1, 1]} : vector<8x128xf32> to vector<8x32xf32>
    %94 = arith.negf %93 : vector<8x32xf32>
    %95 = math.exp %94 : vector<8x32xf32>
    %cst_32 = arith.constant 1.000000e+00 : f32
    %96 = vector.broadcast %cst_32 : f32 to vector<8x32xf32>
    %97 = arith.addf %96, %95 : vector<8x32xf32>
    %98 = arith.divf %96, %97 : vector<8x32xf32>
    %99 = vector.extract_strided_slice %88 {offsets = [0, 32], sizes = [8, 32], strides = [1, 1]} : vector<8x128xf32> to vector<8x32xf32>
    %100 = arith.negf %99 : vector<8x32xf32>
    %101 = math.exp %100 : vector<8x32xf32>
    %cst_33 = arith.constant 1.000000e+00 : f32
    %102 = vector.broadcast %cst_33 : f32 to vector<8x32xf32>
    %103 = arith.addf %102, %101 : vector<8x32xf32>
    %104 = arith.divf %102, %103 : vector<8x32xf32>
    %105 = vector.extract_strided_slice %88 {offsets = [0, 64], sizes = [8, 32], strides = [1, 1]} : vector<8x128xf32> to vector<8x32xf32>
    %106 = math.tanh %105 : vector<8x32xf32>
    %107 = vector.extract_strided_slice %88 {offsets = [0, 96], sizes = [8, 32], strides = [1, 1]} : vector<8x128xf32> to vector<8x32xf32>
    %108 = arith.negf %107 : vector<8x32xf32>
    %109 = math.exp %108 : vector<8x32xf32>
    %cst_34 = arith.constant 1.000000e+00 : f32
    %110 = vector.broadcast %cst_34 : f32 to vector<8x32xf32>
    %111 = arith.addf %110, %109 : vector<8x32xf32>
    %112 = arith.divf %110, %111 : vector<8x32xf32>
    %113 = arith.mulf %104, %52 : vector<8x32xf32>
    %114 = arith.mulf %98, %106 : vector<8x32xf32>
    %115 = arith.addf %113, %114 : vector<8x32xf32>
    %116 = math.tanh %115 : vector<8x32xf32>
    %117 = arith.mulf %112, %116 : vector<8x32xf32>
    %118 = vector.extract_strided_slice %92 {offsets = [0, 0], sizes = [8, 32], strides = [1, 1]} : vector<8x128xf32> to vector<8x32xf32>
    %119 = arith.negf %118 : vector<8x32xf32>
    %120 = math.exp %119 : vector<8x32xf32>
    %cst_35 = arith.constant 1.000000e+00 : f32
    %121 = vector.broadcast %cst_35 : f32 to vector<8x32xf32>
    %122 = arith.addf %121, %120 : vector<8x32xf32>
    %123 = arith.divf %121, %122 : vector<8x32xf32>
    %124 = vector.extract_strided_slice %92 {offsets = [0, 32], sizes = [8, 32], strides = [1, 1]} : vector<8x128xf32> to vector<8x32xf32>
    %125 = arith.negf %124 : vector<8x32xf32>
    %126 = math.exp %125 : vector<8x32xf32>
    %cst_36 = arith.constant 1.000000e+00 : f32
    %127 = vector.broadcast %cst_36 : f32 to vector<8x32xf32>
    %128 = arith.addf %127, %126 : vector<8x32xf32>
    %129 = arith.divf %127, %128 : vector<8x32xf32>
    %130 = vector.extract_strided_slice %92 {offsets = [0, 64], sizes = [8, 32], strides = [1, 1]} : vector<8x128xf32> to vector<8x32xf32>
    %131 = math.tanh %130 : vector<8x32xf32>
    %132 = vector.extract_strided_slice %92 {offsets = [0, 96], sizes = [8, 32], strides = [1, 1]} : vector<8x128xf32> to vector<8x32xf32>
    %133 = arith.negf %132 : vector<8x32xf32>
    %134 = math.exp %133 : vector<8x32xf32>
    %cst_37 = arith.constant 1.000000e+00 : f32
    %135 = vector.broadcast %cst_37 : f32 to vector<8x32xf32>
    %136 = arith.addf %135, %134 : vector<8x32xf32>
    %137 = arith.divf %135, %136 : vector<8x32xf32>
    %138 = arith.mulf %129, %77 : vector<8x32xf32>
    %139 = arith.mulf %123, %131 : vector<8x32xf32>
    %140 = arith.addf %138, %139 : vector<8x32xf32>
    %141 = math.tanh %140 : vector<8x32xf32>
    %142 = arith.mulf %137, %141 : vector<8x32xf32>
    %c2_i32 = arith.constant 2 : i32
    %c8_i32_38 = arith.constant 8 : i32
    %143 = arith.muli %c2_i32, %c8_i32_38 : i32
    %144 = tpu.assume_multiple %143, 8 : i32
    %c7_i32_39 = arith.constant 7 : i32
    %145 = arith.subi %c7_i32_39, %c2_i32 : i32
    %c8_i32_40 = arith.constant 8 : i32
    %146 = arith.muli %145, %c8_i32_40 : i32
    %147 = tpu.assume_multiple %146, 8 : i32
    %cst_41 = arith.constant dense<0.000000e+00> : vector<8x128xf32>
    %148 = tpu.matmul %117, %14, %cst_41 {dimension_numbers = #tpu.dot_dimension_numbers<[1], [0], [0], [1], [0, 0, 1, 1], [], []>, precision = #tpu.contract_precision<fp32>} : vector<8x32xf32>, vector<32x128xf32>, vector<8x128xf32> -> vector<8x128xf32>
    %149 = arith.index_cast %144 : i32 to index
    %c0_42 = arith.constant 0 : index
    %150 = vector.load %arg9[%149, %c0_42] : memref<64x256xf32, #tpu.memory_space<vmem>>, vector<8x128xf32>
    %151 = arith.addf %148, %150 : vector<8x128xf32>
    %cst_43 = arith.constant dense<0.000000e+00> : vector<8x128xf32>
    %152 = tpu.matmul %142, %15, %cst_43 {dimension_numbers = #tpu.dot_dimension_numbers<[1], [0], [0], [1], [0, 0, 1, 1], [], []>, precision = #tpu.contract_precision<fp32>} : vector<8x32xf32>, vector<32x128xf32>, vector<8x128xf32> -> vector<8x128xf32>
    %153 = arith.index_cast %147 : i32 to index
    %c128_44 = arith.constant 128 : index
    %154 = vector.load %arg9[%153, %c128_44] : memref<64x256xf32, #tpu.memory_space<vmem>>, vector<8x128xf32>
    %155 = arith.addf %152, %154 : vector<8x128xf32>
    %156 = vector.extract_strided_slice %151 {offsets = [0, 0], sizes = [8, 32], strides = [1, 1]} : vector<8x128xf32> to vector<8x32xf32>
    %157 = arith.negf %156 : vector<8x32xf32>
    %158 = math.exp %157 : vector<8x32xf32>
    %cst_45 = arith.constant 1.000000e+00 : f32
    %159 = vector.broadcast %cst_45 : f32 to vector<8x32xf32>
    %160 = arith.addf %159, %158 : vector<8x32xf32>
    %161 = arith.divf %159, %160 : vector<8x32xf32>
    %162 = vector.extract_strided_slice %151 {offsets = [0, 32], sizes = [8, 32], strides = [1, 1]} : vector<8x128xf32> to vector<8x32xf32>
    %163 = arith.negf %162 : vector<8x32xf32>
    %164 = math.exp %163 : vector<8x32xf32>
    %cst_46 = arith.constant 1.000000e+00 : f32
    %165 = vector.broadcast %cst_46 : f32 to vector<8x32xf32>
    %166 = arith.addf %165, %164 : vector<8x32xf32>
    %167 = arith.divf %165, %166 : vector<8x32xf32>
    %168 = vector.extract_strided_slice %151 {offsets = [0, 64], sizes = [8, 32], strides = [1, 1]} : vector<8x128xf32> to vector<8x32xf32>
    %169 = math.tanh %168 : vector<8x32xf32>
    %170 = vector.extract_strided_slice %151 {offsets = [0, 96], sizes = [8, 32], strides = [1, 1]} : vector<8x128xf32> to vector<8x32xf32>
    %171 = arith.negf %170 : vector<8x32xf32>
    %172 = math.exp %171 : vector<8x32xf32>
    %cst_47 = arith.constant 1.000000e+00 : f32
    %173 = vector.broadcast %cst_47 : f32 to vector<8x32xf32>
    %174 = arith.addf %173, %172 : vector<8x32xf32>
    %175 = arith.divf %173, %174 : vector<8x32xf32>
    %176 = arith.mulf %167, %115 : vector<8x32xf32>
    %177 = arith.mulf %161, %169 : vector<8x32xf32>
    %178 = arith.addf %176, %177 : vector<8x32xf32>
    %179 = math.tanh %178 : vector<8x32xf32>
    %180 = arith.mulf %175, %179 : vector<8x32xf32>
    %181 = vector.extract_strided_slice %155 {offsets = [0, 0], sizes = [8, 32], strides = [1, 1]} : vector<8x128xf32> to vector<8x32xf32>
    %182 = arith.negf %181 : vector<8x32xf32>
    %183 = math.exp %182 : vector<8x32xf32>
    %cst_48 = arith.constant 1.000000e+00 : f32
    %184 = vector.broadcast %cst_48 : f32 to vector<8x32xf32>
    %185 = arith.addf %184, %183 : vector<8x32xf32>
    %186 = arith.divf %184, %185 : vector<8x32xf32>
    %187 = vector.extract_strided_slice %155 {offsets = [0, 32], sizes = [8, 32], strides = [1, 1]} : vector<8x128xf32> to vector<8x32xf32>
    %188 = arith.negf %187 : vector<8x32xf32>
    %189 = math.exp %188 : vector<8x32xf32>
    %cst_49 = arith.constant 1.000000e+00 : f32
    %190 = vector.broadcast %cst_49 : f32 to vector<8x32xf32>
    %191 = arith.addf %190, %189 : vector<8x32xf32>
    %192 = arith.divf %190, %191 : vector<8x32xf32>
    %193 = vector.extract_strided_slice %155 {offsets = [0, 64], sizes = [8, 32], strides = [1, 1]} : vector<8x128xf32> to vector<8x32xf32>
    %194 = math.tanh %193 : vector<8x32xf32>
    %195 = vector.extract_strided_slice %155 {offsets = [0, 96], sizes = [8, 32], strides = [1, 1]} : vector<8x128xf32> to vector<8x32xf32>
    %196 = arith.negf %195 : vector<8x32xf32>
    %197 = math.exp %196 : vector<8x32xf32>
    %cst_50 = arith.constant 1.000000e+00 : f32
    %198 = vector.broadcast %cst_50 : f32 to vector<8x32xf32>
    %199 = arith.addf %198, %197 : vector<8x32xf32>
    %200 = arith.divf %198, %199 : vector<8x32xf32>
    %201 = arith.mulf %192, %140 : vector<8x32xf32>
    %202 = arith.mulf %186, %194 : vector<8x32xf32>
    %203 = arith.addf %201, %202 : vector<8x32xf32>
    %204 = math.tanh %203 : vector<8x32xf32>
    %205 = arith.mulf %200, %204 : vector<8x32xf32>
    %c3_i32 = arith.constant 3 : i32
    %c8_i32_51 = arith.constant 8 : i32
    %206 = arith.muli %c3_i32, %c8_i32_51 : i32
    %207 = tpu.assume_multiple %206, 8 : i32
    %c7_i32_52 = arith.constant 7 : i32
    %208 = arith.subi %c7_i32_52, %c3_i32 : i32
    %c8_i32_53 = arith.constant 8 : i32
    %209 = arith.muli %208, %c8_i32_53 : i32
    %210 = tpu.assume_multiple %209, 8 : i32
    %cst_54 = arith.constant dense<0.000000e+00> : vector<8x128xf32>
    %211 = tpu.matmul %180, %14, %cst_54 {dimension_numbers = #tpu.dot_dimension_numbers<[1], [0], [0], [1], [0, 0, 1, 1], [], []>, precision = #tpu.contract_precision<fp32>} : vector<8x32xf32>, vector<32x128xf32>, vector<8x128xf32> -> vector<8x128xf32>
    %212 = arith.index_cast %207 : i32 to index
    %c0_55 = arith.constant 0 : index
    %213 = vector.load %arg9[%212, %c0_55] : memref<64x256xf32, #tpu.memory_space<vmem>>, vector<8x128xf32>
    %214 = arith.addf %211, %213 : vector<8x128xf32>
    %cst_56 = arith.constant dense<0.000000e+00> : vector<8x128xf32>
    %215 = tpu.matmul %205, %15, %cst_56 {dimension_numbers = #tpu.dot_dimension_numbers<[1], [0], [0], [1], [0, 0, 1, 1], [], []>, precision = #tpu.contract_precision<fp32>} : vector<8x32xf32>, vector<32x128xf32>, vector<8x128xf32> -> vector<8x128xf32>
    %216 = arith.index_cast %210 : i32 to index
    %c128_57 = arith.constant 128 : index
    %217 = vector.load %arg9[%216, %c128_57] : memref<64x256xf32, #tpu.memory_space<vmem>>, vector<8x128xf32>
    %218 = arith.addf %215, %217 : vector<8x128xf32>
    %219 = vector.extract_strided_slice %214 {offsets = [0, 0], sizes = [8, 32], strides = [1, 1]} : vector<8x128xf32> to vector<8x32xf32>
    %220 = arith.negf %219 : vector<8x32xf32>
    %221 = math.exp %220 : vector<8x32xf32>
    %cst_58 = arith.constant 1.000000e+00 : f32
    %222 = vector.broadcast %cst_58 : f32 to vector<8x32xf32>
    %223 = arith.addf %222, %221 : vector<8x32xf32>
    %224 = arith.divf %222, %223 : vector<8x32xf32>
    %225 = vector.extract_strided_slice %214 {offsets = [0, 32], sizes = [8, 32], strides = [1, 1]} : vector<8x128xf32> to vector<8x32xf32>
    %226 = arith.negf %225 : vector<8x32xf32>
    %227 = math.exp %226 : vector<8x32xf32>
    %cst_59 = arith.constant 1.000000e+00 : f32
    %228 = vector.broadcast %cst_59 : f32 to vector<8x32xf32>
    %229 = arith.addf %228, %227 : vector<8x32xf32>
    %230 = arith.divf %228, %229 : vector<8x32xf32>
    %231 = vector.extract_strided_slice %214 {offsets = [0, 64], sizes = [8, 32], strides = [1, 1]} : vector<8x128xf32> to vector<8x32xf32>
    %232 = math.tanh %231 : vector<8x32xf32>
    %233 = vector.extract_strided_slice %214 {offsets = [0, 96], sizes = [8, 32], strides = [1, 1]} : vector<8x128xf32> to vector<8x32xf32>
    %234 = arith.negf %233 : vector<8x32xf32>
    %235 = math.exp %234 : vector<8x32xf32>
    %cst_60 = arith.constant 1.000000e+00 : f32
    %236 = vector.broadcast %cst_60 : f32 to vector<8x32xf32>
    %237 = arith.addf %236, %235 : vector<8x32xf32>
    %238 = arith.divf %236, %237 : vector<8x32xf32>
    %239 = arith.mulf %230, %178 : vector<8x32xf32>
    %240 = arith.mulf %224, %232 : vector<8x32xf32>
    %241 = arith.addf %239, %240 : vector<8x32xf32>
    %242 = math.tanh %241 : vector<8x32xf32>
    %243 = arith.mulf %238, %242 : vector<8x32xf32>
    %244 = vector.extract_strided_slice %218 {offsets = [0, 0], sizes = [8, 32], strides = [1, 1]} : vector<8x128xf32> to vector<8x32xf32>
    %245 = arith.negf %244 : vector<8x32xf32>
    %246 = math.exp %245 : vector<8x32xf32>
    %cst_61 = arith.constant 1.000000e+00 : f32
    %247 = vector.broadcast %cst_61 : f32 to vector<8x32xf32>
    %248 = arith.addf %247, %246 : vector<8x32xf32>
    %249 = arith.divf %247, %248 : vector<8x32xf32>
    %250 = vector.extract_strided_slice %218 {offsets = [0, 32], sizes = [8, 32], strides = [1, 1]} : vector<8x128xf32> to vector<8x32xf32>
    %251 = arith.negf %250 : vector<8x32xf32>
    %252 = math.exp %251 : vector<8x32xf32>
    %cst_62 = arith.constant 1.000000e+00 : f32
    %253 = vector.broadcast %cst_62 : f32 to vector<8x32xf32>
    %254 = arith.addf %253, %252 : vector<8x32xf32>
    %255 = arith.divf %253, %254 : vector<8x32xf32>
    %256 = vector.extract_strided_slice %218 {offsets = [0, 64], sizes = [8, 32], strides = [1, 1]} : vector<8x128xf32> to vector<8x32xf32>
    %257 = math.tanh %256 : vector<8x32xf32>
    %258 = vector.extract_strided_slice %218 {offsets = [0, 96], sizes = [8, 32], strides = [1, 1]} : vector<8x128xf32> to vector<8x32xf32>
    %259 = arith.negf %258 : vector<8x32xf32>
    %260 = math.exp %259 : vector<8x32xf32>
    %cst_63 = arith.constant 1.000000e+00 : f32
    %261 = vector.broadcast %cst_63 : f32 to vector<8x32xf32>
    %262 = arith.addf %261, %260 : vector<8x32xf32>
    %263 = arith.divf %261, %262 : vector<8x32xf32>
    %264 = arith.mulf %255, %203 : vector<8x32xf32>
    %265 = arith.mulf %249, %257 : vector<8x32xf32>
    %266 = arith.addf %264, %265 : vector<8x32xf32>
    %267 = math.tanh %266 : vector<8x32xf32>
    %268 = arith.mulf %263, %267 : vector<8x32xf32>
    %c4_i32 = arith.constant 4 : i32
    %c8_i32_64 = arith.constant 8 : i32
    %269 = arith.muli %c4_i32, %c8_i32_64 : i32
    %270 = tpu.assume_multiple %269, 8 : i32
    %c7_i32_65 = arith.constant 7 : i32
    %271 = arith.subi %c7_i32_65, %c4_i32 : i32
    %c8_i32_66 = arith.constant 8 : i32
    %272 = arith.muli %271, %c8_i32_66 : i32
    %273 = tpu.assume_multiple %272, 8 : i32
    %cst_67 = arith.constant dense<0.000000e+00> : vector<8x128xf32>
    %274 = tpu.matmul %243, %14, %cst_67 {dimension_numbers = #tpu.dot_dimension_numbers<[1], [0], [0], [1], [0, 0, 1, 1], [], []>, precision = #tpu.contract_precision<fp32>} : vector<8x32xf32>, vector<32x128xf32>, vector<8x128xf32> -> vector<8x128xf32>
    %275 = arith.index_cast %270 : i32 to index
    %c0_68 = arith.constant 0 : index
    %276 = vector.load %arg9[%275, %c0_68] : memref<64x256xf32, #tpu.memory_space<vmem>>, vector<8x128xf32>
    %277 = arith.addf %274, %276 : vector<8x128xf32>
    %cst_69 = arith.constant dense<0.000000e+00> : vector<8x128xf32>
    %278 = tpu.matmul %268, %15, %cst_69 {dimension_numbers = #tpu.dot_dimension_numbers<[1], [0], [0], [1], [0, 0, 1, 1], [], []>, precision = #tpu.contract_precision<fp32>} : vector<8x32xf32>, vector<32x128xf32>, vector<8x128xf32> -> vector<8x128xf32>
    %279 = arith.index_cast %273 : i32 to index
    %c128_70 = arith.constant 128 : index
    %280 = vector.load %arg9[%279, %c128_70] : memref<64x256xf32, #tpu.memory_space<vmem>>, vector<8x128xf32>
    %281 = arith.addf %278, %280 : vector<8x128xf32>
    %282 = vector.extract_strided_slice %277 {offsets = [0, 0], sizes = [8, 32], strides = [1, 1]} : vector<8x128xf32> to vector<8x32xf32>
    %283 = arith.negf %282 : vector<8x32xf32>
    %284 = math.exp %283 : vector<8x32xf32>
    %cst_71 = arith.constant 1.000000e+00 : f32
    %285 = vector.broadcast %cst_71 : f32 to vector<8x32xf32>
    %286 = arith.addf %285, %284 : vector<8x32xf32>
    %287 = arith.divf %285, %286 : vector<8x32xf32>
    %288 = vector.extract_strided_slice %277 {offsets = [0, 32], sizes = [8, 32], strides = [1, 1]} : vector<8x128xf32> to vector<8x32xf32>
    %289 = arith.negf %288 : vector<8x32xf32>
    %290 = math.exp %289 : vector<8x32xf32>
    %cst_72 = arith.constant 1.000000e+00 : f32
    %291 = vector.broadcast %cst_72 : f32 to vector<8x32xf32>
    %292 = arith.addf %291, %290 : vector<8x32xf32>
    %293 = arith.divf %291, %292 : vector<8x32xf32>
    %294 = vector.extract_strided_slice %277 {offsets = [0, 64], sizes = [8, 32], strides = [1, 1]} : vector<8x128xf32> to vector<8x32xf32>
    %295 = math.tanh %294 : vector<8x32xf32>
    %296 = vector.extract_strided_slice %277 {offsets = [0, 96], sizes = [8, 32], strides = [1, 1]} : vector<8x128xf32> to vector<8x32xf32>
    %297 = arith.negf %296 : vector<8x32xf32>
    %298 = math.exp %297 : vector<8x32xf32>
    %cst_73 = arith.constant 1.000000e+00 : f32
    %299 = vector.broadcast %cst_73 : f32 to vector<8x32xf32>
    %300 = arith.addf %299, %298 : vector<8x32xf32>
    %301 = arith.divf %299, %300 : vector<8x32xf32>
    %302 = arith.mulf %293, %241 : vector<8x32xf32>
    %303 = arith.mulf %287, %295 : vector<8x32xf32>
    %304 = arith.addf %302, %303 : vector<8x32xf32>
    %305 = math.tanh %304 : vector<8x32xf32>
    %306 = arith.mulf %301, %305 : vector<8x32xf32>
    %307 = vector.extract_strided_slice %281 {offsets = [0, 0], sizes = [8, 32], strides = [1, 1]} : vector<8x128xf32> to vector<8x32xf32>
    %308 = arith.negf %307 : vector<8x32xf32>
    %309 = math.exp %308 : vector<8x32xf32>
    %cst_74 = arith.constant 1.000000e+00 : f32
    %310 = vector.broadcast %cst_74 : f32 to vector<8x32xf32>
    %311 = arith.addf %310, %309 : vector<8x32xf32>
    %312 = arith.divf %310, %311 : vector<8x32xf32>
    %313 = vector.extract_strided_slice %281 {offsets = [0, 32], sizes = [8, 32], strides = [1, 1]} : vector<8x128xf32> to vector<8x32xf32>
    %314 = arith.negf %313 : vector<8x32xf32>
    %315 = math.exp %314 : vector<8x32xf32>
    %cst_75 = arith.constant 1.000000e+00 : f32
    %316 = vector.broadcast %cst_75 : f32 to vector<8x32xf32>
    %317 = arith.addf %316, %315 : vector<8x32xf32>
    %318 = arith.divf %316, %317 : vector<8x32xf32>
    %319 = vector.extract_strided_slice %281 {offsets = [0, 64], sizes = [8, 32], strides = [1, 1]} : vector<8x128xf32> to vector<8x32xf32>
    %320 = math.tanh %319 : vector<8x32xf32>
    %321 = vector.extract_strided_slice %281 {offsets = [0, 96], sizes = [8, 32], strides = [1, 1]} : vector<8x128xf32> to vector<8x32xf32>
    %322 = arith.negf %321 : vector<8x32xf32>
    %323 = math.exp %322 : vector<8x32xf32>
    %cst_76 = arith.constant 1.000000e+00 : f32
    %324 = vector.broadcast %cst_76 : f32 to vector<8x32xf32>
    %325 = arith.addf %324, %323 : vector<8x32xf32>
    %326 = arith.divf %324, %325 : vector<8x32xf32>
    %327 = arith.mulf %318, %266 : vector<8x32xf32>
    %328 = arith.mulf %312, %320 : vector<8x32xf32>
    %329 = arith.addf %327, %328 : vector<8x32xf32>
    %330 = math.tanh %329 : vector<8x32xf32>
    %331 = arith.mulf %326, %330 : vector<8x32xf32>
    %c5_i32 = arith.constant 5 : i32
    %c8_i32_77 = arith.constant 8 : i32
    %332 = arith.muli %c5_i32, %c8_i32_77 : i32
    %333 = tpu.assume_multiple %332, 8 : i32
    %c7_i32_78 = arith.constant 7 : i32
    %334 = arith.subi %c7_i32_78, %c5_i32 : i32
    %c8_i32_79 = arith.constant 8 : i32
    %335 = arith.muli %334, %c8_i32_79 : i32
    %336 = tpu.assume_multiple %335, 8 : i32
    %cst_80 = arith.constant dense<0.000000e+00> : vector<8x128xf32>
    %337 = tpu.matmul %306, %14, %cst_80 {dimension_numbers = #tpu.dot_dimension_numbers<[1], [0], [0], [1], [0, 0, 1, 1], [], []>, precision = #tpu.contract_precision<fp32>} : vector<8x32xf32>, vector<32x128xf32>, vector<8x128xf32> -> vector<8x128xf32>
    %338 = arith.index_cast %333 : i32 to index
    %c0_81 = arith.constant 0 : index
    %339 = vector.load %arg9[%338, %c0_81] : memref<64x256xf32, #tpu.memory_space<vmem>>, vector<8x128xf32>
    %340 = arith.addf %337, %339 : vector<8x128xf32>
    %cst_82 = arith.constant dense<0.000000e+00> : vector<8x128xf32>
    %341 = tpu.matmul %331, %15, %cst_82 {dimension_numbers = #tpu.dot_dimension_numbers<[1], [0], [0], [1], [0, 0, 1, 1], [], []>, precision = #tpu.contract_precision<fp32>} : vector<8x32xf32>, vector<32x128xf32>, vector<8x128xf32> -> vector<8x128xf32>
    %342 = arith.index_cast %336 : i32 to index
    %c128_83 = arith.constant 128 : index
    %343 = vector.load %arg9[%342, %c128_83] : memref<64x256xf32, #tpu.memory_space<vmem>>, vector<8x128xf32>
    %344 = arith.addf %341, %343 : vector<8x128xf32>
    %345 = vector.extract_strided_slice %340 {offsets = [0, 0], sizes = [8, 32], strides = [1, 1]} : vector<8x128xf32> to vector<8x32xf32>
    %346 = arith.negf %345 : vector<8x32xf32>
    %347 = math.exp %346 : vector<8x32xf32>
    %cst_84 = arith.constant 1.000000e+00 : f32
    %348 = vector.broadcast %cst_84 : f32 to vector<8x32xf32>
    %349 = arith.addf %348, %347 : vector<8x32xf32>
    %350 = arith.divf %348, %349 : vector<8x32xf32>
    %351 = vector.extract_strided_slice %340 {offsets = [0, 32], sizes = [8, 32], strides = [1, 1]} : vector<8x128xf32> to vector<8x32xf32>
    %352 = arith.negf %351 : vector<8x32xf32>
    %353 = math.exp %352 : vector<8x32xf32>
    %cst_85 = arith.constant 1.000000e+00 : f32
    %354 = vector.broadcast %cst_85 : f32 to vector<8x32xf32>
    %355 = arith.addf %354, %353 : vector<8x32xf32>
    %356 = arith.divf %354, %355 : vector<8x32xf32>
    %357 = vector.extract_strided_slice %340 {offsets = [0, 64], sizes = [8, 32], strides = [1, 1]} : vector<8x128xf32> to vector<8x32xf32>
    %358 = math.tanh %357 : vector<8x32xf32>
    %359 = vector.extract_strided_slice %340 {offsets = [0, 96], sizes = [8, 32], strides = [1, 1]} : vector<8x128xf32> to vector<8x32xf32>
    %360 = arith.negf %359 : vector<8x32xf32>
    %361 = math.exp %360 : vector<8x32xf32>
    %cst_86 = arith.constant 1.000000e+00 : f32
    %362 = vector.broadcast %cst_86 : f32 to vector<8x32xf32>
    %363 = arith.addf %362, %361 : vector<8x32xf32>
    %364 = arith.divf %362, %363 : vector<8x32xf32>
    %365 = arith.mulf %356, %304 : vector<8x32xf32>
    %366 = arith.mulf %350, %358 : vector<8x32xf32>
    %367 = arith.addf %365, %366 : vector<8x32xf32>
    %368 = math.tanh %367 : vector<8x32xf32>
    %369 = arith.mulf %364, %368 : vector<8x32xf32>
    %370 = vector.extract_strided_slice %344 {offsets = [0, 0], sizes = [8, 32], strides = [1, 1]} : vector<8x128xf32> to vector<8x32xf32>
    %371 = arith.negf %370 : vector<8x32xf32>
    %372 = math.exp %371 : vector<8x32xf32>
    %cst_87 = arith.constant 1.000000e+00 : f32
    %373 = vector.broadcast %cst_87 : f32 to vector<8x32xf32>
    %374 = arith.addf %373, %372 : vector<8x32xf32>
    %375 = arith.divf %373, %374 : vector<8x32xf32>
    %376 = vector.extract_strided_slice %344 {offsets = [0, 32], sizes = [8, 32], strides = [1, 1]} : vector<8x128xf32> to vector<8x32xf32>
    %377 = arith.negf %376 : vector<8x32xf32>
    %378 = math.exp %377 : vector<8x32xf32>
    %cst_88 = arith.constant 1.000000e+00 : f32
    %379 = vector.broadcast %cst_88 : f32 to vector<8x32xf32>
    %380 = arith.addf %379, %378 : vector<8x32xf32>
    %381 = arith.divf %379, %380 : vector<8x32xf32>
    %382 = vector.extract_strided_slice %344 {offsets = [0, 64], sizes = [8, 32], strides = [1, 1]} : vector<8x128xf32> to vector<8x32xf32>
    %383 = math.tanh %382 : vector<8x32xf32>
    %384 = vector.extract_strided_slice %344 {offsets = [0, 96], sizes = [8, 32], strides = [1, 1]} : vector<8x128xf32> to vector<8x32xf32>
    %385 = arith.negf %384 : vector<8x32xf32>
    %386 = math.exp %385 : vector<8x32xf32>
    %cst_89 = arith.constant 1.000000e+00 : f32
    %387 = vector.broadcast %cst_89 : f32 to vector<8x32xf32>
    %388 = arith.addf %387, %386 : vector<8x32xf32>
    %389 = arith.divf %387, %388 : vector<8x32xf32>
    %390 = arith.mulf %381, %329 : vector<8x32xf32>
    %391 = arith.mulf %375, %383 : vector<8x32xf32>
    %392 = arith.addf %390, %391 : vector<8x32xf32>
    %393 = math.tanh %392 : vector<8x32xf32>
    %394 = arith.mulf %389, %393 : vector<8x32xf32>
    %c6_i32 = arith.constant 6 : i32
    %c8_i32_90 = arith.constant 8 : i32
    %395 = arith.muli %c6_i32, %c8_i32_90 : i32
    %396 = tpu.assume_multiple %395, 8 : i32
    %c7_i32_91 = arith.constant 7 : i32
    %397 = arith.subi %c7_i32_91, %c6_i32 : i32
    %c8_i32_92 = arith.constant 8 : i32
    %398 = arith.muli %397, %c8_i32_92 : i32
    %399 = tpu.assume_multiple %398, 8 : i32
    %cst_93 = arith.constant dense<0.000000e+00> : vector<8x128xf32>
    %400 = tpu.matmul %369, %14, %cst_93 {dimension_numbers = #tpu.dot_dimension_numbers<[1], [0], [0], [1], [0, 0, 1, 1], [], []>, precision = #tpu.contract_precision<fp32>} : vector<8x32xf32>, vector<32x128xf32>, vector<8x128xf32> -> vector<8x128xf32>
    %401 = arith.index_cast %396 : i32 to index
    %c0_94 = arith.constant 0 : index
    %402 = vector.load %arg9[%401, %c0_94] : memref<64x256xf32, #tpu.memory_space<vmem>>, vector<8x128xf32>
    %403 = arith.addf %400, %402 : vector<8x128xf32>
    %cst_95 = arith.constant dense<0.000000e+00> : vector<8x128xf32>
    %404 = tpu.matmul %394, %15, %cst_95 {dimension_numbers = #tpu.dot_dimension_numbers<[1], [0], [0], [1], [0, 0, 1, 1], [], []>, precision = #tpu.contract_precision<fp32>} : vector<8x32xf32>, vector<32x128xf32>, vector<8x128xf32> -> vector<8x128xf32>
    %405 = arith.index_cast %399 : i32 to index
    %c128_96 = arith.constant 128 : index
    %406 = vector.load %arg9[%405, %c128_96] : memref<64x256xf32, #tpu.memory_space<vmem>>, vector<8x128xf32>
    %407 = arith.addf %404, %406 : vector<8x128xf32>
    %408 = vector.extract_strided_slice %403 {offsets = [0, 0], sizes = [8, 32], strides = [1, 1]} : vector<8x128xf32> to vector<8x32xf32>
    %409 = arith.negf %408 : vector<8x32xf32>
    %410 = math.exp %409 : vector<8x32xf32>
    %cst_97 = arith.constant 1.000000e+00 : f32
    %411 = vector.broadcast %cst_97 : f32 to vector<8x32xf32>
    %412 = arith.addf %411, %410 : vector<8x32xf32>
    %413 = arith.divf %411, %412 : vector<8x32xf32>
    %414 = vector.extract_strided_slice %403 {offsets = [0, 32], sizes = [8, 32], strides = [1, 1]} : vector<8x128xf32> to vector<8x32xf32>
    %415 = arith.negf %414 : vector<8x32xf32>
    %416 = math.exp %415 : vector<8x32xf32>
    %cst_98 = arith.constant 1.000000e+00 : f32
    %417 = vector.broadcast %cst_98 : f32 to vector<8x32xf32>
    %418 = arith.addf %417, %416 : vector<8x32xf32>
    %419 = arith.divf %417, %418 : vector<8x32xf32>
    %420 = vector.extract_strided_slice %403 {offsets = [0, 64], sizes = [8, 32], strides = [1, 1]} : vector<8x128xf32> to vector<8x32xf32>
    %421 = math.tanh %420 : vector<8x32xf32>
    %422 = vector.extract_strided_slice %403 {offsets = [0, 96], sizes = [8, 32], strides = [1, 1]} : vector<8x128xf32> to vector<8x32xf32>
    %423 = arith.negf %422 : vector<8x32xf32>
    %424 = math.exp %423 : vector<8x32xf32>
    %cst_99 = arith.constant 1.000000e+00 : f32
    %425 = vector.broadcast %cst_99 : f32 to vector<8x32xf32>
    %426 = arith.addf %425, %424 : vector<8x32xf32>
    %427 = arith.divf %425, %426 : vector<8x32xf32>
    %428 = arith.mulf %419, %367 : vector<8x32xf32>
    %429 = arith.mulf %413, %421 : vector<8x32xf32>
    %430 = arith.addf %428, %429 : vector<8x32xf32>
    %431 = math.tanh %430 : vector<8x32xf32>
    %432 = arith.mulf %427, %431 : vector<8x32xf32>
    %433 = vector.extract_strided_slice %407 {offsets = [0, 0], sizes = [8, 32], strides = [1, 1]} : vector<8x128xf32> to vector<8x32xf32>
    %434 = arith.negf %433 : vector<8x32xf32>
    %435 = math.exp %434 : vector<8x32xf32>
    %cst_100 = arith.constant 1.000000e+00 : f32
    %436 = vector.broadcast %cst_100 : f32 to vector<8x32xf32>
    %437 = arith.addf %436, %435 : vector<8x32xf32>
    %438 = arith.divf %436, %437 : vector<8x32xf32>
    %439 = vector.extract_strided_slice %407 {offsets = [0, 32], sizes = [8, 32], strides = [1, 1]} : vector<8x128xf32> to vector<8x32xf32>
    %440 = arith.negf %439 : vector<8x32xf32>
    %441 = math.exp %440 : vector<8x32xf32>
    %cst_101 = arith.constant 1.000000e+00 : f32
    %442 = vector.broadcast %cst_101 : f32 to vector<8x32xf32>
    %443 = arith.addf %442, %441 : vector<8x32xf32>
    %444 = arith.divf %442, %443 : vector<8x32xf32>
    %445 = vector.extract_strided_slice %407 {offsets = [0, 64], sizes = [8, 32], strides = [1, 1]} : vector<8x128xf32> to vector<8x32xf32>
    %446 = math.tanh %445 : vector<8x32xf32>
    %447 = vector.extract_strided_slice %407 {offsets = [0, 96], sizes = [8, 32], strides = [1, 1]} : vector<8x128xf32> to vector<8x32xf32>
    %448 = arith.negf %447 : vector<8x32xf32>
    %449 = math.exp %448 : vector<8x32xf32>
    %cst_102 = arith.constant 1.000000e+00 : f32
    %450 = vector.broadcast %cst_102 : f32 to vector<8x32xf32>
    %451 = arith.addf %450, %449 : vector<8x32xf32>
    %452 = arith.divf %450, %451 : vector<8x32xf32>
    %453 = arith.mulf %444, %392 : vector<8x32xf32>
    %454 = arith.mulf %438, %446 : vector<8x32xf32>
    %455 = arith.addf %453, %454 : vector<8x32xf32>
    %456 = math.tanh %455 : vector<8x32xf32>
    %457 = arith.mulf %452, %456 : vector<8x32xf32>
    %c7_i32_103 = arith.constant 7 : i32
    %c8_i32_104 = arith.constant 8 : i32
    %458 = arith.muli %c7_i32_103, %c8_i32_104 : i32
    %459 = tpu.assume_multiple %458, 8 : i32
    %c7_i32_105 = arith.constant 7 : i32
    %460 = arith.subi %c7_i32_105, %c7_i32_103 : i32
    %c8_i32_106 = arith.constant 8 : i32
    %461 = arith.muli %460, %c8_i32_106 : i32
    %462 = tpu.assume_multiple %461, 8 : i32
    %cst_107 = arith.constant dense<0.000000e+00> : vector<8x128xf32>
    %463 = tpu.matmul %432, %14, %cst_107 {dimension_numbers = #tpu.dot_dimension_numbers<[1], [0], [0], [1], [0, 0, 1, 1], [], []>, precision = #tpu.contract_precision<fp32>} : vector<8x32xf32>, vector<32x128xf32>, vector<8x128xf32> -> vector<8x128xf32>
    %464 = arith.index_cast %459 : i32 to index
    %c0_108 = arith.constant 0 : index
    %465 = vector.load %arg9[%464, %c0_108] : memref<64x256xf32, #tpu.memory_space<vmem>>, vector<8x128xf32>
    %466 = arith.addf %463, %465 : vector<8x128xf32>
    %cst_109 = arith.constant dense<0.000000e+00> : vector<8x128xf32>
    %467 = tpu.matmul %457, %15, %cst_109 {dimension_numbers = #tpu.dot_dimension_numbers<[1], [0], [0], [1], [0, 0, 1, 1], [], []>, precision = #tpu.contract_precision<fp32>} : vector<8x32xf32>, vector<32x128xf32>, vector<8x128xf32> -> vector<8x128xf32>
    %468 = arith.index_cast %462 : i32 to index
    %c128_110 = arith.constant 128 : index
    %469 = vector.load %arg9[%468, %c128_110] : memref<64x256xf32, #tpu.memory_space<vmem>>, vector<8x128xf32>
    %470 = arith.addf %467, %469 : vector<8x128xf32>
    %471 = vector.extract_strided_slice %466 {offsets = [0, 0], sizes = [8, 32], strides = [1, 1]} : vector<8x128xf32> to vector<8x32xf32>
    %472 = arith.negf %471 : vector<8x32xf32>
    %473 = math.exp %472 : vector<8x32xf32>
    %cst_111 = arith.constant 1.000000e+00 : f32
    %474 = vector.broadcast %cst_111 : f32 to vector<8x32xf32>
    %475 = arith.addf %474, %473 : vector<8x32xf32>
    %476 = arith.divf %474, %475 : vector<8x32xf32>
    %477 = vector.extract_strided_slice %466 {offsets = [0, 32], sizes = [8, 32], strides = [1, 1]} : vector<8x128xf32> to vector<8x32xf32>
    %478 = arith.negf %477 : vector<8x32xf32>
    %479 = math.exp %478 : vector<8x32xf32>
    %cst_112 = arith.constant 1.000000e+00 : f32
    %480 = vector.broadcast %cst_112 : f32 to vector<8x32xf32>
    %481 = arith.addf %480, %479 : vector<8x32xf32>
    %482 = arith.divf %480, %481 : vector<8x32xf32>
    %483 = vector.extract_strided_slice %466 {offsets = [0, 64], sizes = [8, 32], strides = [1, 1]} : vector<8x128xf32> to vector<8x32xf32>
    %484 = math.tanh %483 : vector<8x32xf32>
    %485 = vector.extract_strided_slice %466 {offsets = [0, 96], sizes = [8, 32], strides = [1, 1]} : vector<8x128xf32> to vector<8x32xf32>
    %486 = arith.negf %485 : vector<8x32xf32>
    %487 = math.exp %486 : vector<8x32xf32>
    %cst_113 = arith.constant 1.000000e+00 : f32
    %488 = vector.broadcast %cst_113 : f32 to vector<8x32xf32>
    %489 = arith.addf %488, %487 : vector<8x32xf32>
    %490 = arith.divf %488, %489 : vector<8x32xf32>
    %491 = arith.mulf %482, %430 : vector<8x32xf32>
    %492 = arith.mulf %476, %484 : vector<8x32xf32>
    %493 = arith.addf %491, %492 : vector<8x32xf32>
    %494 = math.tanh %493 : vector<8x32xf32>
    %495 = arith.mulf %490, %494 : vector<8x32xf32>
    %496 = vector.extract_strided_slice %470 {offsets = [0, 0], sizes = [8, 32], strides = [1, 1]} : vector<8x128xf32> to vector<8x32xf32>
    %497 = arith.negf %496 : vector<8x32xf32>
    %498 = math.exp %497 : vector<8x32xf32>
    %cst_114 = arith.constant 1.000000e+00 : f32
    %499 = vector.broadcast %cst_114 : f32 to vector<8x32xf32>
    %500 = arith.addf %499, %498 : vector<8x32xf32>
    %501 = arith.divf %499, %500 : vector<8x32xf32>
    %502 = vector.extract_strided_slice %470 {offsets = [0, 32], sizes = [8, 32], strides = [1, 1]} : vector<8x128xf32> to vector<8x32xf32>
    %503 = arith.negf %502 : vector<8x32xf32>
    %504 = math.exp %503 : vector<8x32xf32>
    %cst_115 = arith.constant 1.000000e+00 : f32
    %505 = vector.broadcast %cst_115 : f32 to vector<8x32xf32>
    %506 = arith.addf %505, %504 : vector<8x32xf32>
    %507 = arith.divf %505, %506 : vector<8x32xf32>
    %508 = vector.extract_strided_slice %470 {offsets = [0, 64], sizes = [8, 32], strides = [1, 1]} : vector<8x128xf32> to vector<8x32xf32>
    %509 = math.tanh %508 : vector<8x32xf32>
    %510 = vector.extract_strided_slice %470 {offsets = [0, 96], sizes = [8, 32], strides = [1, 1]} : vector<8x128xf32> to vector<8x32xf32>
    %511 = arith.negf %510 : vector<8x32xf32>
    %512 = math.exp %511 : vector<8x32xf32>
    %cst_116 = arith.constant 1.000000e+00 : f32
    %513 = vector.broadcast %cst_116 : f32 to vector<8x32xf32>
    %514 = arith.addf %513, %512 : vector<8x32xf32>
    %515 = arith.divf %513, %514 : vector<8x32xf32>
    %516 = arith.mulf %507, %455 : vector<8x32xf32>
    %517 = arith.mulf %501, %509 : vector<8x32xf32>
    %518 = arith.addf %516, %517 : vector<8x32xf32>
    %519 = math.tanh %518 : vector<8x32xf32>
    %520 = arith.mulf %515, %519 : vector<8x32xf32>
    %c8_i32_117 = arith.constant 8 : i32
    %c0_118 = arith.constant 0 : index
    %c0_119 = arith.constant 0 : index
    %521 = vector.load %arg6[%c0_118, %c0_119] : memref<1x64xf32, #tpu.memory_space<vmem>>, vector<1x64xf32>
    %c0_120 = arith.constant 0 : index
    %c0_121 = arith.constant 0 : index
    %522 = vector.load %arg7[%c0_120, %c0_121] : memref<1x1xf32, #tpu.memory_space<vmem>>, vector<1x1xf32>
    %523 = vector.extract_strided_slice %521 {offsets = [0, 0], sizes = [1, 32], strides = [1, 1]} : vector<1x64xf32> to vector<1x32xf32>
    %524 = vector.broadcast %523 : vector<1x32xf32> to vector<8x32xf32>
    %525 = arith.mulf %495, %524 : vector<8x32xf32>
    %cst_122 = arith.constant dense<0.000000e+00> : vector<8xf32>
    %526 = vector.multi_reduction <add>, %525, %cst_122 [1] : vector<8x32xf32> to vector<8xf32>
    %527 = vector.shape_cast %526 : vector<8xf32> to vector<8x1xf32>
    %528 = vector.extract_strided_slice %521 {offsets = [0, 32], sizes = [1, 32], strides = [1, 1]} : vector<1x64xf32> to vector<1x32xf32>
    %529 = vector.broadcast %528 : vector<1x32xf32> to vector<8x32xf32>
    %530 = arith.mulf %520, %529 : vector<8x32xf32>
    %cst_123 = arith.constant dense<0.000000e+00> : vector<8xf32>
    %531 = vector.multi_reduction <add>, %530, %cst_123 [1] : vector<8x32xf32> to vector<8xf32>
    %532 = vector.shape_cast %531 : vector<8xf32> to vector<8x1xf32>
    %533 = arith.addf %527, %532 : vector<8x1xf32>
    %534 = vector.broadcast %522 : vector<1x1xf32> to vector<8x1xf32>
    %535 = arith.addf %533, %534 : vector<8x1xf32>
    %c0_124 = arith.constant 0 : index
    %c0_125 = arith.constant 0 : index
    %536 = vector.load %arg8[%c0_124, %c0_125] : memref<8x1xf32, #tpu.memory_space<vmem>>, vector<8x1xf32>
    tpu.vector_store %arg8[%c0_124, %c0_125], %535 {strides = array<i32>} : memref<8x1xf32, #tpu.memory_space<vmem>>, vector<8x1xf32>,
    return
  }
}

</mosaic_0001>

<llo_original>
// kernel: tpu_custom_call.1
$region0: #{tpu_custom_call.1}
  #allocation0 [shape = 'u32[]', space=smem, size = 0x4, offset = 0x4, fixed_abs, tag = 'smem constant byte address 0x4 - core index']
  #allocation1 [shape = 'u32[72,128]{1,0:T(1,128)}', space=vmem, size = 0x9000, scoped, tag = 'internal scratch']
  #allocation2 [shape = 'f32[64,256]{1,0:T(8,128)}', space=vmem, size = 0x10000, scoped, tag = 'scratch operand']
  #allocation3 [shape = 'f32[1,1]{1,0:T(1,128)S(1)}', space=vmem, size = 0x200, scoped, tag = 'scoped memory for tpu_custom_call.1']
  %s0 = inlined_call_operand.vmem [shape: s32[64,1], index: 0, kind: input, shape index: {}]
  %s1 = inlined_call_operand.hbm [shape: f32[128,128], index: 1, kind: input, shape index: {}]
  %s2 = inlined_call_operand.hbm [shape: f32[128,256], index: 2, kind: input, shape index: {}]
  %s3 = inlined_call_operand.vmem [shape: f32[32,128], index: 3, kind: input, shape index: {}]
  %s4 = inlined_call_operand.vmem [shape: f32[32,128], index: 4, kind: input, shape index: {}]
  %s5 = inlined_call_operand.vmem [shape: f32[1,256], index: 5, kind: input, shape index: {}]
  %s6 = inlined_call_operand.vmem [shape: f32[1,64], index: 6, kind: input, shape index: {}]
  %s7 = inlined_call_operand.<no memory space> [shape: f32[1,1], index: 7, kind: input, shape index: {}]
  %s8 = inlined_call_operand.vmem [shape: f32[8,1], index: 8, kind: output, shape index: {}]
  %s9 = sld [smem:[#allocation0]]
  $region50: #{tpu_custom_call.1} parent=0
    _
  %s11 = ssub.s32 1, %s9
  %s12 = scalar_select 0, %s11, %s9
  %v13 = vstv %s7
  %14 = vst [vmem:[#allocation3] sm:$0x1] %v13
  $region1: #{tpu_custom_call.1} parent=0
    #allocation4 [shape = 'u8[65536]{0}', space=vmem, size = 0x10000, scoped, tag = 'input window, operand 1, single buffered']
    #allocation5 [shape = 's32[1]{0}', space=sflag, size = 0x4, scoped, tag = 'scoped memory for tpu_custom_call.1']
    #allocation6 [shape = 'u8[131072]{0}', space=vmem, size = 0x20000, scoped, tag = 'input window, operand 2, single buffered']
    #allocation7 [shape = 's32[1]{0}', space=sflag, size = 0x4, scoped, tag = 'scoped memory for tpu_custom_call.1']
    %15 = vsyncpa [#allocation5], 0
    %16 = vsyncpa [#allocation7], 0
    // Predicated region
    $region2: #{tpu_custom_call.1} parent=1 // pred_check
      _
    $region3: #{tpu_custom_call.1} parent=1 // pred_check_branch
      %18 = sbr.rel (0) target = $region5
    $region4: #{tpu_custom_call.1} parent=1 // pred_region
      _
    $region5: #{tpu_custom_call.1} parent=1 // pred_fallthru
      _
    // Predicated region
    $region6: #{tpu_custom_call.1} parent=1 // pred_check
      _
    $region7: #{tpu_custom_call.1} parent=1 // pred_check_branch
      %20 = sbr.rel (0) target = $region9
    $region8: #{tpu_custom_call.1} parent=1 // pred_region
      %22 = vsyncadd [#allocation5], 0
      %s23 = sshll.u32 %s1, 4
      %s24 = int_to_ptr.hbm [resolvable:$true] %s23
      %s25 = sshll.u32 [#allocation4], 4
      %s26 = int_to_ptr.vmem [resolvable:$true] %s25
      %31 = dma.hbm_to_vmem [thread:$0]  %s24, 2048, %s26, [#allocation5], 128, 128, 8
    $region9: #{tpu_custom_call.1} parent=1 // pred_fallthru
      _
    // Predicated region
    $region10: #{tpu_custom_call.1} parent=1 // pred_check
      _
    $region11: #{tpu_custom_call.1} parent=1 // pred_check_branch
      %33 = sbr.rel (0) target = $region13
    $region12: #{tpu_custom_call.1} parent=1 // pred_region
      %35 = vsyncadd [#allocation7], 0
      %s36 = sshll.u32 %s2, 4
      %s37 = int_to_ptr.hbm [resolvable:$true] %s36
      %s38 = sshll.u32 [#allocation6], 4
      %s39 = int_to_ptr.vmem [resolvable:$true] %s38
      %44 = dma.hbm_to_vmem [thread:$0]  %s37, 4096, %s39, [#allocation7], 256, 256, 16
    $region13: #{tpu_custom_call.1} parent=1 // pred_fallthru
      _
    // Predicated region
    $region14: #{tpu_custom_call.1} parent=1 // pred_check
      _
    $region15: #{tpu_custom_call.1} parent=1 // pred_check_branch
      %46 = sbr.rel (0) target = $region17
    $region16: #{tpu_custom_call.1} parent=1 // pred_region
      _
    $region17: #{tpu_custom_call.1} parent=1 // pred_fallthru
      _
    // Predicated region
    $region18: #{tpu_custom_call.1} parent=1 // pred_check
      _
    $region19: #{tpu_custom_call.1} parent=1 // pred_check_branch
      %48 = sbr.rel (0) target = $region21
    $region20: #{tpu_custom_call.1} parent=1 // pred_region
      _
    $region21: #{tpu_custom_call.1} parent=1 // pred_fallthru
      _
    // Predicated region
    $region22: #{tpu_custom_call.1} parent=1 // pred_check
      _
    $region23: #{tpu_custom_call.1} parent=1 // pred_check_branch
      %50 = sbr.rel (0) target = $region25
    $region24: #{tpu_custom_call.1} parent=1 // pred_region
      _
    $region25: #{tpu_custom_call.1} parent=1 // pred_fallthru
      _
    // Predicated region
    $region26: #{tpu_custom_call.1} parent=1 // pred_check
      _
    $region27: #{tpu_custom_call.1} parent=1 // pred_check_branch
      %52 = sbr.rel (0) target = $region29
    $region28: #{tpu_custom_call.1} parent=1 // pred_region
      _
    $region29: #{tpu_custom_call.1} parent=1 // pred_fallthru
      _
    // Predicated region
    $region30: #{tpu_custom_call.1} parent=1 // pred_check
      _
    $region31: #{tpu_custom_call.1} parent=1 // pred_check_branch
      %54 = sbr.rel (0) target = $region33
    $region32: #{tpu_custom_call.1} parent=1 // pred_region
      _
    $region33: #{tpu_custom_call.1} parent=1 // pred_fallthru
      _
    // Predicated region
    $region34: #{tpu_custom_call.1} parent=1 // pred_check
      _
    $region35: #{tpu_custom_call.1} parent=1 // pred_check_branch
      %56 = sbr.rel (0) target = $region37
    $region36: #{tpu_custom_call.1} parent=1 // pred_region
      %58 = dma.done [#allocation5], 2048
    $region37: #{tpu_custom_call.1} parent=1 // pred_fallthru
      _
    // Predicated region
    $region38: #{tpu_custom_call.1} parent=1 // pred_check
      _
    $region39: #{tpu_custom_call.1} parent=1 // pred_check_branch
      %60 = sbr.rel (0) target = $region41
    $region40: #{tpu_custom_call.1} parent=1 // pred_region
      %62 = dma.done [#allocation7], 4096
    $region41: #{tpu_custom_call.1} parent=1 // pred_fallthru
      _
    %v63 = vld [vmem:[%s0] sm:$0xff]
    %v64 = vld [vmem:[%s0 + $0x8] sm:$0xff]
    %v65 = vld [vmem:[%s0 + $0x10] sm:$0xff]
    %v66 = vld [vmem:[%s0 + $0x18] sm:$0xff]
    %v67 = vld [vmem:[%s0 + $0x20] sm:$0xff]
    %v68 = vld [vmem:[%s0 + $0x28] sm:$0xff]
    %v69 = vld [vmem:[%s0 + $0x30] sm:$0xff]
    %v70 = vld [vmem:[%s0 + $0x38] sm:$0xff]
    %v71 = vlaneseq
    %v72 = vand.u32 %v71, 127
    %73 = vset.pattern.permute.xlu0 0
    %74 = vperm.xlu0 %73, %v63
    %v75 = vpop.permute.xlu0 %74
    %76 = vset.pattern.permute.xlu0 0
    %77 = vperm.xlu0 %76, %v64
    %v78 = vpop.permute.xlu0 %77
    %79 = vset.pattern.permute.xlu0 0
    %80 = vperm.xlu0 %79, %v65
    %v81 = vpop.permute.xlu0 %80
    %82 = vset.pattern.permute.xlu0 0
    %83 = vperm.xlu0 %82, %v66
    %v84 = vpop.permute.xlu0 %83
    %85 = vset.pattern.permute.xlu0 0
    %86 = vperm.xlu0 %85, %v67
    %v87 = vpop.permute.xlu0 %86
    %88 = vset.pattern.permute.xlu0 0
    %89 = vperm.xlu0 %88, %v68
    %v90 = vpop.permute.xlu0 %89
    %91 = vset.pattern.permute.xlu0 0
    %92 = vperm.xlu0 %91, %v69
    %v93 = vpop.permute.xlu0 %92
    %94 = vset.pattern.permute.xlu0 0
    %95 = vperm.xlu0 %94, %v70
    %v96 = vpop.permute.xlu0 %95
    %vm97 = vcmp.eq.s32.totalorder %v75, %v72
    %vm98 = vcmp.eq.s32.totalorder %v78, %v72
    %vm99 = vcmp.eq.s32.totalorder %v81, %v72
    %vm100 = vcmp.eq.s32.totalorder %v84, %v72
    %vm101 = vcmp.eq.s32.totalorder %v87, %v72
    %vm102 = vcmp.eq.s32.totalorder %v90, %v72
    %vm103 = vcmp.eq.s32.totalorder %v93, %v72
    %vm104 = vcmp.eq.s32.totalorder %v96, %v72
    %v105 = vsel %vm97, 1, 0
    %v106 = vsel %vm98, 1, 0
    %v107 = vsel %vm99, 1, 0
    %v108 = vsel %vm100, 1, 0
    %v109 = vsel %vm101, 1, 0
    %v110 = vsel %vm102, 1, 0
    %v111 = vsel %vm103, 1, 0
    %v112 = vsel %vm104, 1, 0
    %v113 = vcvt.s32.f32 %v105
    %v114 = vcvt.s32.f32 %v106
    %v115 = vcvt.s32.f32 %v107
    %v116 = vcvt.s32.f32 %v108
    %v117 = vcvt.s32.f32 %v109
    %v118 = vcvt.s32.f32 %v110
    %v119 = vcvt.s32.f32 %v111
    %v120 = vcvt.s32.f32 %v112
    %v121 = vld [vmem:[#allocation4] sm:$0xff]
    %v122 = vld [vmem:[#allocation4 + $0x8] sm:$0xff]
    %v123 = vld [vmem:[#allocation4 + $0x10] sm:$0xff]
    %v124 = vld [vmem:[#allocation4 + $0x18] sm:$0xff]
    %v125 = vld [vmem:[#allocation4 + $0x20] sm:$0xff]
    %v126 = vld [vmem:[#allocation4 + $0x28] sm:$0xff]
    %v127 = vld [vmem:[#allocation4 + $0x30] sm:$0xff]
    %v128 = vld [vmem:[#allocation4 + $0x38] sm:$0xff]
    %v129 = vld [vmem:[#allocation4 + $0x40] sm:$0xff]
    %v130 = vld [vmem:[#allocation4 + $0x48] sm:$0xff]
    %v131 = vld [vmem:[#allocation4 + $0x50] sm:$0xff]
    %v132 = vld [vmem:[#allocation4 + $0x58] sm:$0xff]
    %v133 = vld [vmem:[#allocation4 + $0x60] sm:$0xff]
    %v134 = vld [vmem:[#allocation4 + $0x68] sm:$0xff]
    %v135 = vld [vmem:[#allocation4 + $0x70] sm:$0xff]
    %v136 = vld [vmem:[#allocation4 + $0x78] sm:$0xff]
    %v137 = vand.u32 %v136, 4294901760
    %138 = vmatpush.msra.mxu0 %v137
    %v139 = vand.u32 %v135, 4294901760
    %140 = vmatpush.msra.mxu0 %v139
    %v141 = vand.u32 %v134, 4294901760
    %142 = vmatpush.msra.mxu0 %v141
    %v143 = vand.u32 %v133, 4294901760
    %144 = vmatpush.msra.mxu0 %v143
    %v145 = vand.u32 %v132, 4294901760
    %146 = vmatpush.msra.mxu0 %v145
    %v147 = vand.u32 %v131, 4294901760
    %148 = vmatpush.msra.mxu0 %v147
    %v149 = vand.u32 %v130, 4294901760
    %150 = vmatpush.msra.mxu0 %v149
    %v151 = vand.u32 %v129, 4294901760
    %152 = vmatpush.msra.mxu0 %v151
    %v153 = vand.u32 %v128, 4294901760
    %154 = vmatpush.msra.mxu0 %v153
    %v155 = vand.u32 %v127, 4294901760
    %156 = vmatpush.msra.mxu0 %v155
    %v157 = vand.u32 %v126, 4294901760
    %158 = vmatpush.msra.mxu0 %v157
    %v159 = vand.u32 %v125, 4294901760
    %160 = vmatpush.msra.mxu0 %v159
    %v161 = vand.u32 %v124, 4294901760
    %162 = vmatpush.msra.mxu0 %v161
    %v163 = vand.u32 %v123, 4294901760
    %164 = vmatpush.msra.mxu0 %v163
    %v165 = vand.u32 %v122, 4294901760
    %166 = vmatpush.msra.mxu0 %v165
    %v167 = vand.u32 %v121, 4294901760
    %168 = vmatpush.msra.mxu0 %v167
    %v169 = vand.u32 %v113, 4294901760
    %v170 = vsub.f32 %v113, %v169
    %v171 = vand.u32 %v170, 4294901760
    %v172 = vsub.f32 %v170, %v171
    %v173 = vand.u32 %v172, 4294901760
    %174 = vmatmul.f32.gmra.mxu0 %v173
    %v175 = vpop.f32.mrf.mxu0
    %v176 = vadd.f32 0.0, %v175
    %v177 = vand.u32 %v114, 4294901760
    %v178 = vsub.f32 %v114, %v177
    %v179 = vand.u32 %v178, 4294901760
    %v180 = vsub.f32 %v178, %v179
    %v181 = vand.u32 %v180, 4294901760
    %182 = vmatmul.f32.gmra.mxu0 %v181
    %v183 = vpop.f32.mrf.mxu0
    %v184 = vadd.f32 0.0, %v183
    %v185 = vand.u32 %v115, 4294901760
    %v186 = vsub.f32 %v115, %v185
    %v187 = vand.u32 %v186, 4294901760
    %v188 = vsub.f32 %v186, %v187
    %v189 = vand.u32 %v188, 4294901760
    %190 = vmatmul.f32.gmra.mxu0 %v189
    %v191 = vpop.f32.mrf.mxu0
    %v192 = vadd.f32 0.0, %v191
    %v193 = vand.u32 %v116, 4294901760
    %v194 = vsub.f32 %v116, %v193
    %v195 = vand.u32 %v194, 4294901760
    %v196 = vsub.f32 %v194, %v195
    %v197 = vand.u32 %v196, 4294901760
    %198 = vmatmul.f32.gmra.mxu0 %v197
    %v199 = vpop.f32.mrf.mxu0
    %v200 = vadd.f32 0.0, %v199
    %v201 = vand.u32 %v117, 4294901760
    %v202 = vsub.f32 %v117, %v201
    %v203 = vand.u32 %v202, 4294901760
    %v204 = vsub.f32 %v202, %v203
    %v205 = vand.u32 %v204, 4294901760
    %206 = vmatmul.f32.gmra.mxu0 %v205
    %v207 = vpop.f32.mrf.mxu0
    %v208 = vadd.f32 0.0, %v207
    %v209 = vand.u32 %v118, 4294901760
    %v210 = vsub.f32 %v118, %v209
    %v211 = vand.u32 %v210, 4294901760
    %v212 = vsub.f32 %v210, %v211
    %v213 = vand.u32 %v212, 4294901760
    %214 = vmatmul.f32.gmra.mxu0 %v213
    %v215 = vpop.f32.mrf.mxu0
    %v216 = vadd.f32 0.0, %v215
    %v217 = vand.u32 %v119, 4294901760
    %v218 = vsub.f32 %v119, %v217
    %v219 = vand.u32 %v218, 4294901760
    %v220 = vsub.f32 %v218, %v219
    %v221 = vand.u32 %v220, 4294901760
    %222 = vmatmul.f32.gmra.mxu0 %v221
    %v223 = vpop.f32.mrf.mxu0
    %v224 = vadd.f32 0.0, %v223
    %v225 = vand.u32 %v120, 4294901760
    %v226 = vsub.f32 %v120, %v225
    %v227 = vand.u32 %v226, 4294901760
    %v228 = vsub.f32 %v226, %v227
    %v229 = vand.u32 %v228, 4294901760
    %230 = vmatmul.f32.gmra.mxu0 %v229
    %v231 = vpop.f32.mrf.mxu0
    %v232 = vadd.f32 0.0, %v231
    %233 = vdwg.mxu0
    %v234 = vand.u32 %v136, 4294901760
    %v235 = vsub.f32 %v136, %v234
    %v236 = vand.u32 %v235, 4294901760
    %v237 = vsub.f32 %v235, %v236
    %v238 = vand.u32 %v237, 4294901760
    %239 = vmatpush.msra.mxu0 %v238
    %v240 = vand.u32 %v135, 4294901760
    %v241 = vsub.f32 %v135, %v240
    %v242 = vand.u32 %v241, 4294901760
    %v243 = vsub.f32 %v241, %v242
    %v244 = vand.u32 %v243, 4294901760
    %245 = vmatpush.msra.mxu0 %v244
    %v246 = vand.u32 %v134, 4294901760
    %v247 = vsub.f32 %v134, %v246
    %v248 = vand.u32 %v247, 4294901760
    %v249 = vsub.f32 %v247, %v248
    %v250 = vand.u32 %v249, 4294901760
    %251 = vmatpush.msra.mxu0 %v250
    %v252 = vand.u32 %v133, 4294901760
    %v253 = vsub.f32 %v133, %v252
    %v254 = vand.u32 %v253, 4294901760
    %v255 = vsub.f32 %v253, %v254
    %v256 = vand.u32 %v255, 4294901760
    %257 = vmatpush.msra.mxu0 %v256
    %v258 = vand.u32 %v132, 4294901760
    %v259 = vsub.f32 %v132, %v258
    %v260 = vand.u32 %v259, 4294901760
    %v261 = vsub.f32 %v259, %v260
    %v262 = vand.u32 %v261, 4294901760
    %263 = vmatpush.msra.mxu0 %v262
    %v264 = vand.u32 %v131, 4294901760
    %v265 = vsub.f32 %v131, %v264
    %v266 = vand.u32 %v265, 4294901760
    %v267 = vsub.f32 %v265, %v266
    %v268 = vand.u32 %v267, 4294901760
    %269 = vmatpush.msra.mxu0 %v268
    %v270 = vand.u32 %v130, 4294901760
    %v271 = vsub.f32 %v130, %v270
    %v272 = vand.u32 %v271, 4294901760
    %v273 = vsub.f32 %v271, %v272
    %v274 = vand.u32 %v273, 4294901760
    %275 = vmatpush.msra.mxu0 %v274
    %v276 = vand.u32 %v129, 4294901760
    %v277 = vsub.f32 %v129, %v276
    %v278 = vand.u32 %v277, 4294901760
    %v279 = vsub.f32 %v277, %v278
    %v280 = vand.u32 %v279, 4294901760
    %281 = vmatpush.msra.mxu0 %v280
    %v282 = vand.u32 %v128, 4294901760
    %v283 = vsub.f32 %v128, %v282
    %v284 = vand.u32 %v283, 4294901760
    %v285 = vsub.f32 %v283, %v284
    %v286 = vand.u32 %v285, 4294901760
    %287 = vmatpush.msra.mxu0 %v286
    %v288 = vand.u32 %v127, 4294901760
    %v289 = vsub.f32 %v127, %v288
    %v290 = vand.u32 %v289, 4294901760
    %v291 = vsub.f32 %v289, %v290
    %v292 = vand.u32 %v291, 4294901760
    %293 = vmatpush.msra.mxu0 %v292
    %v294 = vand.u32 %v126, 4294901760
    %v295 = vsub.f32 %v126, %v294
    %v296 = vand.u32 %v295, 4294901760
    %v297 = vsub.f32 %v295, %v296
    %v298 = vand.u32 %v297, 4294901760
    %299 = vmatpush.msra.mxu0 %v298
    %v300 = vand.u32 %v125, 4294901760
    %v301 = vsub.f32 %v125, %v300
    %v302 = vand.u32 %v301, 4294901760
    %v303 = vsub.f32 %v301, %v302
    %v304 = vand.u32 %v303, 4294901760
    %305 = vmatpush.msra.mxu0 %v304
    %v306 = vand.u32 %v124, 4294901760
    %v307 = vsub.f32 %v124, %v306
    %v308 = vand.u32 %v307, 4294901760
    %v309 = vsub.f32 %v307, %v308
    %v310 = vand.u32 %v309, 4294901760
    %311 = vmatpush.msra.mxu0 %v310
    %v312 = vand.u32 %v123, 4294901760
    %v313 = vsub.f32 %v123, %v312
    %v314 = vand.u32 %v313, 4294901760
    %v315 = vsub.f32 %v313, %v314
    %v316 = vand.u32 %v315, 4294901760
    %317 = vmatpush.msra.mxu0 %v316
    %v318 = vand.u32 %v122, 4294901760
    %v319 = vsub.f32 %v122, %v318
    %v320 = vand.u32 %v319, 4294901760
    %v321 = vsub.f32 %v319, %v320
    %v322 = vand.u32 %v321, 4294901760
    %323 = vmatpush.msra.mxu0 %v322
    %v324 = vand.u32 %v121, 4294901760
    %v325 = vsub.f32 %v121, %v324
    %v326 = vand.u32 %v325, 4294901760
    %v327 = vsub.f32 %v325, %v326
    %v328 = vand.u32 %v327, 4294901760
    %329 = vmatpush.msra.mxu0 %v328
    %v330 = vand.u32 %v113, 4294901760
    %331 = vmatmul.f32.gmra.mxu0 %v330
    %v332 = vpop.f32.mrf.mxu0
    %v333 = vadd.f32 %v176, %v332
    %v334 = vand.u32 %v114, 4294901760
    %335 = vmatmul.f32.gmra.mxu0 %v334
    %v336 = vpop.f32.mrf.mxu0
    %v337 = vadd.f32 %v184, %v336
    %v338 = vand.u32 %v115, 4294901760
    %339 = vmatmul.f32.gmra.mxu0 %v338
    %v340 = vpop.f32.mrf.mxu0
    %v341 = vadd.f32 %v192, %v340
    %v342 = vand.u32 %v116, 4294901760
    %343 = vmatmul.f32.gmra.mxu0 %v342
    %v344 = vpop.f32.mrf.mxu0
    %v345 = vadd.f32 %v200, %v344
    %v346 = vand.u32 %v117, 4294901760
    %347 = vmatmul.f32.gmra.mxu0 %v346
    %v348 = vpop.f32.mrf.mxu0
    %v349 = vadd.f32 %v208, %v348
    %v350 = vand.u32 %v118, 4294901760
    %351 = vmatmul.f32.gmra.mxu0 %v350
    %v352 = vpop.f32.mrf.mxu0
    %v353 = vadd.f32 %v216, %v352
    %v354 = vand.u32 %v119, 4294901760
    %355 = vmatmul.f32.gmra.mxu0 %v354
    %v356 = vpop.f32.mrf.mxu0
    %v357 = vadd.f32 %v224, %v356
    %v358 = vand.u32 %v120, 4294901760
    %359 = vmatmul.f32.gmra.mxu0 %v358
    %v360 = vpop.f32.mrf.mxu0
    %v361 = vadd.f32 %v232, %v360
    %362 = vdwg.mxu0
    %v363 = vand.u32 %v136, 4294901760
    %v364 = vsub.f32 %v136, %v363
    %365 = vmatpush.msra.mxu0 %v364
    %v366 = vand.u32 %v135, 4294901760
    %v367 = vsub.f32 %v135, %v366
    %368 = vmatpush.msra.mxu0 %v367
    %v369 = vand.u32 %v134, 4294901760
    %v370 = vsub.f32 %v134, %v369
    %371 = vmatpush.msra.mxu0 %v370
    %v372 = vand.u32 %v133, 4294901760
    %v373 = vsub.f32 %v133, %v372
    %374 = vmatpush.msra.mxu0 %v373
    %v375 = vand.u32 %v132, 4294901760
    %v376 = vsub.f32 %v132, %v375
    %377 = vmatpush.msra.mxu0 %v376
    %v378 = vand.u32 %v131, 4294901760
    %v379 = vsub.f32 %v131, %v378
    %380 = vmatpush.msra.mxu0 %v379
    %v381 = vand.u32 %v130, 4294901760
    %v382 = vsub.f32 %v130, %v381
    %383 = vmatpush.msra.mxu0 %v382
    %v384 = vand.u32 %v129, 4294901760
    %v385 = vsub.f32 %v129, %v384
    %386 = vmatpush.msra.mxu0 %v385
    %v387 = vand.u32 %v128, 4294901760
    %v388 = vsub.f32 %v128, %v387
    %389 = vmatpush.msra.mxu0 %v388
    %v390 = vand.u32 %v127, 4294901760
    %v391 = vsub.f32 %v127, %v390
    %392 = vmatpush.msra.mxu0 %v391
    %v393 = vand.u32 %v126, 4294901760
    %v394 = vsub.f32 %v126, %v393
    %395 = vmatpush.msra.mxu0 %v394
    %v396 = vand.u32 %v125, 4294901760
    %v397 = vsub.f32 %v125, %v396
    %398 = vmatpush.msra.mxu0 %v397
    %v399 = vand.u32 %v124, 4294901760
    %v400 = vsub.f32 %v124, %v399
    %401 = vmatpush.msra.mxu0 %v400
    %v402 = vand.u32 %v123, 4294901760
    %v403 = vsub.f32 %v123, %v402
    %404 = vmatpush.msra.mxu0 %v403
    %v405 = vand.u32 %v122, 4294901760
    %v406 = vsub.f32 %v122, %v405
    %407 = vmatpush.msra.mxu0 %v406
    %v408 = vand.u32 %v121, 4294901760
    %v409 = vsub.f32 %v121, %v408
    %410 = vmatpush.msra.mxu0 %v409
    %v411 = vand.u32 %v113, 4294901760
    %v412 = vsub.f32 %v113, %v411
    %413 = vmatmul.f32.gmra.mxu0 %v412
    %v414 = vpop.f32.mrf.mxu0
    %v415 = vadd.f32 %v333, %v414
    %v416 = vand.u32 %v114, 4294901760
    %v417 = vsub.f32 %v114, %v416
    %418 = vmatmul.f32.gmra.mxu0 %v417
    %v419 = vpop.f32.mrf.mxu0
    %v420 = vadd.f32 %v337, %v419
    %v421 = vand.u32 %v115, 4294901760
    %v422 = vsub.f32 %v115, %v421
    %423 = vmatmul.f32.gmra.mxu0 %v422
    %v424 = vpop.f32.mrf.mxu0
    %v425 = vadd.f32 %v341, %v424
    %v426 = vand.u32 %v116, 4294901760
    %v427 = vsub.f32 %v116, %v426
    %428 = vmatmul.f32.gmra.mxu0 %v427
    %v429 = vpop.f32.mrf.mxu0
    %v430 = vadd.f32 %v345, %v429
    %v431 = vand.u32 %v117, 4294901760
    %v432 = vsub.f32 %v117, %v431
    %433 = vmatmul.f32.gmra.mxu0 %v432
    %v434 = vpop.f32.mrf.mxu0
    %v435 = vadd.f32 %v349, %v434
    %v436 = vand.u32 %v118, 4294901760
    %v437 = vsub.f32 %v118, %v436
    %438 = vmatmul.f32.gmra.mxu0 %v437
    %v439 = vpop.f32.mrf.mxu0
    %v440 = vadd.f32 %v353, %v439
    %v441 = vand.u32 %v119, 4294901760
    %v442 = vsub.f32 %v119, %v441
    %443 = vmatmul.f32.gmra.mxu0 %v442
    %v444 = vpop.f32.mrf.mxu0
    %v445 = vadd.f32 %v357, %v444
    %v446 = vand.u32 %v120, 4294901760
    %v447 = vsub.f32 %v120, %v446
    %448 = vmatmul.f32.gmra.mxu0 %v447
    %v449 = vpop.f32.mrf.mxu0
    %v450 = vadd.f32 %v361, %v449
    %451 = vdwg.mxu0
    %v452 = vand.u32 %v136, 4294901760
    %453 = vmatpush.msra.mxu0 %v452
    %v454 = vand.u32 %v135, 4294901760
    %455 = vmatpush.msra.mxu0 %v454
    %v456 = vand.u32 %v134, 4294901760
    %457 = vmatpush.msra.mxu0 %v456
    %v458 = vand.u32 %v133, 4294901760
    %459 = vmatpush.msra.mxu0 %v458
    %v460 = vand.u32 %v132, 4294901760
    %461 = vmatpush.msra.mxu0 %v460
    %v462 = vand.u32 %v131, 4294901760
    %463 = vmatpush.msra.mxu0 %v462
    %v464 = vand.u32 %v130, 4294901760
    %465 = vmatpush.msra.mxu0 %v464
    %v466 = vand.u32 %v129, 4294901760
    %467 = vmatpush.msra.mxu0 %v466
    %v468 = vand.u32 %v128, 4294901760
    %469 = vmatpush.msra.mxu0 %v468
    %v470 = vand.u32 %v127, 4294901760
    %471 = vmatpush.msra.mxu0 %v470
    %v472 = vand.u32 %v126, 4294901760
    %473 = vmatpush.msra.mxu0 %v472
    %v474 = vand.u32 %v125, 4294901760
    %475 = vmatpush.msra.mxu0 %v474
    %v476 = vand.u32 %v124, 4294901760
    %477 = vmatpush.msra.mxu0 %v476
    %v478 = vand.u32 %v123, 4294901760
    %479 = vmatpush.msra.mxu0 %v478
    %v480 = vand.u32 %v122, 4294901760
    %481 = vmatpush.msra.mxu0 %v480
    %v482 = vand.u32 %v121, 4294901760
    %483 = vmatpush.msra.mxu0 %v482
    %v484 = vand.u32 %v113, 4294901760
    %v485 = vsub.f32 %v113, %v484
    %v486 = vand.u32 %v485, 4294901760
    %487 = vmatmul.f32.gmra.mxu0 %v486
    %v488 = vpop.f32.mrf.mxu0
    %v489 = vadd.f32 %v415, %v488
    %v490 = vand.u32 %v114, 4294901760
    %v491 = vsub.f32 %v114, %v490
    %v492 = vand.u32 %v491, 4294901760
    %493 = vmatmul.f32.gmra.mxu0 %v492
    %v494 = vpop.f32.mrf.mxu0
    %v495 = vadd.f32 %v420, %v494
    %v496 = vand.u32 %v115, 4294901760
    %v497 = vsub.f32 %v115, %v496
    %v498 = vand.u32 %v497, 4294901760
    %499 = vmatmul.f32.gmra.mxu0 %v498
    %v500 = vpop.f32.mrf.mxu0
    %v501 = vadd.f32 %v425, %v500
    %v502 = vand.u32 %v116, 4294901760
    %v503 = vsub.f32 %v116, %v502
    %v504 = vand.u32 %v503, 4294901760
    %505 = vmatmul.f32.gmra.mxu0 %v504
    %v506 = vpop.f32.mrf.mxu0
    %v507 = vadd.f32 %v430, %v506
    %v508 = vand.u32 %v117, 4294901760
    %v509 = vsub.f32 %v117, %v508
    %v510 = vand.u32 %v509, 4294901760
    %511 = vmatmul.f32.gmra.mxu0 %v510
    %v512 = vpop.f32.mrf.mxu0
    %v513 = vadd.f32 %v435, %v512
    %v514 = vand.u32 %v118, 4294901760
    %v515 = vsub.f32 %v118, %v514
    %v516 = vand.u32 %v515, 4294901760
    %517 = vmatmul.f32.gmra.mxu0 %v516
    %v518 = vpop.f32.mrf.mxu0
    %v519 = vadd.f32 %v440, %v518
    %v520 = vand.u32 %v119, 4294901760
    %v521 = vsub.f32 %v119, %v520
    %v522 = vand.u32 %v521, 4294901760
    %523 = vmatmul.f32.gmra.mxu0 %v522
    %v524 = vpop.f32.mrf.mxu0
    %v525 = vadd.f32 %v445, %v524
    %v526 = vand.u32 %v120, 4294901760
    %v527 = vsub.f32 %v120, %v526
    %v528 = vand.u32 %v527, 4294901760
    %529 = vmatmul.f32.gmra.mxu0 %v528
    %v530 = vpop.f32.mrf.mxu0
    %v531 = vadd.f32 %v450, %v530
    %532 = vdwg.mxu0
    %v533 = vand.u32 %v136, 4294901760
    %v534 = vsub.f32 %v136, %v533
    %v535 = vand.u32 %v534, 4294901760
    %536 = vmatpush.msra.mxu0 %v535
    %v537 = vand.u32 %v135, 4294901760
    %v538 = vsub.f32 %v135, %v537
    %v539 = vand.u32 %v538, 4294901760
    %540 = vmatpush.msra.mxu0 %v539
    %v541 = vand.u32 %v134, 4294901760
    %v542 = vsub.f32 %v134, %v541
    %v543 = vand.u32 %v542, 4294901760
    %544 = vmatpush.msra.mxu0 %v543
    %v545 = vand.u32 %v133, 4294901760
    %v546 = vsub.f32 %v133, %v545
    %v547 = vand.u32 %v546, 4294901760
    %548 = vmatpush.msra.mxu0 %v547
    %v549 = vand.u32 %v132, 4294901760
    %v550 = vsub.f32 %v132, %v549
    %v551 = vand.u32 %v550, 4294901760
    %552 = vmatpush.msra.mxu0 %v551
    %v553 = vand.u32 %v131, 4294901760
    %v554 = vsub.f32 %v131, %v553
    %v555 = vand.u32 %v554, 4294901760
    %556 = vmatpush.msra.mxu0 %v555
    %v557 = vand.u32 %v130, 4294901760
    %v558 = vsub.f32 %v130, %v557
    %v559 = vand.u32 %v558, 4294901760
    %560 = vmatpush.msra.mxu0 %v559
    %v561 = vand.u32 %v129, 4294901760
    %v562 = vsub.f32 %v129, %v561
    %v563 = vand.u32 %v562, 4294901760
    %564 = vmatpush.msra.mxu0 %v563
    %v565 = vand.u32 %v128, 4294901760
    %v566 = vsub.f32 %v128, %v565
    %v567 = vand.u32 %v566, 4294901760
    %568 = vmatpush.msra.mxu0 %v567
    %v569 = vand.u32 %v127, 4294901760
    %v570 = vsub.f32 %v127, %v569
    %v571 = vand.u32 %v570, 4294901760
    %572 = vmatpush.msra.mxu0 %v571
    %v573 = vand.u32 %v126, 4294901760
    %v574 = vsub.f32 %v126, %v573
    %v575 = vand.u32 %v574, 4294901760
    %576 = vmatpush.msra.mxu0 %v575
    %v577 = vand.u32 %v125, 4294901760
    %v578 = vsub.f32 %v125, %v577
    %v579 = vand.u32 %v578, 4294901760
    %580 = vmatpush.msra.mxu0 %v579
    %v581 = vand.u32 %v124, 4294901760
    %v582 = vsub.f32 %v124, %v581
    %v583 = vand.u32 %v582, 4294901760
    %584 = vmatpush.msra.mxu0 %v583
    %v585 = vand.u32 %v123, 4294901760
    %v586 = vsub.f32 %v123, %v585
    %v587 = vand.u32 %v586, 4294901760
    %588 = vmatpush.msra.mxu0 %v587
    %v589 = vand.u32 %v122, 4294901760
    %v590 = vsub.f32 %v122, %v589
    %v591 = vand.u32 %v590, 4294901760
    %592 = vmatpush.msra.mxu0 %v591
    %v593 = vand.u32 %v121, 4294901760
    %v594 = vsub.f32 %v121, %v593
    %v595 = vand.u32 %v594, 4294901760
    %596 = vmatpush.msra.mxu0 %v595
    %v597 = vand.u32 %v113, 4294901760
    %598 = vmatmul.f32.gmra.mxu0 %v597
    %v599 = vpop.f32.mrf.mxu0
    %v600 = vadd.f32 %v489, %v599
    %v601 = vand.u32 %v114, 4294901760
    %602 = vmatmul.f32.gmra.mxu0 %v601
    %v603 = vpop.f32.mrf.mxu0
    %v604 = vadd.f32 %v495, %v603
    %v605 = vand.u32 %v115, 4294901760
    %606 = vmatmul.f32.gmra.mxu0 %v605
    %v607 = vpop.f32.mrf.mxu0
    %v608 = vadd.f32 %v501, %v607
    %v609 = vand.u32 %v116, 4294901760
    %610 = vmatmul.f32.gmra.mxu0 %v609
    %v611 = vpop.f32.mrf.mxu0
    %v612 = vadd.f32 %v507, %v611
    %v613 = vand.u32 %v117, 4294901760
    %614 = vmatmul.f32.gmra.mxu0 %v613
    %v615 = vpop.f32.mrf.mxu0
    %v616 = vadd.f32 %v513, %v615
    %v617 = vand.u32 %v118, 4294901760
    %618 = vmatmul.f32.gmra.mxu0 %v617
    %v619 = vpop.f32.mrf.mxu0
    %v620 = vadd.f32 %v519, %v619
    %v621 = vand.u32 %v119, 4294901760
    %622 = vmatmul.f32.gmra.mxu0 %v621
    %v623 = vpop.f32.mrf.mxu0
    %v624 = vadd.f32 %v525, %v623
    %v625 = vand.u32 %v120, 4294901760
    %626 = vmatmul.f32.gmra.mxu0 %v625
    %v627 = vpop.f32.mrf.mxu0
    %v628 = vadd.f32 %v531, %v627
    %629 = vdwg.mxu0
    %v630 = vand.u32 %v136, 4294901760
    %631 = vmatpush.msra.mxu0 %v630
    %v632 = vand.u32 %v135, 4294901760
    %633 = vmatpush.msra.mxu0 %v632
    %v634 = vand.u32 %v134, 4294901760
    %635 = vmatpush.msra.mxu0 %v634
    %v636 = vand.u32 %v133, 4294901760
    %637 = vmatpush.msra.mxu0 %v636
    %v638 = vand.u32 %v132, 4294901760
    %639 = vmatpush.msra.mxu0 %v638
    %v640 = vand.u32 %v131, 4294901760
    %641 = vmatpush.msra.mxu0 %v640
    %v642 = vand.u32 %v130, 4294901760
    %643 = vmatpush.msra.mxu0 %v642
    %v644 = vand.u32 %v129, 4294901760
    %645 = vmatpush.msra.mxu0 %v644
    %v646 = vand.u32 %v128, 4294901760
    %647 = vmatpush.msra.mxu0 %v646
    %v648 = vand.u32 %v127, 4294901760
    %649 = vmatpush.msra.mxu0 %v648
    %v650 = vand.u32 %v126, 4294901760
    %651 = vmatpush.msra.mxu0 %v650
    %v652 = vand.u32 %v125, 4294901760
    %653 = vmatpush.msra.mxu0 %v652
    %v654 = vand.u32 %v124, 4294901760
    %655 = vmatpush.msra.mxu0 %v654
    %v656 = vand.u32 %v123, 4294901760
    %657 = vmatpush.msra.mxu0 %v656
    %v658 = vand.u32 %v122, 4294901760
    %659 = vmatpush.msra.mxu0 %v658
    %v660 = vand.u32 %v121, 4294901760
    %661 = vmatpush.msra.mxu0 %v660
    %v662 = vand.u32 %v113, 4294901760
    %663 = vmatmul.f32.gmra.mxu0 %v662
    %v664 = vpop.f32.mrf.mxu0
    %v665 = vadd.f32 %v600, %v664
    %v666 = vand.u32 %v114, 4294901760
    %667 = vmatmul.f32.gmra.mxu0 %v666
    %v668 = vpop.f32.mrf.mxu0
    %v669 = vadd.f32 %v604, %v668
    %v670 = vand.u32 %v115, 4294901760
    %671 = vmatmul.f32.gmra.mxu0 %v670
    %v672 = vpop.f32.mrf.mxu0
    %v673 = vadd.f32 %v608, %v672
    %v674 = vand.u32 %v116, 4294901760
    %675 = vmatmul.f32.gmra.mxu0 %v674
    %v676 = vpop.f32.mrf.mxu0
    %v677 = vadd.f32 %v612, %v676
    %v678 = vand.u32 %v117, 4294901760
    %679 = vmatmul.f32.gmra.mxu0 %v678
    %v680 = vpop.f32.mrf.mxu0
    %v681 = vadd.f32 %v616, %v680
    %v682 = vand.u32 %v118, 4294901760
    %683 = vmatmul.f32.gmra.mxu0 %v682
    %v684 = vpop.f32.mrf.mxu0
    %v685 = vadd.f32 %v620, %v684
    %v686 = vand.u32 %v119, 4294901760
    %687 = vmatmul.f32.gmra.mxu0 %v686
    %v688 = vpop.f32.mrf.mxu0
    %v689 = vadd.f32 %v624, %v688
    %v690 = vand.u32 %v120, 4294901760
    %691 = vmatmul.f32.gmra.mxu0 %v690
    %v692 = vpop.f32.mrf.mxu0
    %v693 = vadd.f32 %v628, %v692
    %694 = vdwg.mxu0
    %v695 = vld [vmem:[#allocation6] sm:$0xff]
    %v696 = vld [vmem:[#allocation6 + $0x8] sm:$0xff]
    %v697 = vld [vmem:[#allocation6 + $0x10] sm:$0xff]
    %v698 = vld [vmem:[#allocation6 + $0x18] sm:$0xff]
    %v699 = vld [vmem:[#allocation6 + $0x20] sm:$0xff]
    %v700 = vld [vmem:[#allocation6 + $0x28] sm:$0xff]
    %v701 = vld [vmem:[#allocation6 + $0x30] sm:$0xff]
    %v702 = vld [vmem:[#allocation6 + $0x38] sm:$0xff]
    %v703 = vld [vmem:[#allocation6 + $0x40] sm:$0xff]
    %v704 = vld [vmem:[#allocation6 + $0x48] sm:$0xff]
    %v705 = vld [vmem:[#allocation6 + $0x50] sm:$0xff]
    %v706 = vld [vmem:[#allocation6 + $0x58] sm:$0xff]
    %v707 = vld [vmem:[#allocation6 + $0x60] sm:$0xff]
    %v708 = vld [vmem:[#allocation6 + $0x68] sm:$0xff]
    %v709 = vld [vmem:[#allocation6 + $0x70] sm:$0xff]
    %v710 = vld [vmem:[#allocation6 + $0x78] sm:$0xff]
    %v711 = vld [vmem:[#allocation6 + $0x80] sm:$0xff]
    %v712 = vld [vmem:[#allocation6 + $0x88] sm:$0xff]
    %v713 = vld [vmem:[#allocation6 + $0x90] sm:$0xff]
    %v714 = vld [vmem:[#allocation6 + $0x98] sm:$0xff]
    %v715 = vld [vmem:[#allocation6 + $0xa0] sm:$0xff]
    %v716 = vld [vmem:[#allocation6 + $0xa8] sm:$0xff]
    %v717 = vld [vmem:[#allocation6 + $0xb0] sm:$0xff]
    %v718 = vld [vmem:[#allocation6 + $0xb8] sm:$0xff]
    %v719 = vld [vmem:[#allocation6 + $0xc0] sm:$0xff]
    %v720 = vld [vmem:[#allocation6 + $0xc8] sm:$0xff]
    %v721 = vld [vmem:[#allocation6 + $0xd0] sm:$0xff]
    %v722 = vld [vmem:[#allocation6 + $0xd8] sm:$0xff]
    %v723 = vld [vmem:[#allocation6 + $0xe0] sm:$0xff]
    %v724 = vld [vmem:[#allocation6 + $0xe8] sm:$0xff]
    %v725 = vld [vmem:[#allocation6 + $0xf0] sm:$0xff]
    %v726 = vld [vmem:[#allocation6 + $0xf8] sm:$0xff]
    %v727 = vld [vmem:[%s5] sm:$0x3]
    %v729 = vperm.slane %v727, 0
    %v730 = vperm.slane %v727, 1
    %v733 = vand.u32 %v725, 4294901760
    %734 = vmatpush.msra.mxu0 %v733
    %v735 = vand.u32 %v723, 4294901760
    %736 = vmatpush.msra.mxu0 %v735
    %v737 = vand.u32 %v721, 4294901760
    %738 = vmatpush.msra.mxu0 %v737
    %v739 = vand.u32 %v719, 4294901760
    %740 = vmatpush.msra.mxu0 %v739
    %v741 = vand.u32 %v717, 4294901760
    %742 = vmatpush.msra.mxu0 %v741
    %v743 = vand.u32 %v715, 4294901760
    %744 = vmatpush.msra.mxu0 %v743
    %v745 = vand.u32 %v713, 4294901760
    %746 = vmatpush.msra.mxu0 %v745
    %v747 = vand.u32 %v711, 4294901760
    %748 = vmatpush.msra.mxu0 %v747
    %v749 = vand.u32 %v709, 4294901760
    %750 = vmatpush.msra.mxu0 %v749
    %v751 = vand.u32 %v707, 4294901760
    %752 = vmatpush.msra.mxu0 %v751
    %v753 = vand.u32 %v705, 4294901760
    %754 = vmatpush.msra.mxu0 %v753
    %v755 = vand.u32 %v703, 4294901760
    %756 = vmatpush.msra.mxu0 %v755
    %v757 = vand.u32 %v701, 4294901760
    %758 = vmatpush.msra.mxu0 %v757
    %v759 = vand.u32 %v699, 4294901760
    %760 = vmatpush.msra.mxu0 %v759
    %v761 = vand.u32 %v697, 4294901760
    %762 = vmatpush.msra.mxu0 %v761
    %v763 = vand.u32 %v695, 4294901760
    %764 = vmatpush.msra.mxu0 %v763
    %v765 = vand.u32 %v665, 4294901760
    %v766 = vsub.f32 %v665, %v765
    %v767 = vand.u32 %v766, 4294901760
    %v768 = vsub.f32 %v766, %v767
    %v769 = vand.u32 %v768, 4294901760
    %770 = vmatmul.f32.gmra.mxu0 %v769
    %v771 = vpop.f32.mrf.mxu0
    %v772 = vadd.f32 %v729, %v771
    %v773 = vand.u32 %v669, 4294901760
    %v774 = vsub.f32 %v669, %v773
    %v775 = vand.u32 %v774, 4294901760
    %v776 = vsub.f32 %v774, %v775
    %v777 = vand.u32 %v776, 4294901760
    %778 = vmatmul.f32.gmra.mxu0 %v777
    %v779 = vpop.f32.mrf.mxu0
    %v780 = vadd.f32 %v729, %v779
    %v781 = vand.u32 %v673, 4294901760
    %v782 = vsub.f32 %v673, %v781
    %v783 = vand.u32 %v782, 4294901760
    %v784 = vsub.f32 %v782, %v783
    %v785 = vand.u32 %v784, 4294901760
    %786 = vmatmul.f32.gmra.mxu0 %v785
    %v787 = vpop.f32.mrf.mxu0
    %v788 = vadd.f32 %v729, %v787
    %v789 = vand.u32 %v677, 4294901760
    %v790 = vsub.f32 %v677, %v789
    %v791 = vand.u32 %v790, 4294901760
    %v792 = vsub.f32 %v790, %v791
    %v793 = vand.u32 %v792, 4294901760
    %794 = vmatmul.f32.gmra.mxu0 %v793
    %v795 = vpop.f32.mrf.mxu0
    %v796 = vadd.f32 %v729, %v795
    %v797 = vand.u32 %v681, 4294901760
    %v798 = vsub.f32 %v681, %v797
    %v799 = vand.u32 %v798, 4294901760
    %v800 = vsub.f32 %v798, %v799
    %v801 = vand.u32 %v800, 4294901760
    %802 = vmatmul.f32.gmra.mxu0 %v801
    %v803 = vpop.f32.mrf.mxu0
    %v804 = vadd.f32 %v729, %v803
    %v805 = vand.u32 %v685, 4294901760
    %v806 = vsub.f32 %v685, %v805
    %v807 = vand.u32 %v806, 4294901760
    %v808 = vsub.f32 %v806, %v807
    %v809 = vand.u32 %v808, 4294901760
    %810 = vmatmul.f32.gmra.mxu0 %v809
    %v811 = vpop.f32.mrf.mxu0
    %v812 = vadd.f32 %v729, %v811
    %v813 = vand.u32 %v689, 4294901760
    %v814 = vsub.f32 %v689, %v813
    %v815 = vand.u32 %v814, 4294901760
    %v816 = vsub.f32 %v814, %v815
    %v817 = vand.u32 %v816, 4294901760
    %818 = vmatmul.f32.gmra.mxu0 %v817
    %v819 = vpop.f32.mrf.mxu0
    %v820 = vadd.f32 %v729, %v819
    %v821 = vand.u32 %v693, 4294901760
    %v822 = vsub.f32 %v693, %v821
    %v823 = vand.u32 %v822, 4294901760
    %v824 = vsub.f32 %v822, %v823
    %v825 = vand.u32 %v824, 4294901760
    %826 = vmatmul.f32.gmra.mxu0 %v825
    %v827 = vpop.f32.mrf.mxu0
    %v828 = vadd.f32 %v729, %v827
    %829 = vdwg.mxu0
    %v830 = vand.u32 %v725, 4294901760
    %v831 = vsub.f32 %v725, %v830
    %v832 = vand.u32 %v831, 4294901760
    %v833 = vsub.f32 %v831, %v832
    %v834 = vand.u32 %v833, 4294901760
    %835 = vmatpush.msra.mxu0 %v834
    %v836 = vand.u32 %v723, 4294901760
    %v837 = vsub.f32 %v723, %v836
    %v838 = vand.u32 %v837, 4294901760
    %v839 = vsub.f32 %v837, %v838
    %v840 = vand.u32 %v839, 4294901760
    %841 = vmatpush.msra.mxu0 %v840
    %v842 = vand.u32 %v721, 4294901760
    %v843 = vsub.f32 %v721, %v842
    %v844 = vand.u32 %v843, 4294901760
    %v845 = vsub.f32 %v843, %v844
    %v846 = vand.u32 %v845, 4294901760
    %847 = vmatpush.msra.mxu0 %v846
    %v848 = vand.u32 %v719, 4294901760
    %v849 = vsub.f32 %v719, %v848
    %v850 = vand.u32 %v849, 4294901760
    %v851 = vsub.f32 %v849, %v850
    %v852 = vand.u32 %v851, 4294901760
    %853 = vmatpush.msra.mxu0 %v852
    %v854 = vand.u32 %v717, 4294901760
    %v855 = vsub.f32 %v717, %v854
    %v856 = vand.u32 %v855, 4294901760
    %v857 = vsub.f32 %v855, %v856
    %v858 = vand.u32 %v857, 4294901760
    %859 = vmatpush.msra.mxu0 %v858
    %v860 = vand.u32 %v715, 4294901760
    %v861 = vsub.f32 %v715, %v860
    %v862 = vand.u32 %v861, 4294901760
    %v863 = vsub.f32 %v861, %v862
    %v864 = vand.u32 %v863, 4294901760
    %865 = vmatpush.msra.mxu0 %v864
    %v866 = vand.u32 %v713, 4294901760
    %v867 = vsub.f32 %v713, %v866
    %v868 = vand.u32 %v867, 4294901760
    %v869 = vsub.f32 %v867, %v868
    %v870 = vand.u32 %v869, 4294901760
    %871 = vmatpush.msra.mxu0 %v870
    %v872 = vand.u32 %v711, 4294901760
    %v873 = vsub.f32 %v711, %v872
    %v874 = vand.u32 %v873, 4294901760
    %v875 = vsub.f32 %v873, %v874
    %v876 = vand.u32 %v875, 4294901760
    %877 = vmatpush.msra.mxu0 %v876
    %v878 = vand.u32 %v709, 4294901760
    %v879 = vsub.f32 %v709, %v878
    %v880 = vand.u32 %v879, 4294901760
    %v881 = vsub.f32 %v879, %v880
    %v882 = vand.u32 %v881, 4294901760
    %883 = vmatpush.msra.mxu0 %v882
    %v884 = vand.u32 %v707, 4294901760
    %v885 = vsub.f32 %v707, %v884
    %v886 = vand.u32 %v885, 4294901760
    %v887 = vsub.f32 %v885, %v886
    %v888 = vand.u32 %v887, 4294901760
    %889 = vmatpush.msra.mxu0 %v888
    %v890 = vand.u32 %v705, 4294901760
    %v891 = vsub.f32 %v705, %v890
    %v892 = vand.u32 %v891, 4294901760
    %v893 = vsub.f32 %v891, %v892
    %v894 = vand.u32 %v893, 4294901760
    %895 = vmatpush.msra.mxu0 %v894
    %v896 = vand.u32 %v703, 4294901760
    %v897 = vsub.f32 %v703, %v896
    %v898 = vand.u32 %v897, 4294901760
    %v899 = vsub.f32 %v897, %v898
    %v900 = vand.u32 %v899, 4294901760
    %901 = vmatpush.msra.mxu0 %v900
    %v902 = vand.u32 %v701, 4294901760
    %v903 = vsub.f32 %v701, %v902
    %v904 = vand.u32 %v903, 4294901760
    %v905 = vsub.f32 %v903, %v904
    %v906 = vand.u32 %v905, 4294901760
    %907 = vmatpush.msra.mxu0 %v906
    %v908 = vand.u32 %v699, 4294901760
    %v909 = vsub.f32 %v699, %v908
    %v910 = vand.u32 %v909, 4294901760
    %v911 = vsub.f32 %v909, %v910
    %v912 = vand.u32 %v911, 4294901760
    %913 = vmatpush.msra.mxu0 %v912
    %v914 = vand.u32 %v697, 4294901760
    %v915 = vsub.f32 %v697, %v914
    %v916 = vand.u32 %v915, 4294901760
    %v917 = vsub.f32 %v915, %v916
    %v918 = vand.u32 %v917, 4294901760
    %919 = vmatpush.msra.mxu0 %v918
    %v920 = vand.u32 %v695, 4294901760
    %v921 = vsub.f32 %v695, %v920
    %v922 = vand.u32 %v921, 4294901760
    %v923 = vsub.f32 %v921, %v922
    %v924 = vand.u32 %v923, 4294901760
    %925 = vmatpush.msra.mxu0 %v924
    %v926 = vand.u32 %v665, 4294901760
    %927 = vmatmul.f32.gmra.mxu0 %v926
    %v928 = vpop.f32.mrf.mxu0
    %v929 = vadd.f32 %v772, %v928
    %v930 = vand.u32 %v669, 4294901760
    %931 = vmatmul.f32.gmra.mxu0 %v930
    %v932 = vpop.f32.mrf.mxu0
    %v933 = vadd.f32 %v780, %v932
    %v934 = vand.u32 %v673, 4294901760
    %935 = vmatmul.f32.gmra.mxu0 %v934
    %v936 = vpop.f32.mrf.mxu0
    %v937 = vadd.f32 %v788, %v936
    %v938 = vand.u32 %v677, 4294901760
    %939 = vmatmul.f32.gmra.mxu0 %v938
    %v940 = vpop.f32.mrf.mxu0
    %v941 = vadd.f32 %v796, %v940
    %v942 = vand.u32 %v681, 4294901760
    %943 = vmatmul.f32.gmra.mxu0 %v942
    %v944 = vpop.f32.mrf.mxu0
    %v945 = vadd.f32 %v804, %v944
    %v946 = vand.u32 %v685, 4294901760
    %947 = vmatmul.f32.gmra.mxu0 %v946
    %v948 = vpop.f32.mrf.mxu0
    %v949 = vadd.f32 %v812, %v948
    %v950 = vand.u32 %v689, 4294901760
    %951 = vmatmul.f32.gmra.mxu0 %v950
    %v952 = vpop.f32.mrf.mxu0
    %v953 = vadd.f32 %v820, %v952
    %v954 = vand.u32 %v693, 4294901760
    %955 = vmatmul.f32.gmra.mxu0 %v954
    %v956 = vpop.f32.mrf.mxu0
    %v957 = vadd.f32 %v828, %v956
    %958 = vdwg.mxu0
    %v959 = vand.u32 %v725, 4294901760
    %v960 = vsub.f32 %v725, %v959
    %961 = vmatpush.msra.mxu0 %v960
    %v962 = vand.u32 %v723, 4294901760
    %v963 = vsub.f32 %v723, %v962
    %964 = vmatpush.msra.mxu0 %v963
    %v965 = vand.u32 %v721, 4294901760
    %v966 = vsub.f32 %v721, %v965
    %967 = vmatpush.msra.mxu0 %v966
    %v968 = vand.u32 %v719, 4294901760
    %v969 = vsub.f32 %v719, %v968
    %970 = vmatpush.msra.mxu0 %v969
    %v971 = vand.u32 %v717, 4294901760
    %v972 = vsub.f32 %v717, %v971
    %973 = vmatpush.msra.mxu0 %v972
    %v974 = vand.u32 %v715, 4294901760
    %v975 = vsub.f32 %v715, %v974
    %976 = vmatpush.msra.mxu0 %v975
    %v977 = vand.u32 %v713, 4294901760
    %v978 = vsub.f32 %v713, %v977
    %979 = vmatpush.msra.mxu0 %v978
    %v980 = vand.u32 %v711, 4294901760
    %v981 = vsub.f32 %v711, %v980
    %982 = vmatpush.msra.mxu0 %v981
    %v983 = vand.u32 %v709, 4294901760
    %v984 = vsub.f32 %v709, %v983
    %985 = vmatpush.msra.mxu0 %v984
    %v986 = vand.u32 %v707, 4294901760
    %v987 = vsub.f32 %v707, %v986
    %988 = vmatpush.msra.mxu0 %v987
    %v989 = vand.u32 %v705, 4294901760
    %v990 = vsub.f32 %v705, %v989
    %991 = vmatpush.msra.mxu0 %v990
    %v992 = vand.u32 %v703, 4294901760
    %v993 = vsub.f32 %v703, %v992
    %994 = vmatpush.msra.mxu0 %v993
    %v995 = vand.u32 %v701, 4294901760
    %v996 = vsub.f32 %v701, %v995
    %997 = vmatpush.msra.mxu0 %v996
    %v998 = vand.u32 %v699, 4294901760
    %v999 = vsub.f32 %v699, %v998
    %1000 = vmatpush.msra.mxu0 %v999
    %v1001 = vand.u32 %v697, 4294901760
    %v1002 = vsub.f32 %v697, %v1001
    %1003 = vmatpush.msra.mxu0 %v1002
    %v1004 = vand.u32 %v695, 4294901760
    %v1005 = vsub.f32 %v695, %v1004
    %1006 = vmatpush.msra.mxu0 %v1005
    %v1007 = vand.u32 %v665, 4294901760
    %v1008 = vsub.f32 %v665, %v1007
    %1009 = vmatmul.f32.gmra.mxu0 %v1008
    %v1010 = vpop.f32.mrf.mxu0
    %v1011 = vadd.f32 %v929, %v1010
    %v1012 = vand.u32 %v669, 4294901760
    %v1013 = vsub.f32 %v669, %v1012
    %1014 = vmatmul.f32.gmra.mxu0 %v1013
    %v1015 = vpop.f32.mrf.mxu0
    %v1016 = vadd.f32 %v933, %v1015
    %v1017 = vand.u32 %v673, 4294901760
    %v1018 = vsub.f32 %v673, %v1017
    %1019 = vmatmul.f32.gmra.mxu0 %v1018
    %v1020 = vpop.f32.mrf.mxu0
    %v1021 = vadd.f32 %v937, %v1020
    %v1022 = vand.u32 %v677, 4294901760
    %v1023 = vsub.f32 %v677, %v1022
    %1024 = vmatmul.f32.gmra.mxu0 %v1023
    %v1025 = vpop.f32.mrf.mxu0
    %v1026 = vadd.f32 %v941, %v1025
    %v1027 = vand.u32 %v681, 4294901760
    %v1028 = vsub.f32 %v681, %v1027
    %1029 = vmatmul.f32.gmra.mxu0 %v1028
    %v1030 = vpop.f32.mrf.mxu0
    %v1031 = vadd.f32 %v945, %v1030
    %v1032 = vand.u32 %v685, 4294901760
    %v1033 = vsub.f32 %v685, %v1032
    %1034 = vmatmul.f32.gmra.mxu0 %v1033
    %v1035 = vpop.f32.mrf.mxu0
    %v1036 = vadd.f32 %v949, %v1035
    %v1037 = vand.u32 %v689, 4294901760
    %v1038 = vsub.f32 %v689, %v1037
    %1039 = vmatmul.f32.gmra.mxu0 %v1038
    %v1040 = vpop.f32.mrf.mxu0
    %v1041 = vadd.f32 %v953, %v1040
    %v1042 = vand.u32 %v693, 4294901760
    %v1043 = vsub.f32 %v693, %v1042
    %1044 = vmatmul.f32.gmra.mxu0 %v1043
    %v1045 = vpop.f32.mrf.mxu0
    %v1046 = vadd.f32 %v957, %v1045
    %1047 = vdwg.mxu0
    %v1048 = vand.u32 %v725, 4294901760
    %1049 = vmatpush.msra.mxu0 %v1048
    %v1050 = vand.u32 %v723, 4294901760
    %1051 = vmatpush.msra.mxu0 %v1050
    %v1052 = vand.u32 %v721, 4294901760
    %1053 = vmatpush.msra.mxu0 %v1052
    %v1054 = vand.u32 %v719, 4294901760
    %1055 = vmatpush.msra.mxu0 %v1054
    %v1056 = vand.u32 %v717, 4294901760
    %1057 = vmatpush.msra.mxu0 %v1056
    %v1058 = vand.u32 %v715, 4294901760
    %1059 = vmatpush.msra.mxu0 %v1058
    %v1060 = vand.u32 %v713, 4294901760
    %1061 = vmatpush.msra.mxu0 %v1060
    %v1062 = vand.u32 %v711, 4294901760
    %1063 = vmatpush.msra.mxu0 %v1062
    %v1064 = vand.u32 %v709, 4294901760
    %1065 = vmatpush.msra.mxu0 %v1064
    %v1066 = vand.u32 %v707, 4294901760
    %1067 = vmatpush.msra.mxu0 %v1066
    %v1068 = vand.u32 %v705, 4294901760
    %1069 = vmatpush.msra.mxu0 %v1068
    %v1070 = vand.u32 %v703, 4294901760
    %1071 = vmatpush.msra.mxu0 %v1070
    %v1072 = vand.u32 %v701, 4294901760
    %1073 = vmatpush.msra.mxu0 %v1072
    %v1074 = vand.u32 %v699, 4294901760
    %1075 = vmatpush.msra.mxu0 %v1074
    %v1076 = vand.u32 %v697, 4294901760
    %1077 = vmatpush.msra.mxu0 %v1076
    %v1078 = vand.u32 %v695, 4294901760
    %1079 = vmatpush.msra.mxu0 %v1078
    %v1080 = vand.u32 %v665, 4294901760
    %v1081 = vsub.f32 %v665, %v1080
    %v1082 = vand.u32 %v1081, 4294901760
    %1083 = vmatmul.f32.gmra.mxu0 %v1082
    %v1084 = vpop.f32.mrf.mxu0
    %v1085 = vadd.f32 %v1011, %v1084
    %v1086 = vand.u32 %v669, 4294901760
    %v1087 = vsub.f32 %v669, %v1086
    %v1088 = vand.u32 %v1087, 4294901760
    %1089 = vmatmul.f32.gmra.mxu0 %v1088
    %v1090 = vpop.f32.mrf.mxu0
    %v1091 = vadd.f32 %v1016, %v1090
    %v1092 = vand.u32 %v673, 4294901760
    %v1093 = vsub.f32 %v673, %v1092
    %v1094 = vand.u32 %v1093, 4294901760
    %1095 = vmatmul.f32.gmra.mxu0 %v1094
    %v1096 = vpop.f32.mrf.mxu0
    %v1097 = vadd.f32 %v1021, %v1096
    %v1098 = vand.u32 %v677, 4294901760
    %v1099 = vsub.f32 %v677, %v1098
    %v1100 = vand.u32 %v1099, 4294901760
    %1101 = vmatmul.f32.gmra.mxu0 %v1100
    %v1102 = vpop.f32.mrf.mxu0
    %v1103 = vadd.f32 %v1026, %v1102
    %v1104 = vand.u32 %v681, 4294901760
    %v1105 = vsub.f32 %v681, %v1104
    %v1106 = vand.u32 %v1105, 4294901760
    %1107 = vmatmul.f32.gmra.mxu0 %v1106
    %v1108 = vpop.f32.mrf.mxu0
    %v1109 = vadd.f32 %v1031, %v1108
    %v1110 = vand.u32 %v685, 4294901760
    %v1111 = vsub.f32 %v685, %v1110
    %v1112 = vand.u32 %v1111, 4294901760
    %1113 = vmatmul.f32.gmra.mxu0 %v1112
    %v1114 = vpop.f32.mrf.mxu0
    %v1115 = vadd.f32 %v1036, %v1114
    %v1116 = vand.u32 %v689, 4294901760
    %v1117 = vsub.f32 %v689, %v1116
    %v1118 = vand.u32 %v1117, 4294901760
    %1119 = vmatmul.f32.gmra.mxu0 %v1118
    %v1120 = vpop.f32.mrf.mxu0
    %v1121 = vadd.f32 %v1041, %v1120
    %v1122 = vand.u32 %v693, 4294901760
    %v1123 = vsub.f32 %v693, %v1122
    %v1124 = vand.u32 %v1123, 4294901760
    %1125 = vmatmul.f32.gmra.mxu0 %v1124
    %v1126 = vpop.f32.mrf.mxu0
    %v1127 = vadd.f32 %v1046, %v1126
    %1128 = vdwg.mxu0
    %v1129 = vand.u32 %v725, 4294901760
    %v1130 = vsub.f32 %v725, %v1129
    %v1131 = vand.u32 %v1130, 4294901760
    %1132 = vmatpush.msra.mxu0 %v1131
    %v1133 = vand.u32 %v723, 4294901760
    %v1134 = vsub.f32 %v723, %v1133
    %v1135 = vand.u32 %v1134, 4294901760
    %1136 = vmatpush.msra.mxu0 %v1135
    %v1137 = vand.u32 %v721, 4294901760
    %v1138 = vsub.f32 %v721, %v1137
    %v1139 = vand.u32 %v1138, 4294901760
    %1140 = vmatpush.msra.mxu0 %v1139
    %v1141 = vand.u32 %v719, 4294901760
    %v1142 = vsub.f32 %v719, %v1141
    %v1143 = vand.u32 %v1142, 4294901760
    %1144 = vmatpush.msra.mxu0 %v1143
    %v1145 = vand.u32 %v717, 4294901760
    %v1146 = vsub.f32 %v717, %v1145
    %v1147 = vand.u32 %v1146, 4294901760
    %1148 = vmatpush.msra.mxu0 %v1147
    %v1149 = vand.u32 %v715, 4294901760
    %v1150 = vsub.f32 %v715, %v1149
    %v1151 = vand.u32 %v1150, 4294901760
    %1152 = vmatpush.msra.mxu0 %v1151
    %v1153 = vand.u32 %v713, 4294901760
    %v1154 = vsub.f32 %v713, %v1153
    %v1155 = vand.u32 %v1154, 4294901760
    %1156 = vmatpush.msra.mxu0 %v1155
    %v1157 = vand.u32 %v711, 4294901760
    %v1158 = vsub.f32 %v711, %v1157
    %v1159 = vand.u32 %v1158, 4294901760
    %1160 = vmatpush.msra.mxu0 %v1159
    %v1161 = vand.u32 %v709, 4294901760
    %v1162 = vsub.f32 %v709, %v1161
    %v1163 = vand.u32 %v1162, 4294901760
    %1164 = vmatpush.msra.mxu0 %v1163
    %v1165 = vand.u32 %v707, 4294901760
    %v1166 = vsub.f32 %v707, %v1165
    %v1167 = vand.u32 %v1166, 4294901760
    %1168 = vmatpush.msra.mxu0 %v1167
    %v1169 = vand.u32 %v705, 4294901760
    %v1170 = vsub.f32 %v705, %v1169
    %v1171 = vand.u32 %v1170, 4294901760
    %1172 = vmatpush.msra.mxu0 %v1171
    %v1173 = vand.u32 %v703, 4294901760
    %v1174 = vsub.f32 %v703, %v1173
    %v1175 = vand.u32 %v1174, 4294901760
    %1176 = vmatpush.msra.mxu0 %v1175
    %v1177 = vand.u32 %v701, 4294901760
    %v1178 = vsub.f32 %v701, %v1177
    %v1179 = vand.u32 %v1178, 4294901760
    %1180 = vmatpush.msra.mxu0 %v1179
    %v1181 = vand.u32 %v699, 4294901760
    %v1182 = vsub.f32 %v699, %v1181
    %v1183 = vand.u32 %v1182, 4294901760
    %1184 = vmatpush.msra.mxu0 %v1183
    %v1185 = vand.u32 %v697, 4294901760
    %v1186 = vsub.f32 %v697, %v1185
    %v1187 = vand.u32 %v1186, 4294901760
    %1188 = vmatpush.msra.mxu0 %v1187
    %v1189 = vand.u32 %v695, 4294901760
    %v1190 = vsub.f32 %v695, %v1189
    %v1191 = vand.u32 %v1190, 4294901760
    %1192 = vmatpush.msra.mxu0 %v1191
    %v1193 = vand.u32 %v665, 4294901760
    %1194 = vmatmul.f32.gmra.mxu0 %v1193
    %v1195 = vpop.f32.mrf.mxu0
    %v1196 = vadd.f32 %v1085, %v1195
    %v1197 = vand.u32 %v669, 4294901760
    %1198 = vmatmul.f32.gmra.mxu0 %v1197
    %v1199 = vpop.f32.mrf.mxu0
    %v1200 = vadd.f32 %v1091, %v1199
    %v1201 = vand.u32 %v673, 4294901760
    %1202 = vmatmul.f32.gmra.mxu0 %v1201
    %v1203 = vpop.f32.mrf.mxu0
    %v1204 = vadd.f32 %v1097, %v1203
    %v1205 = vand.u32 %v677, 4294901760
    %1206 = vmatmul.f32.gmra.mxu0 %v1205
    %v1207 = vpop.f32.mrf.mxu0
    %v1208 = vadd.f32 %v1103, %v1207
    %v1209 = vand.u32 %v681, 4294901760
    %1210 = vmatmul.f32.gmra.mxu0 %v1209
    %v1211 = vpop.f32.mrf.mxu0
    %v1212 = vadd.f32 %v1109, %v1211
    %v1213 = vand.u32 %v685, 4294901760
    %1214 = vmatmul.f32.gmra.mxu0 %v1213
    %v1215 = vpop.f32.mrf.mxu0
    %v1216 = vadd.f32 %v1115, %v1215
    %v1217 = vand.u32 %v689, 4294901760
    %1218 = vmatmul.f32.gmra.mxu0 %v1217
    %v1219 = vpop.f32.mrf.mxu0
    %v1220 = vadd.f32 %v1121, %v1219
    %v1221 = vand.u32 %v693, 4294901760
    %1222 = vmatmul.f32.gmra.mxu0 %v1221
    %v1223 = vpop.f32.mrf.mxu0
    %v1224 = vadd.f32 %v1127, %v1223
    %1225 = vdwg.mxu0
    %v1226 = vand.u32 %v725, 4294901760
    %1227 = vmatpush.msra.mxu0 %v1226
    %v1228 = vand.u32 %v723, 4294901760
    %1229 = vmatpush.msra.mxu0 %v1228
    %v1230 = vand.u32 %v721, 4294901760
    %1231 = vmatpush.msra.mxu0 %v1230
    %v1232 = vand.u32 %v719, 4294901760
    %1233 = vmatpush.msra.mxu0 %v1232
    %v1234 = vand.u32 %v717, 4294901760
    %1235 = vmatpush.msra.mxu0 %v1234
    %v1236 = vand.u32 %v715, 4294901760
    %1237 = vmatpush.msra.mxu0 %v1236
    %v1238 = vand.u32 %v713, 4294901760
    %1239 = vmatpush.msra.mxu0 %v1238
    %v1240 = vand.u32 %v711, 4294901760
    %1241 = vmatpush.msra.mxu0 %v1240
    %v1242 = vand.u32 %v709, 4294901760
    %1243 = vmatpush.msra.mxu0 %v1242
    %v1244 = vand.u32 %v707, 4294901760
    %1245 = vmatpush.msra.mxu0 %v1244
    %v1246 = vand.u32 %v705, 4294901760
    %1247 = vmatpush.msra.mxu0 %v1246
    %v1248 = vand.u32 %v703, 4294901760
    %1249 = vmatpush.msra.mxu0 %v1248
    %v1250 = vand.u32 %v701, 4294901760
    %1251 = vmatpush.msra.mxu0 %v1250
    %v1252 = vand.u32 %v699, 4294901760
    %1253 = vmatpush.msra.mxu0 %v1252
    %v1254 = vand.u32 %v697, 4294901760
    %1255 = vmatpush.msra.mxu0 %v1254
    %v1256 = vand.u32 %v695, 4294901760
    %1257 = vmatpush.msra.mxu0 %v1256
    %v1258 = vand.u32 %v665, 4294901760
    %1259 = vmatmul.f32.gmra.mxu0 %v1258
    %v1260 = vpop.f32.mrf.mxu0
    %v1261 = vadd.f32 %v1196, %v1260
    %v1262 = vand.u32 %v669, 4294901760
    %1263 = vmatmul.f32.gmra.mxu0 %v1262
    %v1264 = vpop.f32.mrf.mxu0
    %v1265 = vadd.f32 %v1200, %v1264
    %v1266 = vand.u32 %v673, 4294901760
    %1267 = vmatmul.f32.gmra.mxu0 %v1266
    %v1268 = vpop.f32.mrf.mxu0
    %v1269 = vadd.f32 %v1204, %v1268
    %v1270 = vand.u32 %v677, 4294901760
    %1271 = vmatmul.f32.gmra.mxu0 %v1270
    %v1272 = vpop.f32.mrf.mxu0
    %v1273 = vadd.f32 %v1208, %v1272
    %v1274 = vand.u32 %v681, 4294901760
    %1275 = vmatmul.f32.gmra.mxu0 %v1274
    %v1276 = vpop.f32.mrf.mxu0
    %v1277 = vadd.f32 %v1212, %v1276
    %v1278 = vand.u32 %v685, 4294901760
    %1279 = vmatmul.f32.gmra.mxu0 %v1278
    %v1280 = vpop.f32.mrf.mxu0
    %v1281 = vadd.f32 %v1216, %v1280
    %v1282 = vand.u32 %v689, 4294901760
    %1283 = vmatmul.f32.gmra.mxu0 %v1282
    %v1284 = vpop.f32.mrf.mxu0
    %v1285 = vadd.f32 %v1220, %v1284
    %v1286 = vand.u32 %v693, 4294901760
    %1287 = vmatmul.f32.gmra.mxu0 %v1286
    %v1288 = vpop.f32.mrf.mxu0
    %v1289 = vadd.f32 %v1224, %v1288
    %1290 = vdwg.mxu0
    %v1291 = vand.u32 %v726, 4294901760
    %1292 = vmatpush.msra.mxu0 %v1291
    %v1293 = vand.u32 %v724, 4294901760
    %1294 = vmatpush.msra.mxu0 %v1293
    %v1295 = vand.u32 %v722, 4294901760
    %1296 = vmatpush.msra.mxu0 %v1295
    %v1297 = vand.u32 %v720, 4294901760
    %1298 = vmatpush.msra.mxu0 %v1297
    %v1299 = vand.u32 %v718, 4294901760
    %1300 = vmatpush.msra.mxu0 %v1299
    %v1301 = vand.u32 %v716, 4294901760
    %1302 = vmatpush.msra.mxu0 %v1301
    %v1303 = vand.u32 %v714, 4294901760
    %1304 = vmatpush.msra.mxu0 %v1303
    %v1305 = vand.u32 %v712, 4294901760
    %1306 = vmatpush.msra.mxu0 %v1305
    %v1307 = vand.u32 %v710, 4294901760
    %1308 = vmatpush.msra.mxu0 %v1307
    %v1309 = vand.u32 %v708, 4294901760
    %1310 = vmatpush.msra.mxu0 %v1309
    %v1311 = vand.u32 %v706, 4294901760
    %1312 = vmatpush.msra.mxu0 %v1311
    %v1313 = vand.u32 %v704, 4294901760
    %1314 = vmatpush.msra.mxu0 %v1313
    %v1315 = vand.u32 %v702, 4294901760
    %1316 = vmatpush.msra.mxu0 %v1315
    %v1317 = vand.u32 %v700, 4294901760
    %1318 = vmatpush.msra.mxu0 %v1317
    %v1319 = vand.u32 %v698, 4294901760
    %1320 = vmatpush.msra.mxu0 %v1319
    %v1321 = vand.u32 %v696, 4294901760
    %1322 = vmatpush.msra.mxu0 %v1321
    %v1323 = vand.u32 %v665, 4294901760
    %v1324 = vsub.f32 %v665, %v1323
    %v1325 = vand.u32 %v1324, 4294901760
    %v1326 = vsub.f32 %v1324, %v1325
    %v1327 = vand.u32 %v1326, 4294901760
    %1328 = vmatmul.f32.gmra.mxu0 %v1327
    %v1329 = vpop.f32.mrf.mxu0
    %v1330 = vadd.f32 %v730, %v1329
    %v1331 = vand.u32 %v669, 4294901760
    %v1332 = vsub.f32 %v669, %v1331
    %v1333 = vand.u32 %v1332, 4294901760
    %v1334 = vsub.f32 %v1332, %v1333
    %v1335 = vand.u32 %v1334, 4294901760
    %1336 = vmatmul.f32.gmra.mxu0 %v1335
    %v1337 = vpop.f32.mrf.mxu0
    %v1338 = vadd.f32 %v730, %v1337
    %v1339 = vand.u32 %v673, 4294901760
    %v1340 = vsub.f32 %v673, %v1339
    %v1341 = vand.u32 %v1340, 4294901760
    %v1342 = vsub.f32 %v1340, %v1341
    %v1343 = vand.u32 %v1342, 4294901760
    %1344 = vmatmul.f32.gmra.mxu0 %v1343
    %v1345 = vpop.f32.mrf.mxu0
    %v1346 = vadd.f32 %v730, %v1345
    %v1347 = vand.u32 %v677, 4294901760
    %v1348 = vsub.f32 %v677, %v1347
    %v1349 = vand.u32 %v1348, 4294901760
    %v1350 = vsub.f32 %v1348, %v1349
    %v1351 = vand.u32 %v1350, 4294901760
    %1352 = vmatmul.f32.gmra.mxu0 %v1351
    %v1353 = vpop.f32.mrf.mxu0
    %v1354 = vadd.f32 %v730, %v1353
    %v1355 = vand.u32 %v681, 4294901760
    %v1356 = vsub.f32 %v681, %v1355
    %v1357 = vand.u32 %v1356, 4294901760
    %v1358 = vsub.f32 %v1356, %v1357
    %v1359 = vand.u32 %v1358, 4294901760
    %1360 = vmatmul.f32.gmra.mxu0 %v1359
    %v1361 = vpop.f32.mrf.mxu0
    %v1362 = vadd.f32 %v730, %v1361
    %v1363 = vand.u32 %v685, 4294901760
    %v1364 = vsub.f32 %v685, %v1363
    %v1365 = vand.u32 %v1364, 4294901760
    %v1366 = vsub.f32 %v1364, %v1365
    %v1367 = vand.u32 %v1366, 4294901760
    %1368 = vmatmul.f32.gmra.mxu0 %v1367
    %v1369 = vpop.f32.mrf.mxu0
    %v1370 = vadd.f32 %v730, %v1369
    %v1371 = vand.u32 %v689, 4294901760
    %v1372 = vsub.f32 %v689, %v1371
    %v1373 = vand.u32 %v1372, 4294901760
    %v1374 = vsub.f32 %v1372, %v1373
    %v1375 = vand.u32 %v1374, 4294901760
    %1376 = vmatmul.f32.gmra.mxu0 %v1375
    %v1377 = vpop.f32.mrf.mxu0
    %v1378 = vadd.f32 %v730, %v1377
    %v1379 = vand.u32 %v693, 4294901760
    %v1380 = vsub.f32 %v693, %v1379
    %v1381 = vand.u32 %v1380, 4294901760
    %v1382 = vsub.f32 %v1380, %v1381
    %v1383 = vand.u32 %v1382, 4294901760
    %1384 = vmatmul.f32.gmra.mxu0 %v1383
    %v1385 = vpop.f32.mrf.mxu0
    %v1386 = vadd.f32 %v730, %v1385
    %1387 = vdwg.mxu0
    %v1388 = vand.u32 %v726, 4294901760
    %v1389 = vsub.f32 %v726, %v1388
    %v1390 = vand.u32 %v1389, 4294901760
    %v1391 = vsub.f32 %v1389, %v1390
    %v1392 = vand.u32 %v1391, 4294901760
    %1393 = vmatpush.msra.mxu0 %v1392
    %v1394 = vand.u32 %v724, 4294901760
    %v1395 = vsub.f32 %v724, %v1394
    %v1396 = vand.u32 %v1395, 4294901760
    %v1397 = vsub.f32 %v1395, %v1396
    %v1398 = vand.u32 %v1397, 4294901760
    %1399 = vmatpush.msra.mxu0 %v1398
    %v1400 = vand.u32 %v722, 4294901760
    %v1401 = vsub.f32 %v722, %v1400
    %v1402 = vand.u32 %v1401, 4294901760
    %v1403 = vsub.f32 %v1401, %v1402
    %v1404 = vand.u32 %v1403, 4294901760
    %1405 = vmatpush.msra.mxu0 %v1404
    %v1406 = vand.u32 %v720, 4294901760
    %v1407 = vsub.f32 %v720, %v1406
    %v1408 = vand.u32 %v1407, 4294901760
    %v1409 = vsub.f32 %v1407, %v1408
    %v1410 = vand.u32 %v1409, 4294901760
    %1411 = vmatpush.msra.mxu0 %v1410
    %v1412 = vand.u32 %v718, 4294901760
    %v1413 = vsub.f32 %v718, %v1412
    %v1414 = vand.u32 %v1413, 4294901760
    %v1415 = vsub.f32 %v1413, %v1414
    %v1416 = vand.u32 %v1415, 4294901760
    %1417 = vmatpush.msra.mxu0 %v1416
    %v1418 = vand.u32 %v716, 4294901760
    %v1419 = vsub.f32 %v716, %v1418
    %v1420 = vand.u32 %v1419, 4294901760
    %v1421 = vsub.f32 %v1419, %v1420
    %v1422 = vand.u32 %v1421, 4294901760
    %1423 = vmatpush.msra.mxu0 %v1422
    %v1424 = vand.u32 %v714, 4294901760
    %v1425 = vsub.f32 %v714, %v1424
    %v1426 = vand.u32 %v1425, 4294901760
    %v1427 = vsub.f32 %v1425, %v1426
    %v1428 = vand.u32 %v1427, 4294901760
    %1429 = vmatpush.msra.mxu0 %v1428
    %v1430 = vand.u32 %v712, 4294901760
    %v1431 = vsub.f32 %v712, %v1430
    %v1432 = vand.u32 %v1431, 4294901760
    %v1433 = vsub.f32 %v1431, %v1432
    %v1434 = vand.u32 %v1433, 4294901760
    %1435 = vmatpush.msra.mxu0 %v1434
    %v1436 = vand.u32 %v710, 4294901760
    %v1437 = vsub.f32 %v710, %v1436
    %v1438 = vand.u32 %v1437, 4294901760
    %v1439 = vsub.f32 %v1437, %v1438
    %v1440 = vand.u32 %v1439, 4294901760
    %1441 = vmatpush.msra.mxu0 %v1440
    %v1442 = vand.u32 %v708, 4294901760
    %v1443 = vsub.f32 %v708, %v1442
    %v1444 = vand.u32 %v1443, 4294901760
    %v1445 = vsub.f32 %v1443, %v1444
    %v1446 = vand.u32 %v1445, 4294901760
    %1447 = vmatpush.msra.mxu0 %v1446
    %v1448 = vand.u32 %v706, 4294901760
    %v1449 = vsub.f32 %v706, %v1448
    %v1450 = vand.u32 %v1449, 4294901760
    %v1451 = vsub.f32 %v1449, %v1450
    %v1452 = vand.u32 %v1451, 4294901760
    %1453 = vmatpush.msra.mxu0 %v1452
    %v1454 = vand.u32 %v704, 4294901760
    %v1455 = vsub.f32 %v704, %v1454
    %v1456 = vand.u32 %v1455, 4294901760
    %v1457 = vsub.f32 %v1455, %v1456
    %v1458 = vand.u32 %v1457, 4294901760
    %1459 = vmatpush.msra.mxu0 %v1458
    %v1460 = vand.u32 %v702, 4294901760
    %v1461 = vsub.f32 %v702, %v1460
    %v1462 = vand.u32 %v1461, 4294901760
    %v1463 = vsub.f32 %v1461, %v1462
    %v1464 = vand.u32 %v1463, 4294901760
    %1465 = vmatpush.msra.mxu0 %v1464
    %v1466 = vand.u32 %v700, 4294901760
    %v1467 = vsub.f32 %v700, %v1466
    %v1468 = vand.u32 %v1467, 4294901760
    %v1469 = vsub.f32 %v1467, %v1468
    %v1470 = vand.u32 %v1469, 4294901760
    %1471 = vmatpush.msra.mxu0 %v1470
    %v1472 = vand.u32 %v698, 4294901760
    %v1473 = vsub.f32 %v698, %v1472
    %v1474 = vand.u32 %v1473, 4294901760
    %v1475 = vsub.f32 %v1473, %v1474
    %v1476 = vand.u32 %v1475, 4294901760
    %1477 = vmatpush.msra.mxu0 %v1476
    %v1478 = vand.u32 %v696, 4294901760
    %v1479 = vsub.f32 %v696, %v1478
    %v1480 = vand.u32 %v1479, 4294901760
    %v1481 = vsub.f32 %v1479, %v1480
    %v1482 = vand.u32 %v1481, 4294901760
    %1483 = vmatpush.msra.mxu0 %v1482
    %v1484 = vand.u32 %v665, 4294901760
    %1485 = vmatmul.f32.gmra.mxu0 %v1484
    %v1486 = vpop.f32.mrf.mxu0
    %v1487 = vadd.f32 %v1330, %v1486
    %v1488 = vand.u32 %v669, 4294901760
    %1489 = vmatmul.f32.gmra.mxu0 %v1488
    %v1490 = vpop.f32.mrf.mxu0
    %v1491 = vadd.f32 %v1338, %v1490
    %v1492 = vand.u32 %v673, 4294901760
    %1493 = vmatmul.f32.gmra.mxu0 %v1492
    %v1494 = vpop.f32.mrf.mxu0
    %v1495 = vadd.f32 %v1346, %v1494
    %v1496 = vand.u32 %v677, 4294901760
    %1497 = vmatmul.f32.gmra.mxu0 %v1496
    %v1498 = vpop.f32.mrf.mxu0
    %v1499 = vadd.f32 %v1354, %v1498
    %v1500 = vand.u32 %v681, 4294901760
    %1501 = vmatmul.f32.gmra.mxu0 %v1500
    %v1502 = vpop.f32.mrf.mxu0
    %v1503 = vadd.f32 %v1362, %v1502
    %v1504 = vand.u32 %v685, 4294901760
    %1505 = vmatmul.f32.gmra.mxu0 %v1504
    %v1506 = vpop.f32.mrf.mxu0
    %v1507 = vadd.f32 %v1370, %v1506
    %v1508 = vand.u32 %v689, 4294901760
    %1509 = vmatmul.f32.gmra.mxu0 %v1508
    %v1510 = vpop.f32.mrf.mxu0
    %v1511 = vadd.f32 %v1378, %v1510
    %v1512 = vand.u32 %v693, 4294901760
    %1513 = vmatmul.f32.gmra.mxu0 %v1512
    %v1514 = vpop.f32.mrf.mxu0
    %v1515 = vadd.f32 %v1386, %v1514
    %1516 = vdwg.mxu0
    %v1517 = vand.u32 %v726, 4294901760
    %v1518 = vsub.f32 %v726, %v1517
    %1519 = vmatpush.msra.mxu0 %v1518
    %v1520 = vand.u32 %v724, 4294901760
    %v1521 = vsub.f32 %v724, %v1520
    %1522 = vmatpush.msra.mxu0 %v1521
    %v1523 = vand.u32 %v722, 4294901760
    %v1524 = vsub.f32 %v722, %v1523
    %1525 = vmatpush.msra.mxu0 %v1524
    %v1526 = vand.u32 %v720, 4294901760
    %v1527 = vsub.f32 %v720, %v1526
    %1528 = vmatpush.msra.mxu0 %v1527
    %v1529 = vand.u32 %v718, 4294901760
    %v1530 = vsub.f32 %v718, %v1529
    %1531 = vmatpush.msra.mxu0 %v1530
    %v1532 = vand.u32 %v716, 4294901760
    %v1533 = vsub.f32 %v716, %v1532
    %1534 = vmatpush.msra.mxu0 %v1533
    %v1535 = vand.u32 %v714, 4294901760
    %v1536 = vsub.f32 %v714, %v1535
    %1537 = vmatpush.msra.mxu0 %v1536
    %v1538 = vand.u32 %v712, 4294901760
    %v1539 = vsub.f32 %v712, %v1538
    %1540 = vmatpush.msra.mxu0 %v1539
    %v1541 = vand.u32 %v710, 4294901760
    %v1542 = vsub.f32 %v710, %v1541
    %1543 = vmatpush.msra.mxu0 %v1542
    %v1544 = vand.u32 %v708, 4294901760
    %v1545 = vsub.f32 %v708, %v1544
    %1546 = vmatpush.msra.mxu0 %v1545
    %v1547 = vand.u32 %v706, 4294901760
    %v1548 = vsub.f32 %v706, %v1547
    %1549 = vmatpush.msra.mxu0 %v1548
    %v1550 = vand.u32 %v704, 4294901760
    %v1551 = vsub.f32 %v704, %v1550
    %1552 = vmatpush.msra.mxu0 %v1551
    %v1553 = vand.u32 %v702, 4294901760
    %v1554 = vsub.f32 %v702, %v1553
    %1555 = vmatpush.msra.mxu0 %v1554
    %v1556 = vand.u32 %v700, 4294901760
    %v1557 = vsub.f32 %v700, %v1556
    %1558 = vmatpush.msra.mxu0 %v1557
    %v1559 = vand.u32 %v698, 4294901760
    %v1560 = vsub.f32 %v698, %v1559
    %1561 = vmatpush.msra.mxu0 %v1560
    %v1562 = vand.u32 %v696, 4294901760
    %v1563 = vsub.f32 %v696, %v1562
    %1564 = vmatpush.msra.mxu0 %v1563
    %v1565 = vand.u32 %v665, 4294901760
    %v1566 = vsub.f32 %v665, %v1565
    %1567 = vmatmul.f32.gmra.mxu0 %v1566
    %v1568 = vpop.f32.mrf.mxu0
    %v1569 = vadd.f32 %v1487, %v1568
    %v1570 = vand.u32 %v669, 4294901760
    %v1571 = vsub.f32 %v669, %v1570
    %1572 = vmatmul.f32.gmra.mxu0 %v1571
    %v1573 = vpop.f32.mrf.mxu0
    %v1574 = vadd.f32 %v1491, %v1573
    %v1575 = vand.u32 %v673, 4294901760
    %v1576 = vsub.f32 %v673, %v1575
    %1577 = vmatmul.f32.gmra.mxu0 %v1576
    %v1578 = vpop.f32.mrf.mxu0
    %v1579 = vadd.f32 %v1495, %v1578
    %v1580 = vand.u32 %v677, 4294901760
    %v1581 = vsub.f32 %v677, %v1580
    %1582 = vmatmul.f32.gmra.mxu0 %v1581
    %v1583 = vpop.f32.mrf.mxu0
    %v1584 = vadd.f32 %v1499, %v1583
    %v1585 = vand.u32 %v681, 4294901760
    %v1586 = vsub.f32 %v681, %v1585
    %1587 = vmatmul.f32.gmra.mxu0 %v1586
    %v1588 = vpop.f32.mrf.mxu0
    %v1589 = vadd.f32 %v1503, %v1588
    %v1590 = vand.u32 %v685, 4294901760
    %v1591 = vsub.f32 %v685, %v1590
    %1592 = vmatmul.f32.gmra.mxu0 %v1591
    %v1593 = vpop.f32.mrf.mxu0
    %v1594 = vadd.f32 %v1507, %v1593
    %v1595 = vand.u32 %v689, 4294901760
    %v1596 = vsub.f32 %v689, %v1595
    %1597 = vmatmul.f32.gmra.mxu0 %v1596
    %v1598 = vpop.f32.mrf.mxu0
    %v1599 = vadd.f32 %v1511, %v1598
    %v1600 = vand.u32 %v693, 4294901760
    %v1601 = vsub.f32 %v693, %v1600
    %1602 = vmatmul.f32.gmra.mxu0 %v1601
    %v1603 = vpop.f32.mrf.mxu0
    %v1604 = vadd.f32 %v1515, %v1603
    %1605 = vdwg.mxu0
    %v1606 = vand.u32 %v726, 4294901760
    %1607 = vmatpush.msra.mxu0 %v1606
    %v1608 = vand.u32 %v724, 4294901760
    %1609 = vmatpush.msra.mxu0 %v1608
    %v1610 = vand.u32 %v722, 4294901760
    %1611 = vmatpush.msra.mxu0 %v1610
    %v1612 = vand.u32 %v720, 4294901760
    %1613 = vmatpush.msra.mxu0 %v1612
    %v1614 = vand.u32 %v718, 4294901760
    %1615 = vmatpush.msra.mxu0 %v1614
    %v1616 = vand.u32 %v716, 4294901760
    %1617 = vmatpush.msra.mxu0 %v1616
    %v1618 = vand.u32 %v714, 4294901760
    %1619 = vmatpush.msra.mxu0 %v1618
    %v1620 = vand.u32 %v712, 4294901760
    %1621 = vmatpush.msra.mxu0 %v1620
    %v1622 = vand.u32 %v710, 4294901760
    %1623 = vmatpush.msra.mxu0 %v1622
    %v1624 = vand.u32 %v708, 4294901760
    %1625 = vmatpush.msra.mxu0 %v1624
    %v1626 = vand.u32 %v706, 4294901760
    %1627 = vmatpush.msra.mxu0 %v1626
    %v1628 = vand.u32 %v704, 4294901760
    %1629 = vmatpush.msra.mxu0 %v1628
    %v1630 = vand.u32 %v702, 4294901760
    %1631 = vmatpush.msra.mxu0 %v1630
    %v1632 = vand.u32 %v700, 4294901760
    %1633 = vmatpush.msra.mxu0 %v1632
    %v1634 = vand.u32 %v698, 4294901760
    %1635 = vmatpush.msra.mxu0 %v1634
    %v1636 = vand.u32 %v696, 4294901760
    %1637 = vmatpush.msra.mxu0 %v1636
    %v1638 = vand.u32 %v665, 4294901760
    %v1639 = vsub.f32 %v665, %v1638
    %v1640 = vand.u32 %v1639, 4294901760
    %1641 = vmatmul.f32.gmra.mxu0 %v1640
    %v1642 = vpop.f32.mrf.mxu0
    %v1643 = vadd.f32 %v1569, %v1642
    %v1644 = vand.u32 %v669, 4294901760
    %v1645 = vsub.f32 %v669, %v1644
    %v1646 = vand.u32 %v1645, 4294901760
    %1647 = vmatmul.f32.gmra.mxu0 %v1646
    %v1648 = vpop.f32.mrf.mxu0
    %v1649 = vadd.f32 %v1574, %v1648
    %v1650 = vand.u32 %v673, 4294901760
    %v1651 = vsub.f32 %v673, %v1650
    %v1652 = vand.u32 %v1651, 4294901760
    %1653 = vmatmul.f32.gmra.mxu0 %v1652
    %v1654 = vpop.f32.mrf.mxu0
    %v1655 = vadd.f32 %v1579, %v1654
    %v1656 = vand.u32 %v677, 4294901760
    %v1657 = vsub.f32 %v677, %v1656
    %v1658 = vand.u32 %v1657, 4294901760
    %1659 = vmatmul.f32.gmra.mxu0 %v1658
    %v1660 = vpop.f32.mrf.mxu0
    %v1661 = vadd.f32 %v1584, %v1660
    %v1662 = vand.u32 %v681, 4294901760
    %v1663 = vsub.f32 %v681, %v1662
    %v1664 = vand.u32 %v1663, 4294901760
    %1665 = vmatmul.f32.gmra.mxu0 %v1664
    %v1666 = vpop.f32.mrf.mxu0
    %v1667 = vadd.f32 %v1589, %v1666
    %v1668 = vand.u32 %v685, 4294901760
    %v1669 = vsub.f32 %v685, %v1668
    %v1670 = vand.u32 %v1669, 4294901760
    %1671 = vmatmul.f32.gmra.mxu0 %v1670
    %v1672 = vpop.f32.mrf.mxu0
    %v1673 = vadd.f32 %v1594, %v1672
    %v1674 = vand.u32 %v689, 4294901760
    %v1675 = vsub.f32 %v689, %v1674
    %v1676 = vand.u32 %v1675, 4294901760
    %1677 = vmatmul.f32.gmra.mxu0 %v1676
    %v1678 = vpop.f32.mrf.mxu0
    %v1679 = vadd.f32 %v1599, %v1678
    %v1680 = vand.u32 %v693, 4294901760
    %v1681 = vsub.f32 %v693, %v1680
    %v1682 = vand.u32 %v1681, 4294901760
    %1683 = vmatmul.f32.gmra.mxu0 %v1682
    %v1684 = vpop.f32.mrf.mxu0
    %v1685 = vadd.f32 %v1604, %v1684
    %1686 = vdwg.mxu0
    %v1687 = vand.u32 %v726, 4294901760
    %v1688 = vsub.f32 %v726, %v1687
    %v1689 = vand.u32 %v1688, 4294901760
    %1690 = vmatpush.msra.mxu0 %v1689
    %v1691 = vand.u32 %v724, 4294901760
    %v1692 = vsub.f32 %v724, %v1691
    %v1693 = vand.u32 %v1692, 4294901760
    %1694 = vmatpush.msra.mxu0 %v1693
    %v1695 = vand.u32 %v722, 4294901760
    %v1696 = vsub.f32 %v722, %v1695
    %v1697 = vand.u32 %v1696, 4294901760
    %1698 = vmatpush.msra.mxu0 %v1697
    %v1699 = vand.u32 %v720, 4294901760
    %v1700 = vsub.f32 %v720, %v1699
    %v1701 = vand.u32 %v1700, 4294901760
    %1702 = vmatpush.msra.mxu0 %v1701
    %v1703 = vand.u32 %v718, 4294901760
    %v1704 = vsub.f32 %v718, %v1703
    %v1705 = vand.u32 %v1704, 4294901760
    %1706 = vmatpush.msra.mxu0 %v1705
    %v1707 = vand.u32 %v716, 4294901760
    %v1708 = vsub.f32 %v716, %v1707
    %v1709 = vand.u32 %v1708, 4294901760
    %1710 = vmatpush.msra.mxu0 %v1709
    %v1711 = vand.u32 %v714, 4294901760
    %v1712 = vsub.f32 %v714, %v1711
    %v1713 = vand.u32 %v1712, 4294901760
    %1714 = vmatpush.msra.mxu0 %v1713
    %v1715 = vand.u32 %v712, 4294901760
    %v1716 = vsub.f32 %v712, %v1715
    %v1717 = vand.u32 %v1716, 4294901760
    %1718 = vmatpush.msra.mxu0 %v1717
    %v1719 = vand.u32 %v710, 4294901760
    %v1720 = vsub.f32 %v710, %v1719
    %v1721 = vand.u32 %v1720, 4294901760
    %1722 = vmatpush.msra.mxu0 %v1721
    %v1723 = vand.u32 %v708, 4294901760
    %v1724 = vsub.f32 %v708, %v1723
    %v1725 = vand.u32 %v1724, 4294901760
    %1726 = vmatpush.msra.mxu0 %v1725
    %v1727 = vand.u32 %v706, 4294901760
    %v1728 = vsub.f32 %v706, %v1727
    %v1729 = vand.u32 %v1728, 4294901760
    %1730 = vmatpush.msra.mxu0 %v1729
    %v1731 = vand.u32 %v704, 4294901760
    %v1732 = vsub.f32 %v704, %v1731
    %v1733 = vand.u32 %v1732, 4294901760
    %1734 = vmatpush.msra.mxu0 %v1733
    %v1735 = vand.u32 %v702, 4294901760
    %v1736 = vsub.f32 %v702, %v1735
    %v1737 = vand.u32 %v1736, 4294901760
    %1738 = vmatpush.msra.mxu0 %v1737
    %v1739 = vand.u32 %v700, 4294901760
    %v1740 = vsub.f32 %v700, %v1739
    %v1741 = vand.u32 %v1740, 4294901760
    %1742 = vmatpush.msra.mxu0 %v1741
    %v1743 = vand.u32 %v698, 4294901760
    %v1744 = vsub.f32 %v698, %v1743
    %v1745 = vand.u32 %v1744, 4294901760
    %1746 = vmatpush.msra.mxu0 %v1745
    %v1747 = vand.u32 %v696, 4294901760
    %v1748 = vsub.f32 %v696, %v1747
    %v1749 = vand.u32 %v1748, 4294901760
    %1750 = vmatpush.msra.mxu0 %v1749
    %v1751 = vand.u32 %v665, 4294901760
    %1752 = vmatmul.f32.gmra.mxu0 %v1751
    %v1753 = vpop.f32.mrf.mxu0
    %v1754 = vadd.f32 %v1643, %v1753
    %v1755 = vand.u32 %v669, 4294901760
    %1756 = vmatmul.f32.gmra.mxu0 %v1755
    %v1757 = vpop.f32.mrf.mxu0
    %v1758 = vadd.f32 %v1649, %v1757
    %v1759 = vand.u32 %v673, 4294901760
    %1760 = vmatmul.f32.gmra.mxu0 %v1759
    %v1761 = vpop.f32.mrf.mxu0
    %v1762 = vadd.f32 %v1655, %v1761
    %v1763 = vand.u32 %v677, 4294901760
    %1764 = vmatmul.f32.gmra.mxu0 %v1763
    %v1765 = vpop.f32.mrf.mxu0
    %v1766 = vadd.f32 %v1661, %v1765
    %v1767 = vand.u32 %v681, 4294901760
    %1768 = vmatmul.f32.gmra.mxu0 %v1767
    %v1769 = vpop.f32.mrf.mxu0
    %v1770 = vadd.f32 %v1667, %v1769
    %v1771 = vand.u32 %v685, 4294901760
    %1772 = vmatmul.f32.gmra.mxu0 %v1771
    %v1773 = vpop.f32.mrf.mxu0
    %v1774 = vadd.f32 %v1673, %v1773
    %v1775 = vand.u32 %v689, 4294901760
    %1776 = vmatmul.f32.gmra.mxu0 %v1775
    %v1777 = vpop.f32.mrf.mxu0
    %v1778 = vadd.f32 %v1679, %v1777
    %v1779 = vand.u32 %v693, 4294901760
    %1780 = vmatmul.f32.gmra.mxu0 %v1779
    %v1781 = vpop.f32.mrf.mxu0
    %v1782 = vadd.f32 %v1685, %v1781
    %1783 = vdwg.mxu0
    %v1784 = vand.u32 %v726, 4294901760
    %1785 = vmatpush.msra.mxu0 %v1784
    %v1786 = vand.u32 %v724, 4294901760
    %1787 = vmatpush.msra.mxu0 %v1786
    %v1788 = vand.u32 %v722, 4294901760
    %1789 = vmatpush.msra.mxu0 %v1788
    %v1790 = vand.u32 %v720, 4294901760
    %1791 = vmatpush.msra.mxu0 %v1790
    %v1792 = vand.u32 %v718, 4294901760
    %1793 = vmatpush.msra.mxu0 %v1792
    %v1794 = vand.u32 %v716, 4294901760
    %1795 = vmatpush.msra.mxu0 %v1794
    %v1796 = vand.u32 %v714, 4294901760
    %1797 = vmatpush.msra.mxu0 %v1796
    %v1798 = vand.u32 %v712, 4294901760
    %1799 = vmatpush.msra.mxu0 %v1798
    %v1800 = vand.u32 %v710, 4294901760
    %1801 = vmatpush.msra.mxu0 %v1800
    %v1802 = vand.u32 %v708, 4294901760
    %1803 = vmatpush.msra.mxu0 %v1802
    %v1804 = vand.u32 %v706, 4294901760
    %1805 = vmatpush.msra.mxu0 %v1804
    %v1806 = vand.u32 %v704, 4294901760
    %1807 = vmatpush.msra.mxu0 %v1806
    %v1808 = vand.u32 %v702, 4294901760
    %1809 = vmatpush.msra.mxu0 %v1808
    %v1810 = vand.u32 %v700, 4294901760
    %1811 = vmatpush.msra.mxu0 %v1810
    %v1812 = vand.u32 %v698, 4294901760
    %1813 = vmatpush.msra.mxu0 %v1812
    %v1814 = vand.u32 %v696, 4294901760
    %1815 = vmatpush.msra.mxu0 %v1814
    %v1816 = vand.u32 %v665, 4294901760
    %1817 = vmatmul.f32.gmra.mxu0 %v1816
    %v1818 = vpop.f32.mrf.mxu0
    %v1819 = vadd.f32 %v1754, %v1818
    %v1820 = vand.u32 %v669, 4294901760
    %1821 = vmatmul.f32.gmra.mxu0 %v1820
    %v1822 = vpop.f32.mrf.mxu0
    %v1823 = vadd.f32 %v1758, %v1822
    %v1824 = vand.u32 %v673, 4294901760
    %1825 = vmatmul.f32.gmra.mxu0 %v1824
    %v1826 = vpop.f32.mrf.mxu0
    %v1827 = vadd.f32 %v1762, %v1826
    %v1828 = vand.u32 %v677, 4294901760
    %1829 = vmatmul.f32.gmra.mxu0 %v1828
    %v1830 = vpop.f32.mrf.mxu0
    %v1831 = vadd.f32 %v1766, %v1830
    %v1832 = vand.u32 %v681, 4294901760
    %1833 = vmatmul.f32.gmra.mxu0 %v1832
    %v1834 = vpop.f32.mrf.mxu0
    %v1835 = vadd.f32 %v1770, %v1834
    %v1836 = vand.u32 %v685, 4294901760
    %1837 = vmatmul.f32.gmra.mxu0 %v1836
    %v1838 = vpop.f32.mrf.mxu0
    %v1839 = vadd.f32 %v1774, %v1838
    %v1840 = vand.u32 %v689, 4294901760
    %1841 = vmatmul.f32.gmra.mxu0 %v1840
    %v1842 = vpop.f32.mrf.mxu0
    %v1843 = vadd.f32 %v1778, %v1842
    %v1844 = vand.u32 %v693, 4294901760
    %1845 = vmatmul.f32.gmra.mxu0 %v1844
    %v1846 = vpop.f32.mrf.mxu0
    %v1847 = vadd.f32 %v1782, %v1846
    %1848 = vdwg.mxu0
    %1849 = vst [vmem:[#allocation2] sm:$0xff] %v1261
    %1850 = vst [vmem:[#allocation2 + $0x8] sm:$0xff] %v1819
    %1851 = vst [vmem:[#allocation2 + $0x10] sm:$0xff] %v1265
    %1852 = vst [vmem:[#allocation2 + $0x18] sm:$0xff] %v1823
    %1853 = vst [vmem:[#allocation2 + $0x20] sm:$0xff] %v1269
    %1854 = vst [vmem:[#allocation2 + $0x28] sm:$0xff] %v1827
    %1855 = vst [vmem:[#allocation2 + $0x30] sm:$0xff] %v1273
    %1856 = vst [vmem:[#allocation2 + $0x38] sm:$0xff] %v1831
    %1857 = vst [vmem:[#allocation2 + $0x40] sm:$0xff] %v1277
    %1858 = vst [vmem:[#allocation2 + $0x48] sm:$0xff] %v1835
    %1859 = vst [vmem:[#allocation2 + $0x50] sm:$0xff] %v1281
    %1860 = vst [vmem:[#allocation2 + $0x58] sm:$0xff] %v1839
    %1861 = vst [vmem:[#allocation2 + $0x60] sm:$0xff] %v1285
    %1862 = vst [vmem:[#allocation2 + $0x68] sm:$0xff] %v1843
    %1863 = vst [vmem:[#allocation2 + $0x70] sm:$0xff] %v1289
    %1864 = vst [vmem:[#allocation2 + $0x78] sm:$0xff] %v1847
    %v1865 = vld [vmem:[%s3] sm:$0xff]
    %v1866 = vld [vmem:[%s3 + $0x8] sm:$0xff]
    %v1867 = vld [vmem:[%s3 + $0x10] sm:$0xff]
    %v1868 = vld [vmem:[%s3 + $0x18] sm:$0xff]
    %v1869 = vld [vmem:[%s4] sm:$0xff]
    %v1870 = vld [vmem:[%s4 + $0x8] sm:$0xff]
    %v1871 = vld [vmem:[%s4 + $0x10] sm:$0xff]
    %v1872 = vld [vmem:[%s4 + $0x18] sm:$0xff]
    %s1873 = smul.u32 0, 2
    %s1874 = smul.addr %s1873, 8
    %s1875 = scalar_lea.vmem [#allocation2], %s1874
    %v1876 = vld [vmem:[%s1875] sm:$0xff]
    %vm1877 = vcmask 261120
    %v1879 = vsel %vm1877, 0.0, 0
    %1881 = vmatpush.msra.mxu0 0.0
    %1882 = vmatpush.msra.mxu0 0.0
    %1883 = vmatpush.msra.mxu0 0.0
    %1884 = vmatpush.msra.mxu0 0.0
    %1885 = vmatpush.msra.mxu0 0.0
    %1886 = vmatpush.msra.mxu0 0.0
    %1887 = vmatpush.msra.mxu0 0.0
    %1888 = vmatpush.msra.mxu0 0.0
    %1889 = vmatpush.msra.mxu0 0.0
    %1890 = vmatpush.msra.mxu0 0.0
    %1891 = vmatpush.msra.mxu0 0.0
    %1892 = vmatpush.msra.mxu0 0.0
    %v1893 = vand.u32 %v1868, 4294901760
    %1894 = vmatpush.msra.mxu0 %v1893
    %v1895 = vand.u32 %v1867, 4294901760
    %1896 = vmatpush.msra.mxu0 %v1895
    %v1897 = vand.u32 %v1866, 4294901760
    %1898 = vmatpush.msra.mxu0 %v1897
    %v1899 = vand.u32 %v1865, 4294901760
    %1900 = vmatpush.msra.mxu0 %v1899
    %v1901 = vand.u32 %v1879, 4294901760
    %v1902 = vsub.f32 %v1879, %v1901
    %v1903 = vand.u32 %v1902, 4294901760
    %v1904 = vsub.f32 %v1902, %v1903
    %v1905 = vand.u32 %v1904, 4294901760
    %1906 = vmatmul.f32.gmra.mxu0 %v1905
    %v1907 = vpop.f32.mrf.mxu0
    %v1908 = vadd.f32 %v1876, %v1907
    %1909 = vdwg.mxu0
    %1910 = vmatpush.msra.mxu0 0.0
    %1911 = vmatpush.msra.mxu0 0.0
    %1912 = vmatpush.msra.mxu0 0.0
    %1913 = vmatpush.msra.mxu0 0.0
    %1914 = vmatpush.msra.mxu0 0.0
    %1915 = vmatpush.msra.mxu0 0.0
    %1916 = vmatpush.msra.mxu0 0.0
    %1917 = vmatpush.msra.mxu0 0.0
    %1918 = vmatpush.msra.mxu0 0.0
    %1919 = vmatpush.msra.mxu0 0.0
    %1920 = vmatpush.msra.mxu0 0.0
    %1921 = vmatpush.msra.mxu0 0.0
    %v1922 = vand.u32 %v1868, 4294901760
    %v1923 = vsub.f32 %v1868, %v1922
    %v1924 = vand.u32 %v1923, 4294901760
    %v1925 = vsub.f32 %v1923, %v1924
    %v1926 = vand.u32 %v1925, 4294901760
    %1927 = vmatpush.msra.mxu0 %v1926
    %v1928 = vand.u32 %v1867, 4294901760
    %v1929 = vsub.f32 %v1867, %v1928
    %v1930 = vand.u32 %v1929, 4294901760
    %v1931 = vsub.f32 %v1929, %v1930
    %v1932 = vand.u32 %v1931, 4294901760
    %1933 = vmatpush.msra.mxu0 %v1932
    %v1934 = vand.u32 %v1866, 4294901760
    %v1935 = vsub.f32 %v1866, %v1934
    %v1936 = vand.u32 %v1935, 4294901760
    %v1937 = vsub.f32 %v1935, %v1936
    %v1938 = vand.u32 %v1937, 4294901760
    %1939 = vmatpush.msra.mxu0 %v1938
    %v1940 = vand.u32 %v1865, 4294901760
    %v1941 = vsub.f32 %v1865, %v1940
    %v1942 = vand.u32 %v1941, 4294901760
    %v1943 = vsub.f32 %v1941, %v1942
    %v1944 = vand.u32 %v1943, 4294901760
    %1945 = vmatpush.msra.mxu0 %v1944
    %v1946 = vand.u32 %v1879, 4294901760
    %1947 = vmatmul.f32.gmra.mxu0 %v1946
    %v1948 = vpop.f32.mrf.mxu0
    %v1949 = vadd.f32 %v1908, %v1948
    %1950 = vdwg.mxu0
    %1951 = vmatpush.msra.mxu0 0.0
    %1952 = vmatpush.msra.mxu0 0.0
    %1953 = vmatpush.msra.mxu0 0.0
    %1954 = vmatpush.msra.mxu0 0.0
    %1955 = vmatpush.msra.mxu0 0.0
    %1956 = vmatpush.msra.mxu0 0.0
    %1957 = vmatpush.msra.mxu0 0.0
    %1958 = vmatpush.msra.mxu0 0.0
    %1959 = vmatpush.msra.mxu0 0.0
    %1960 = vmatpush.msra.mxu0 0.0
    %1961 = vmatpush.msra.mxu0 0.0
    %1962 = vmatpush.msra.mxu0 0.0
    %v1963 = vand.u32 %v1868, 4294901760
    %v1964 = vsub.f32 %v1868, %v1963
    %1965 = vmatpush.msra.mxu0 %v1964
    %v1966 = vand.u32 %v1867, 4294901760
    %v1967 = vsub.f32 %v1867, %v1966
    %1968 = vmatpush.msra.mxu0 %v1967
    %v1969 = vand.u32 %v1866, 4294901760
    %v1970 = vsub.f32 %v1866, %v1969
    %1971 = vmatpush.msra.mxu0 %v1970
    %v1972 = vand.u32 %v1865, 4294901760
    %v1973 = vsub.f32 %v1865, %v1972
    %1974 = vmatpush.msra.mxu0 %v1973
    %v1975 = vand.u32 %v1879, 4294901760
    %v1976 = vsub.f32 %v1879, %v1975
    %1977 = vmatmul.f32.gmra.mxu0 %v1976
    %v1978 = vpop.f32.mrf.mxu0
    %v1979 = vadd.f32 %v1949, %v1978
    %1980 = vdwg.mxu0
    %1981 = vmatpush.msra.mxu0 0.0
    %1982 = vmatpush.msra.mxu0 0.0
    %1983 = vmatpush.msra.mxu0 0.0
    %1984 = vmatpush.msra.mxu0 0.0
    %1985 = vmatpush.msra.mxu0 0.0
    %1986 = vmatpush.msra.mxu0 0.0
    %1987 = vmatpush.msra.mxu0 0.0
    %1988 = vmatpush.msra.mxu0 0.0
    %1989 = vmatpush.msra.mxu0 0.0
    %1990 = vmatpush.msra.mxu0 0.0
    %1991 = vmatpush.msra.mxu0 0.0
    %1992 = vmatpush.msra.mxu0 0.0
    %v1993 = vand.u32 %v1868, 4294901760
    %1994 = vmatpush.msra.mxu0 %v1993
    %v1995 = vand.u32 %v1867, 4294901760
    %1996 = vmatpush.msra.mxu0 %v1995
    %v1997 = vand.u32 %v1866, 4294901760
    %1998 = vmatpush.msra.mxu0 %v1997
    %v1999 = vand.u32 %v1865, 4294901760
    %2000 = vmatpush.msra.mxu0 %v1999
    %v2001 = vand.u32 %v1879, 4294901760
    %v2002 = vsub.f32 %v1879, %v2001
    %v2003 = vand.u32 %v2002, 4294901760
    %2004 = vmatmul.f32.gmra.mxu0 %v2003
    %v2005 = vpop.f32.mrf.mxu0
    %v2006 = vadd.f32 %v1979, %v2005
    %2007 = vdwg.mxu0
    %2008 = vmatpush.msra.mxu0 0.0
    %2009 = vmatpush.msra.mxu0 0.0
    %2010 = vmatpush.msra.mxu0 0.0
    %2011 = vmatpush.msra.mxu0 0.0
    %2012 = vmatpush.msra.mxu0 0.0
    %2013 = vmatpush.msra.mxu0 0.0
    %2014 = vmatpush.msra.mxu0 0.0
    %2015 = vmatpush.msra.mxu0 0.0
    %2016 = vmatpush.msra.mxu0 0.0
    %2017 = vmatpush.msra.mxu0 0.0
    %2018 = vmatpush.msra.mxu0 0.0
    %2019 = vmatpush.msra.mxu0 0.0
    %v2020 = vand.u32 %v1868, 4294901760
    %v2021 = vsub.f32 %v1868, %v2020
    %v2022 = vand.u32 %v2021, 4294901760
    %2023 = vmatpush.msra.mxu0 %v2022
    %v2024 = vand.u32 %v1867, 4294901760
    %v2025 = vsub.f32 %v1867, %v2024
    %v2026 = vand.u32 %v2025, 4294901760
    %2027 = vmatpush.msra.mxu0 %v2026
    %v2028 = vand.u32 %v1866, 4294901760
    %v2029 = vsub.f32 %v1866, %v2028
    %v2030 = vand.u32 %v2029, 4294901760
    %2031 = vmatpush.msra.mxu0 %v2030
    %v2032 = vand.u32 %v1865, 4294901760
    %v2033 = vsub.f32 %v1865, %v2032
    %v2034 = vand.u32 %v2033, 4294901760
    %2035 = vmatpush.msra.mxu0 %v2034
    %v2036 = vand.u32 %v1879, 4294901760
    %2037 = vmatmul.f32.gmra.mxu0 %v2036
    %v2038 = vpop.f32.mrf.mxu0
    %v2039 = vadd.f32 %v2006, %v2038
    %2040 = vdwg.mxu0
    %2041 = vmatpush.msra.mxu0 0.0
    %2042 = vmatpush.msra.mxu0 0.0
    %2043 = vmatpush.msra.mxu0 0.0
    %2044 = vmatpush.msra.mxu0 0.0
    %2045 = vmatpush.msra.mxu0 0.0
    %2046 = vmatpush.msra.mxu0 0.0
    %2047 = vmatpush.msra.mxu0 0.0
    %2048 = vmatpush.msra.mxu0 0.0
    %2049 = vmatpush.msra.mxu0 0.0
    %2050 = vmatpush.msra.mxu0 0.0
    %2051 = vmatpush.msra.mxu0 0.0
    %2052 = vmatpush.msra.mxu0 0.0
    %v2053 = vand.u32 %v1868, 4294901760
    %2054 = vmatpush.msra.mxu0 %v2053
    %v2055 = vand.u32 %v1867, 4294901760
    %2056 = vmatpush.msra.mxu0 %v2055
    %v2057 = vand.u32 %v1866, 4294901760
    %2058 = vmatpush.msra.mxu0 %v2057
    %v2059 = vand.u32 %v1865, 4294901760
    %2060 = vmatpush.msra.mxu0 %v2059
    %v2061 = vand.u32 %v1879, 4294901760
    %2062 = vmatmul.f32.gmra.mxu0 %v2061
    %v2063 = vpop.f32.mrf.mxu0
    %v2064 = vadd.f32 %v2039, %v2063
    %2065 = vdwg.mxu0
    %s2066 = smul.u32 7, 2
    %s2067 = smul.addr %s2066, 8
    %s2068 = scalar_lea.vmem [#allocation2], %s2067
    %v2069 = vld [vmem:[%s2068 + $0x8] sm:$0xff]
    %2070 = vmatpush.msra.mxu0 0.0
    %2071 = vmatpush.msra.mxu0 0.0
    %2072 = vmatpush.msra.mxu0 0.0
    %2073 = vmatpush.msra.mxu0 0.0
    %2074 = vmatpush.msra.mxu0 0.0
    %2075 = vmatpush.msra.mxu0 0.0
    %2076 = vmatpush.msra.mxu0 0.0
    %2077 = vmatpush.msra.mxu0 0.0
    %2078 = vmatpush.msra.mxu0 0.0
    %2079 = vmatpush.msra.mxu0 0.0
    %2080 = vmatpush.msra.mxu0 0.0
    %2081 = vmatpush.msra.mxu0 0.0
    %v2082 = vand.u32 %v1872, 4294901760
    %2083 = vmatpush.msra.mxu0 %v2082
    %v2084 = vand.u32 %v1871, 4294901760
    %2085 = vmatpush.msra.mxu0 %v2084
    %v2086 = vand.u32 %v1870, 4294901760
    %2087 = vmatpush.msra.mxu0 %v2086
    %v2088 = vand.u32 %v1869, 4294901760
    %2089 = vmatpush.msra.mxu0 %v2088
    %v2090 = vand.u32 %v1879, 4294901760
    %v2091 = vsub.f32 %v1879, %v2090
    %v2092 = vand.u32 %v2091, 4294901760
    %v2093 = vsub.f32 %v2091, %v2092
    %v2094 = vand.u32 %v2093, 4294901760
    %2095 = vmatmul.f32.gmra.mxu0 %v2094
    %v2096 = vpop.f32.mrf.mxu0
    %v2097 = vadd.f32 %v2069, %v2096
    %2098 = vdwg.mxu0
    %2099 = vmatpush.msra.mxu0 0.0
    %2100 = vmatpush.msra.mxu0 0.0
    %2101 = vmatpush.msra.mxu0 0.0
    %2102 = vmatpush.msra.mxu0 0.0
    %2103 = vmatpush.msra.mxu0 0.0
    %2104 = vmatpush.msra.mxu0 0.0
    %2105 = vmatpush.msra.mxu0 0.0
    %2106 = vmatpush.msra.mxu0 0.0
    %2107 = vmatpush.msra.mxu0 0.0
    %2108 = vmatpush.msra.mxu0 0.0
    %2109 = vmatpush.msra.mxu0 0.0
    %2110 = vmatpush.msra.mxu0 0.0
    %v2111 = vand.u32 %v1872, 4294901760
    %v2112 = vsub.f32 %v1872, %v2111
    %v2113 = vand.u32 %v2112, 4294901760
    %v2114 = vsub.f32 %v2112, %v2113
    %v2115 = vand.u32 %v2114, 4294901760
    %2116 = vmatpush.msra.mxu0 %v2115
    %v2117 = vand.u32 %v1871, 4294901760
    %v2118 = vsub.f32 %v1871, %v2117
    %v2119 = vand.u32 %v2118, 4294901760
    %v2120 = vsub.f32 %v2118, %v2119
    %v2121 = vand.u32 %v2120, 4294901760
    %2122 = vmatpush.msra.mxu0 %v2121
    %v2123 = vand.u32 %v1870, 4294901760
    %v2124 = vsub.f32 %v1870, %v2123
    %v2125 = vand.u32 %v2124, 4294901760
    %v2126 = vsub.f32 %v2124, %v2125
    %v2127 = vand.u32 %v2126, 4294901760
    %2128 = vmatpush.msra.mxu0 %v2127
    %v2129 = vand.u32 %v1869, 4294901760
    %v2130 = vsub.f32 %v1869, %v2129
    %v2131 = vand.u32 %v2130, 4294901760
    %v2132 = vsub.f32 %v2130, %v2131
    %v2133 = vand.u32 %v2132, 4294901760
    %2134 = vmatpush.msra.mxu0 %v2133
    %v2135 = vand.u32 %v1879, 4294901760
    %2136 = vmatmul.f32.gmra.mxu0 %v2135
    %v2137 = vpop.f32.mrf.mxu0
    %v2138 = vadd.f32 %v2097, %v2137
    %2139 = vdwg.mxu0
    %2140 = vmatpush.msra.mxu0 0.0
    %2141 = vmatpush.msra.mxu0 0.0
    %2142 = vmatpush.msra.mxu0 0.0
    %2143 = vmatpush.msra.mxu0 0.0
    %2144 = vmatpush.msra.mxu0 0.0
    %2145 = vmatpush.msra.mxu0 0.0
    %2146 = vmatpush.msra.mxu0 0.0
    %2147 = vmatpush.msra.mxu0 0.0
    %2148 = vmatpush.msra.mxu0 0.0
    %2149 = vmatpush.msra.mxu0 0.0
    %2150 = vmatpush.msra.mxu0 0.0
    %2151 = vmatpush.msra.mxu0 0.0
    %v2152 = vand.u32 %v1872, 4294901760
    %v2153 = vsub.f32 %v1872, %v2152
    %2154 = vmatpush.msra.mxu0 %v2153
    %v2155 = vand.u32 %v1871, 4294901760
    %v2156 = vsub.f32 %v1871, %v2155
    %2157 = vmatpush.msra.mxu0 %v2156
    %v2158 = vand.u32 %v1870, 4294901760
    %v2159 = vsub.f32 %v1870, %v2158
    %2160 = vmatpush.msra.mxu0 %v2159
    %v2161 = vand.u32 %v1869, 4294901760
    %v2162 = vsub.f32 %v1869, %v2161
    %2163 = vmatpush.msra.mxu0 %v2162
    %v2164 = vand.u32 %v1879, 4294901760
    %v2165 = vsub.f32 %v1879, %v2164
    %2166 = vmatmul.f32.gmra.mxu0 %v2165
    %v2167 = vpop.f32.mrf.mxu0
    %v2168 = vadd.f32 %v2138, %v2167
    %2169 = vdwg.mxu0
    %2170 = vmatpush.msra.mxu0 0.0
    %2171 = vmatpush.msra.mxu0 0.0
    %2172 = vmatpush.msra.mxu0 0.0
    %2173 = vmatpush.msra.mxu0 0.0
    %2174 = vmatpush.msra.mxu0 0.0
    %2175 = vmatpush.msra.mxu0 0.0
    %2176 = vmatpush.msra.mxu0 0.0
    %2177 = vmatpush.msra.mxu0 0.0
    %2178 = vmatpush.msra.mxu0 0.0
    %2179 = vmatpush.msra.mxu0 0.0
    %2180 = vmatpush.msra.mxu0 0.0
    %2181 = vmatpush.msra.mxu0 0.0
    %v2182 = vand.u32 %v1872, 4294901760
    %2183 = vmatpush.msra.mxu0 %v2182
    %v2184 = vand.u32 %v1871, 4294901760
    %2185 = vmatpush.msra.mxu0 %v2184
    %v2186 = vand.u32 %v1870, 4294901760
    %2187 = vmatpush.msra.mxu0 %v2186
    %v2188 = vand.u32 %v1869, 4294901760
    %2189 = vmatpush.msra.mxu0 %v2188
    %v2190 = vand.u32 %v1879, 4294901760
    %v2191 = vsub.f32 %v1879, %v2190
    %v2192 = vand.u32 %v2191, 4294901760
    %2193 = vmatmul.f32.gmra.mxu0 %v2192
    %v2194 = vpop.f32.mrf.mxu0
    %v2195 = vadd.f32 %v2168, %v2194
    %2196 = vdwg.mxu0
    %2197 = vmatpush.msra.mxu0 0.0
    %2198 = vmatpush.msra.mxu0 0.0
    %2199 = vmatpush.msra.mxu0 0.0
    %2200 = vmatpush.msra.mxu0 0.0
    %2201 = vmatpush.msra.mxu0 0.0
    %2202 = vmatpush.msra.mxu0 0.0
    %2203 = vmatpush.msra.mxu0 0.0
    %2204 = vmatpush.msra.mxu0 0.0
    %2205 = vmatpush.msra.mxu0 0.0
    %2206 = vmatpush.msra.mxu0 0.0
    %2207 = vmatpush.msra.mxu0 0.0
    %2208 = vmatpush.msra.mxu0 0.0
    %v2209 = vand.u32 %v1872, 4294901760
    %v2210 = vsub.f32 %v1872, %v2209
    %v2211 = vand.u32 %v2210, 4294901760
    %2212 = vmatpush.msra.mxu0 %v2211
    %v2213 = vand.u32 %v1871, 4294901760
    %v2214 = vsub.f32 %v1871, %v2213
    %v2215 = vand.u32 %v2214, 4294901760
    %2216 = vmatpush.msra.mxu0 %v2215
    %v2217 = vand.u32 %v1870, 4294901760
    %v2218 = vsub.f32 %v1870, %v2217
    %v2219 = vand.u32 %v2218, 4294901760
    %2220 = vmatpush.msra.mxu0 %v2219
    %v2221 = vand.u32 %v1869, 4294901760
    %v2222 = vsub.f32 %v1869, %v2221
    %v2223 = vand.u32 %v2222, 4294901760
    %2224 = vmatpush.msra.mxu0 %v2223
    %v2225 = vand.u32 %v1879, 4294901760
    %2226 = vmatmul.f32.gmra.mxu0 %v2225
    %v2227 = vpop.f32.mrf.mxu0
    %v2228 = vadd.f32 %v2195, %v2227
    %2229 = vdwg.mxu0
    %2230 = vmatpush.msra.mxu0 0.0
    %2231 = vmatpush.msra.mxu0 0.0
    %2232 = vmatpush.msra.mxu0 0.0
    %2233 = vmatpush.msra.mxu0 0.0
    %2234 = vmatpush.msra.mxu0 0.0
    %2235 = vmatpush.msra.mxu0 0.0
    %2236 = vmatpush.msra.mxu0 0.0
    %2237 = vmatpush.msra.mxu0 0.0
    %2238 = vmatpush.msra.mxu0 0.0
    %2239 = vmatpush.msra.mxu0 0.0
    %2240 = vmatpush.msra.mxu0 0.0
    %2241 = vmatpush.msra.mxu0 0.0
    %v2242 = vand.u32 %v1872, 4294901760
    %2243 = vmatpush.msra.mxu0 %v2242
    %v2244 = vand.u32 %v1871, 4294901760
    %2245 = vmatpush.msra.mxu0 %v2244
    %v2246 = vand.u32 %v1870, 4294901760
    %2247 = vmatpush.msra.mxu0 %v2246
    %v2248 = vand.u32 %v1869, 4294901760
    %2249 = vmatpush.msra.mxu0 %v2248
    %v2250 = vand.u32 %v1879, 4294901760
    %2251 = vmatmul.f32.gmra.mxu0 %v2250
    %v2252 = vpop.f32.mrf.mxu0
    %v2253 = vadd.f32 %v2228, %v2252
    %2254 = vdwg.mxu0
    %v2255 = vxor.u32 %v2064, 2147483648
    %v2256 = vmul.f32 %v2255, 1.442695
    %v2257 = vpow.pop %v2256
    %v2258 = vadd.f32 %v2257, 1.0
    %v2259 = vrcp.pop %v2258
    %v2260 = vmul.f32 %v2258, %v2259
    %v2261 = vsub.f32 1.0, %v2260
    %v2262 = vmul.f32 %v2259, %v2261
    %v2263 = vadd.f32 %v2259, %v2262
    %vm2264 = vweird.f32 %v2258
    %vm2265 = vweird.f32 %v2259
    %vm2266 = vmor %vm2264, %vm2265
    %v2267 = vsel %vm2266, %v2259, %v2263
    %v2268 = vand.u32 2147483647, %v2258
    %vm2269 = vcmp.eq.f32.partialorder %v2268, 8.507059e+37
    %v2270 = vand.u32 %v2258, 2147483648
    %v2271 = vor.u32 1.1754944e-38, %v2270
    %v2272 = vsel %vm2269, %v2271, %v2267
    %v2273 = vmul.f32 1.0, %v2272
    %v2274 = vtanh.pop %v2064
    %v2275 = vmul.f32 %v2273, 0.0
    %2277 = vrot.lane.b32.xlu0 %v2274, 64
    %v2278 = vpop.permute.xlu0 %2277
    %v2280 = vmul.f32 %v2273, %v2278
    %2282 = vrot.lane.b32.xlu0 %v2280, 32
    %v2283 = vpop.permute.xlu0 %2282
    %v2285 = vadd.f32 %v2275, %v2283
    %v2286 = vtanh.pop %v2285
    %2288 = vrot.lane.b32.xlu0 %v2286, 64
    %v2289 = vpop.permute.xlu0 %2288
    %v2291 = vmul.f32 %v2273, %v2289
    %v2292 = vxor.u32 %v2253, 2147483648
    %v2293 = vmul.f32 %v2292, 1.442695
    %v2294 = vpow.pop %v2293
    %v2295 = vadd.f32 %v2294, 1.0
    %v2296 = vrcp.pop %v2295
    %v2297 = vmul.f32 %v2295, %v2296
    %v2298 = vsub.f32 1.0, %v2297
    %v2299 = vmul.f32 %v2296, %v2298
    %v2300 = vadd.f32 %v2296, %v2299
    %vm2301 = vweird.f32 %v2295
    %vm2302 = vweird.f32 %v2296
    %vm2303 = vmor %vm2301, %vm2302
    %v2304 = vsel %vm2303, %v2296, %v2300
    %v2305 = vand.u32 2147483647, %v2295
    %vm2306 = vcmp.eq.f32.partialorder %v2305, 8.507059e+37
    %v2307 = vand.u32 %v2295, 2147483648
    %v2308 = vor.u32 1.1754944e-38, %v2307
    %v2309 = vsel %vm2306, %v2308, %v2304
    %v2310 = vmul.f32 1.0, %v2309
    %v2311 = vtanh.pop %v2253
    %v2312 = vmul.f32 %v2310, 0.0
    %2314 = vrot.lane.b32.xlu0 %v2311, 64
    %v2315 = vpop.permute.xlu0 %2314
    %v2317 = vmul.f32 %v2310, %v2315
    %2319 = vrot.lane.b32.xlu0 %v2317, 32
    %v2320 = vpop.permute.xlu0 %2319
    %v2322 = vadd.f32 %v2312, %v2320
    %v2323 = vtanh.pop %v2322
    %2325 = vrot.lane.b32.xlu0 %v2323, 64
    %v2326 = vpop.permute.xlu0 %2325
    %v2328 = vmul.f32 %v2310, %v2326
    %s2329 = smul.u32 1, 2
    %s2330 = smul.addr %s2329, 8
    %s2331 = scalar_lea.vmem [#allocation2], %s2330
    %v2332 = vld [vmem:[%s2331] sm:$0xff]
    %2334 = vrot.lane.b32.xlu0 %v2291, 32
    %v2335 = vpop.permute.xlu0 %2334
    %v2336 = vsel %vm1877, %v2335, 0
    %2338 = vmatpush.msra.mxu0 0.0
    %2339 = vmatpush.msra.mxu0 0.0
    %2340 = vmatpush.msra.mxu0 0.0
    %2341 = vmatpush.msra.mxu0 0.0
    %2342 = vmatpush.msra.mxu0 0.0
    %2343 = vmatpush.msra.mxu0 0.0
    %2344 = vmatpush.msra.mxu0 0.0
    %2345 = vmatpush.msra.mxu0 0.0
    %2346 = vmatpush.msra.mxu0 0.0
    %2347 = vmatpush.msra.mxu0 0.0
    %2348 = vmatpush.msra.mxu0 0.0
    %2349 = vmatpush.msra.mxu0 0.0
    %v2350 = vand.u32 %v1868, 4294901760
    %2351 = vmatpush.msra.mxu0 %v2350
    %v2352 = vand.u32 %v1867, 4294901760
    %2353 = vmatpush.msra.mxu0 %v2352
    %v2354 = vand.u32 %v1866, 4294901760
    %2355 = vmatpush.msra.mxu0 %v2354
    %v2356 = vand.u32 %v1865, 4294901760
    %2357 = vmatpush.msra.mxu0 %v2356
    %v2358 = vand.u32 %v2336, 4294901760
    %v2359 = vsub.f32 %v2336, %v2358
    %v2360 = vand.u32 %v2359, 4294901760
    %v2361 = vsub.f32 %v2359, %v2360
    %v2362 = vand.u32 %v2361, 4294901760
    %2363 = vmatmul.f32.gmra.mxu0 %v2362
    %v2364 = vpop.f32.mrf.mxu0
    %v2365 = vadd.f32 %v2332, %v2364
    %2366 = vdwg.mxu0
    %2367 = vmatpush.msra.mxu0 0.0
    %2368 = vmatpush.msra.mxu0 0.0
    %2369 = vmatpush.msra.mxu0 0.0
    %2370 = vmatpush.msra.mxu0 0.0
    %2371 = vmatpush.msra.mxu0 0.0
    %2372 = vmatpush.msra.mxu0 0.0
    %2373 = vmatpush.msra.mxu0 0.0
    %2374 = vmatpush.msra.mxu0 0.0
    %2375 = vmatpush.msra.mxu0 0.0
    %2376 = vmatpush.msra.mxu0 0.0
    %2377 = vmatpush.msra.mxu0 0.0
    %2378 = vmatpush.msra.mxu0 0.0
    %v2379 = vand.u32 %v1868, 4294901760
    %v2380 = vsub.f32 %v1868, %v2379
    %v2381 = vand.u32 %v2380, 4294901760
    %v2382 = vsub.f32 %v2380, %v2381
    %v2383 = vand.u32 %v2382, 4294901760
    %2384 = vmatpush.msra.mxu0 %v2383
    %v2385 = vand.u32 %v1867, 4294901760
    %v2386 = vsub.f32 %v1867, %v2385
    %v2387 = vand.u32 %v2386, 4294901760
    %v2388 = vsub.f32 %v2386, %v2387
    %v2389 = vand.u32 %v2388, 4294901760
    %2390 = vmatpush.msra.mxu0 %v2389
    %v2391 = vand.u32 %v1866, 4294901760
    %v2392 = vsub.f32 %v1866, %v2391
    %v2393 = vand.u32 %v2392, 4294901760
    %v2394 = vsub.f32 %v2392, %v2393
    %v2395 = vand.u32 %v2394, 4294901760
    %2396 = vmatpush.msra.mxu0 %v2395
    %v2397 = vand.u32 %v1865, 4294901760
    %v2398 = vsub.f32 %v1865, %v2397
    %v2399 = vand.u32 %v2398, 4294901760
    %v2400 = vsub.f32 %v2398, %v2399
    %v2401 = vand.u32 %v2400, 4294901760
    %2402 = vmatpush.msra.mxu0 %v2401
    %v2403 = vand.u32 %v2336, 4294901760
    %2404 = vmatmul.f32.gmra.mxu0 %v2403
    %v2405 = vpop.f32.mrf.mxu0
    %v2406 = vadd.f32 %v2365, %v2405
    %2407 = vdwg.mxu0
    %2408 = vmatpush.msra.mxu0 0.0
    %2409 = vmatpush.msra.mxu0 0.0
    %2410 = vmatpush.msra.mxu0 0.0
    %2411 = vmatpush.msra.mxu0 0.0
    %2412 = vmatpush.msra.mxu0 0.0
    %2413 = vmatpush.msra.mxu0 0.0
    %2414 = vmatpush.msra.mxu0 0.0
    %2415 = vmatpush.msra.mxu0 0.0
    %2416 = vmatpush.msra.mxu0 0.0
    %2417 = vmatpush.msra.mxu0 0.0
    %2418 = vmatpush.msra.mxu0 0.0
    %2419 = vmatpush.msra.mxu0 0.0
    %v2420 = vand.u32 %v1868, 4294901760
    %v2421 = vsub.f32 %v1868, %v2420
    %2422 = vmatpush.msra.mxu0 %v2421
    %v2423 = vand.u32 %v1867, 4294901760
    %v2424 = vsub.f32 %v1867, %v2423
    %2425 = vmatpush.msra.mxu0 %v2424
    %v2426 = vand.u32 %v1866, 4294901760
    %v2427 = vsub.f32 %v1866, %v2426
    %2428 = vmatpush.msra.mxu0 %v2427
    %v2429 = vand.u32 %v1865, 4294901760
    %v2430 = vsub.f32 %v1865, %v2429
    %2431 = vmatpush.msra.mxu0 %v2430
    %v2432 = vand.u32 %v2336, 4294901760
    %v2433 = vsub.f32 %v2336, %v2432
    %2434 = vmatmul.f32.gmra.mxu0 %v2433
    %v2435 = vpop.f32.mrf.mxu0
    %v2436 = vadd.f32 %v2406, %v2435
    %2437 = vdwg.mxu0
    %2438 = vmatpush.msra.mxu0 0.0
    %2439 = vmatpush.msra.mxu0 0.0
    %2440 = vmatpush.msra.mxu0 0.0
    %2441 = vmatpush.msra.mxu0 0.0
    %2442 = vmatpush.msra.mxu0 0.0
    %2443 = vmatpush.msra.mxu0 0.0
    %2444 = vmatpush.msra.mxu0 0.0
    %2445 = vmatpush.msra.mxu0 0.0
    %2446 = vmatpush.msra.mxu0 0.0
    %2447 = vmatpush.msra.mxu0 0.0
    %2448 = vmatpush.msra.mxu0 0.0
    %2449 = vmatpush.msra.mxu0 0.0
    %v2450 = vand.u32 %v1868, 4294901760
    %2451 = vmatpush.msra.mxu0 %v2450
    %v2452 = vand.u32 %v1867, 4294901760
    %2453 = vmatpush.msra.mxu0 %v2452
    %v2454 = vand.u32 %v1866, 4294901760
    %2455 = vmatpush.msra.mxu0 %v2454
    %v2456 = vand.u32 %v1865, 4294901760
    %2457 = vmatpush.msra.mxu0 %v2456
    %v2458 = vand.u32 %v2336, 4294901760
    %v2459 = vsub.f32 %v2336, %v2458
    %v2460 = vand.u32 %v2459, 4294901760
    %2461 = vmatmul.f32.gmra.mxu0 %v2460
    %v2462 = vpop.f32.mrf.mxu0
    %v2463 = vadd.f32 %v2436, %v2462
    %2464 = vdwg.mxu0
    %2465 = vmatpush.msra.mxu0 0.0
    %2466 = vmatpush.msra.mxu0 0.0
    %2467 = vmatpush.msra.mxu0 0.0
    %2468 = vmatpush.msra.mxu0 0.0
    %2469 = vmatpush.msra.mxu0 0.0
    %2470 = vmatpush.msra.mxu0 0.0
    %2471 = vmatpush.msra.mxu0 0.0
    %2472 = vmatpush.msra.mxu0 0.0
    %2473 = vmatpush.msra.mxu0 0.0
    %2474 = vmatpush.msra.mxu0 0.0
    %2475 = vmatpush.msra.mxu0 0.0
    %2476 = vmatpush.msra.mxu0 0.0
    %v2477 = vand.u32 %v1868, 4294901760
    %v2478 = vsub.f32 %v1868, %v2477
    %v2479 = vand.u32 %v2478, 4294901760
    %2480 = vmatpush.msra.mxu0 %v2479
    %v2481 = vand.u32 %v1867, 4294901760
    %v2482 = vsub.f32 %v1867, %v2481
    %v2483 = vand.u32 %v2482, 4294901760
    %2484 = vmatpush.msra.mxu0 %v2483
    %v2485 = vand.u32 %v1866, 4294901760
    %v2486 = vsub.f32 %v1866, %v2485
    %v2487 = vand.u32 %v2486, 4294901760
    %2488 = vmatpush.msra.mxu0 %v2487
    %v2489 = vand.u32 %v1865, 4294901760
    %v2490 = vsub.f32 %v1865, %v2489
    %v2491 = vand.u32 %v2490, 4294901760
    %2492 = vmatpush.msra.mxu0 %v2491
    %v2493 = vand.u32 %v2336, 4294901760
    %2494 = vmatmul.f32.gmra.mxu0 %v2493
    %v2495 = vpop.f32.mrf.mxu0
    %v2496 = vadd.f32 %v2463, %v2495
    %2497 = vdwg.mxu0
    %2498 = vmatpush.msra.mxu0 0.0
    %2499 = vmatpush.msra.mxu0 0.0
    %2500 = vmatpush.msra.mxu0 0.0
    %2501 = vmatpush.msra.mxu0 0.0
    %2502 = vmatpush.msra.mxu0 0.0
    %2503 = vmatpush.msra.mxu0 0.0
    %2504 = vmatpush.msra.mxu0 0.0
    %2505 = vmatpush.msra.mxu0 0.0
    %2506 = vmatpush.msra.mxu0 0.0
    %2507 = vmatpush.msra.mxu0 0.0
    %2508 = vmatpush.msra.mxu0 0.0
    %2509 = vmatpush.msra.mxu0 0.0
    %v2510 = vand.u32 %v1868, 4294901760
    %2511 = vmatpush.msra.mxu0 %v2510
    %v2512 = vand.u32 %v1867, 4294901760
    %2513 = vmatpush.msra.mxu0 %v2512
    %v2514 = vand.u32 %v1866, 4294901760
    %2515 = vmatpush.msra.mxu0 %v2514
    %v2516 = vand.u32 %v1865, 4294901760
    %2517 = vmatpush.msra.mxu0 %v2516
    %v2518 = vand.u32 %v2336, 4294901760
    %2519 = vmatmul.f32.gmra.mxu0 %v2518
    %v2520 = vpop.f32.mrf.mxu0
    %v2521 = vadd.f32 %v2496, %v2520
    %2522 = vdwg.mxu0
    %s2523 = smul.u32 6, 2
    %s2524 = smul.addr %s2523, 8
    %s2525 = scalar_lea.vmem [#allocation2], %s2524
    %v2526 = vld [vmem:[%s2525 + $0x8] sm:$0xff]
    %2528 = vrot.lane.b32.xlu0 %v2328, 32
    %v2529 = vpop.permute.xlu0 %2528
    %v2530 = vsel %vm1877, %v2529, 0
    %2532 = vmatpush.msra.mxu0 0.0
    %2533 = vmatpush.msra.mxu0 0.0
    %2534 = vmatpush.msra.mxu0 0.0
    %2535 = vmatpush.msra.mxu0 0.0
    %2536 = vmatpush.msra.mxu0 0.0
    %2537 = vmatpush.msra.mxu0 0.0
    %2538 = vmatpush.msra.mxu0 0.0
    %2539 = vmatpush.msra.mxu0 0.0
    %2540 = vmatpush.msra.mxu0 0.0
    %2541 = vmatpush.msra.mxu0 0.0
    %2542 = vmatpush.msra.mxu0 0.0
    %2543 = vmatpush.msra.mxu0 0.0
    %v2544 = vand.u32 %v1872, 4294901760
    %2545 = vmatpush.msra.mxu0 %v2544
    %v2546 = vand.u32 %v1871, 4294901760
    %2547 = vmatpush.msra.mxu0 %v2546
    %v2548 = vand.u32 %v1870, 4294901760
    %2549 = vmatpush.msra.mxu0 %v2548
    %v2550 = vand.u32 %v1869, 4294901760
    %2551 = vmatpush.msra.mxu0 %v2550
    %v2552 = vand.u32 %v2530, 4294901760
    %v2553 = vsub.f32 %v2530, %v2552
    %v2554 = vand.u32 %v2553, 4294901760
    %v2555 = vsub.f32 %v2553, %v2554
    %v2556 = vand.u32 %v2555, 4294901760
    %2557 = vmatmul.f32.gmra.mxu0 %v2556
    %v2558 = vpop.f32.mrf.mxu0
    %v2559 = vadd.f32 %v2526, %v2558
    %2560 = vdwg.mxu0
    %2561 = vmatpush.msra.mxu0 0.0
    %2562 = vmatpush.msra.mxu0 0.0
    %2563 = vmatpush.msra.mxu0 0.0
    %2564 = vmatpush.msra.mxu0 0.0
    %2565 = vmatpush.msra.mxu0 0.0
    %2566 = vmatpush.msra.mxu0 0.0
    %2567 = vmatpush.msra.mxu0 0.0
    %2568 = vmatpush.msra.mxu0 0.0
    %2569 = vmatpush.msra.mxu0 0.0
    %2570 = vmatpush.msra.mxu0 0.0
    %2571 = vmatpush.msra.mxu0 0.0
    %2572 = vmatpush.msra.mxu0 0.0
    %v2573 = vand.u32 %v1872, 4294901760
    %v2574 = vsub.f32 %v1872, %v2573
    %v2575 = vand.u32 %v2574, 4294901760
    %v2576 = vsub.f32 %v2574, %v2575
    %v2577 = vand.u32 %v2576, 4294901760
    %2578 = vmatpush.msra.mxu0 %v2577
    %v2579 = vand.u32 %v1871, 4294901760
    %v2580 = vsub.f32 %v1871, %v2579
    %v2581 = vand.u32 %v2580, 4294901760
    %v2582 = vsub.f32 %v2580, %v2581
    %v2583 = vand.u32 %v2582, 4294901760
    %2584 = vmatpush.msra.mxu0 %v2583
    %v2585 = vand.u32 %v1870, 4294901760
    %v2586 = vsub.f32 %v1870, %v2585
    %v2587 = vand.u32 %v2586, 4294901760
    %v2588 = vsub.f32 %v2586, %v2587
    %v2589 = vand.u32 %v2588, 4294901760
    %2590 = vmatpush.msra.mxu0 %v2589
    %v2591 = vand.u32 %v1869, 4294901760
    %v2592 = vsub.f32 %v1869, %v2591
    %v2593 = vand.u32 %v2592, 4294901760
    %v2594 = vsub.f32 %v2592, %v2593
    %v2595 = vand.u32 %v2594, 4294901760
    %2596 = vmatpush.msra.mxu0 %v2595
    %v2597 = vand.u32 %v2530, 4294901760
    %2598 = vmatmul.f32.gmra.mxu0 %v2597
    %v2599 = vpop.f32.mrf.mxu0
    %v2600 = vadd.f32 %v2559, %v2599
    %2601 = vdwg.mxu0
    %2602 = vmatpush.msra.mxu0 0.0
    %2603 = vmatpush.msra.mxu0 0.0
    %2604 = vmatpush.msra.mxu0 0.0
    %2605 = vmatpush.msra.mxu0 0.0
    %2606 = vmatpush.msra.mxu0 0.0
    %2607 = vmatpush.msra.mxu0 0.0
    %2608 = vmatpush.msra.mxu0 0.0
    %2609 = vmatpush.msra.mxu0 0.0
    %2610 = vmatpush.msra.mxu0 0.0
    %2611 = vmatpush.msra.mxu0 0.0
    %2612 = vmatpush.msra.mxu0 0.0
    %2613 = vmatpush.msra.mxu0 0.0
    %v2614 = vand.u32 %v1872, 4294901760
    %v2615 = vsub.f32 %v1872, %v2614
    %2616 = vmatpush.msra.mxu0 %v2615
    %v2617 = vand.u32 %v1871, 4294901760
    %v2618 = vsub.f32 %v1871, %v2617
    %2619 = vmatpush.msra.mxu0 %v2618
    %v2620 = vand.u32 %v1870, 4294901760
    %v2621 = vsub.f32 %v1870, %v2620
    %2622 = vmatpush.msra.mxu0 %v2621
    %v2623 = vand.u32 %v1869, 4294901760
    %v2624 = vsub.f32 %v1869, %v2623
    %2625 = vmatpush.msra.mxu0 %v2624
    %v2626 = vand.u32 %v2530, 4294901760
    %v2627 = vsub.f32 %v2530, %v2626
    %2628 = vmatmul.f32.gmra.mxu0 %v2627
    %v2629 = vpop.f32.mrf.mxu0
    %v2630 = vadd.f32 %v2600, %v2629
    %2631 = vdwg.mxu0
    %2632 = vmatpush.msra.mxu0 0.0
    %2633 = vmatpush.msra.mxu0 0.0
    %2634 = vmatpush.msra.mxu0 0.0
    %2635 = vmatpush.msra.mxu0 0.0
    %2636 = vmatpush.msra.mxu0 0.0
    %2637 = vmatpush.msra.mxu0 0.0
    %2638 = vmatpush.msra.mxu0 0.0
    %2639 = vmatpush.msra.mxu0 0.0
    %2640 = vmatpush.msra.mxu0 0.0
    %2641 = vmatpush.msra.mxu0 0.0
    %2642 = vmatpush.msra.mxu0 0.0
    %2643 = vmatpush.msra.mxu0 0.0
    %v2644 = vand.u32 %v1872, 4294901760
    %2645 = vmatpush.msra.mxu0 %v2644
    %v2646 = vand.u32 %v1871, 4294901760
    %2647 = vmatpush.msra.mxu0 %v2646
    %v2648 = vand.u32 %v1870, 4294901760
    %2649 = vmatpush.msra.mxu0 %v2648
    %v2650 = vand.u32 %v1869, 4294901760
    %2651 = vmatpush.msra.mxu0 %v2650
    %v2652 = vand.u32 %v2530, 4294901760
    %v2653 = vsub.f32 %v2530, %v2652
    %v2654 = vand.u32 %v2653, 4294901760
    %2655 = vmatmul.f32.gmra.mxu0 %v2654
    %v2656 = vpop.f32.mrf.mxu0
    %v2657 = vadd.f32 %v2630, %v2656
    %2658 = vdwg.mxu0
    %2659 = vmatpush.msra.mxu0 0.0
    %2660 = vmatpush.msra.mxu0 0.0
    %2661 = vmatpush.msra.mxu0 0.0
    %2662 = vmatpush.msra.mxu0 0.0
    %2663 = vmatpush.msra.mxu0 0.0
    %2664 = vmatpush.msra.mxu0 0.0
    %2665 = vmatpush.msra.mxu0 0.0
    %2666 = vmatpush.msra.mxu0 0.0
    %2667 = vmatpush.msra.mxu0 0.0
    %2668 = vmatpush.msra.mxu0 0.0
    %2669 = vmatpush.msra.mxu0 0.0
    %2670 = vmatpush.msra.mxu0 0.0
    %v2671 = vand.u32 %v1872, 4294901760
    %v2672 = vsub.f32 %v1872, %v2671
    %v2673 = vand.u32 %v2672, 4294901760
    %2674 = vmatpush.msra.mxu0 %v2673
    %v2675 = vand.u32 %v1871, 4294901760
    %v2676 = vsub.f32 %v1871, %v2675
    %v2677 = vand.u32 %v2676, 4294901760
    %2678 = vmatpush.msra.mxu0 %v2677
    %v2679 = vand.u32 %v1870, 4294901760
    %v2680 = vsub.f32 %v1870, %v2679
    %v2681 = vand.u32 %v2680, 4294901760
    %2682 = vmatpush.msra.mxu0 %v2681
    %v2683 = vand.u32 %v1869, 4294901760
    %v2684 = vsub.f32 %v1869, %v2683
    %v2685 = vand.u32 %v2684, 4294901760
    %2686 = vmatpush.msra.mxu0 %v2685
    %v2687 = vand.u32 %v2530, 4294901760
    %2688 = vmatmul.f32.gmra.mxu0 %v2687
    %v2689 = vpop.f32.mrf.mxu0
    %v2690 = vadd.f32 %v2657, %v2689
    %2691 = vdwg.mxu0
    %2692 = vmatpush.msra.mxu0 0.0
    %2693 = vmatpush.msra.mxu0 0.0
    %2694 = vmatpush.msra.mxu0 0.0
    %2695 = vmatpush.msra.mxu0 0.0
    %2696 = vmatpush.msra.mxu0 0.0
    %2697 = vmatpush.msra.mxu0 0.0
    %2698 = vmatpush.msra.mxu0 0.0
    %2699 = vmatpush.msra.mxu0 0.0
    %2700 = vmatpush.msra.mxu0 0.0
    %2701 = vmatpush.msra.mxu0 0.0
    %2702 = vmatpush.msra.mxu0 0.0
    %2703 = vmatpush.msra.mxu0 0.0
    %v2704 = vand.u32 %v1872, 4294901760
    %2705 = vmatpush.msra.mxu0 %v2704
    %v2706 = vand.u32 %v1871, 4294901760
    %2707 = vmatpush.msra.mxu0 %v2706
    %v2708 = vand.u32 %v1870, 4294901760
    %2709 = vmatpush.msra.mxu0 %v2708
    %v2710 = vand.u32 %v1869, 4294901760
    %2711 = vmatpush.msra.mxu0 %v2710
    %v2712 = vand.u32 %v2530, 4294901760
    %2713 = vmatmul.f32.gmra.mxu0 %v2712
    %v2714 = vpop.f32.mrf.mxu0
    %v2715 = vadd.f32 %v2690, %v2714
    %2716 = vdwg.mxu0
    %v2717 = vxor.u32 %v2521, 2147483648
    %v2718 = vmul.f32 %v2717, 1.442695
    %v2719 = vpow.pop %v2718
    %v2720 = vadd.f32 %v2719, 1.0
    %v2721 = vrcp.pop %v2720
    %v2722 = vmul.f32 %v2720, %v2721
    %v2723 = vsub.f32 1.0, %v2722
    %v2724 = vmul.f32 %v2721, %v2723
    %v2725 = vadd.f32 %v2721, %v2724
    %vm2726 = vweird.f32 %v2720
    %vm2727 = vweird.f32 %v2721
    %vm2728 = vmor %vm2726, %vm2727
    %v2729 = vsel %vm2728, %v2721, %v2725
    %v2730 = vand.u32 2147483647, %v2720
    %vm2731 = vcmp.eq.f32.partialorder %v2730, 8.507059e+37
    %v2732 = vand.u32 %v2720, 2147483648
    %v2733 = vor.u32 1.1754944e-38, %v2732
    %v2734 = vsel %vm2731, %v2733, %v2729
    %v2735 = vmul.f32 1.0, %v2734
    %v2736 = vtanh.pop %v2521
    %v2737 = vmul.f32 %v2735, %v2285
    %2739 = vrot.lane.b32.xlu0 %v2736, 64
    %v2740 = vpop.permute.xlu0 %2739
    %v2742 = vmul.f32 %v2735, %v2740
    %2744 = vrot.lane.b32.xlu0 %v2742, 32
    %v2745 = vpop.permute.xlu0 %2744
    %v2747 = vadd.f32 %v2737, %v2745
    %v2748 = vtanh.pop %v2747
    %2750 = vrot.lane.b32.xlu0 %v2748, 64
    %v2751 = vpop.permute.xlu0 %2750
    %v2753 = vmul.f32 %v2735, %v2751
    %v2754 = vxor.u32 %v2715, 2147483648
    %v2755 = vmul.f32 %v2754, 1.442695
    %v2756 = vpow.pop %v2755
    %v2757 = vadd.f32 %v2756, 1.0
    %v2758 = vrcp.pop %v2757
    %v2759 = vmul.f32 %v2757, %v2758
    %v2760 = vsub.f32 1.0, %v2759
    %v2761 = vmul.f32 %v2758, %v2760
    %v2762 = vadd.f32 %v2758, %v2761
    %vm2763 = vweird.f32 %v2757
    %vm2764 = vweird.f32 %v2758
    %vm2765 = vmor %vm2763, %vm2764
    %v2766 = vsel %vm2765, %v2758, %v2762
    %v2767 = vand.u32 2147483647, %v2757
    %vm2768 = vcmp.eq.f32.partialorder %v2767, 8.507059e+37
    %v2769 = vand.u32 %v2757, 2147483648
    %v2770 = vor.u32 1.1754944e-38, %v2769
    %v2771 = vsel %vm2768, %v2770, %v2766
    %v2772 = vmul.f32 1.0, %v2771
    %v2773 = vtanh.pop %v2715
    %v2774 = vmul.f32 %v2772, %v2322
    %2776 = vrot.lane.b32.xlu0 %v2773, 64
    %v2777 = vpop.permute.xlu0 %2776
    %v2779 = vmul.f32 %v2772, %v2777
    %2781 = vrot.lane.b32.xlu0 %v2779, 32
    %v2782 = vpop.permute.xlu0 %2781
    %v2784 = vadd.f32 %v2774, %v2782
    %v2785 = vtanh.pop %v2784
    %2787 = vrot.lane.b32.xlu0 %v2785, 64
    %v2788 = vpop.permute.xlu0 %2787
    %v2790 = vmul.f32 %v2772, %v2788
    %s2791 = smul.u32 2, 2
    %s2792 = smul.addr %s2791, 8
    %s2793 = scalar_lea.vmem [#allocation2], %s2792
    %v2794 = vld [vmem:[%s2793] sm:$0xff]
    %2796 = vrot.lane.b32.xlu0 %v2753, 32
    %v2797 = vpop.permute.xlu0 %2796
    %v2798 = vsel %vm1877, %v2797, 0
    %2800 = vmatpush.msra.mxu0 0.0
    %2801 = vmatpush.msra.mxu0 0.0
    %2802 = vmatpush.msra.mxu0 0.0
    %2803 = vmatpush.msra.mxu0 0.0
    %2804 = vmatpush.msra.mxu0 0.0
    %2805 = vmatpush.msra.mxu0 0.0
    %2806 = vmatpush.msra.mxu0 0.0
    %2807 = vmatpush.msra.mxu0 0.0
    %2808 = vmatpush.msra.mxu0 0.0
    %2809 = vmatpush.msra.mxu0 0.0
    %2810 = vmatpush.msra.mxu0 0.0
    %2811 = vmatpush.msra.mxu0 0.0
    %v2812 = vand.u32 %v1868, 4294901760
    %2813 = vmatpush.msra.mxu0 %v2812
    %v2814 = vand.u32 %v1867, 4294901760
    %2815 = vmatpush.msra.mxu0 %v2814
    %v2816 = vand.u32 %v1866, 4294901760
    %2817 = vmatpush.msra.mxu0 %v2816
    %v2818 = vand.u32 %v1865, 4294901760
    %2819 = vmatpush.msra.mxu0 %v2818
    %v2820 = vand.u32 %v2798, 4294901760
    %v2821 = vsub.f32 %v2798, %v2820
    %v2822 = vand.u32 %v2821, 4294901760
    %v2823 = vsub.f32 %v2821, %v2822
    %v2824 = vand.u32 %v2823, 4294901760
    %2825 = vmatmul.f32.gmra.mxu0 %v2824
    %v2826 = vpop.f32.mrf.mxu0
    %v2827 = vadd.f32 %v2794, %v2826
    %2828 = vdwg.mxu0
    %2829 = vmatpush.msra.mxu0 0.0
    %2830 = vmatpush.msra.mxu0 0.0
    %2831 = vmatpush.msra.mxu0 0.0
    %2832 = vmatpush.msra.mxu0 0.0
    %2833 = vmatpush.msra.mxu0 0.0
    %2834 = vmatpush.msra.mxu0 0.0
    %2835 = vmatpush.msra.mxu0 0.0
    %2836 = vmatpush.msra.mxu0 0.0
    %2837 = vmatpush.msra.mxu0 0.0
    %2838 = vmatpush.msra.mxu0 0.0
    %2839 = vmatpush.msra.mxu0 0.0
    %2840 = vmatpush.msra.mxu0 0.0
    %v2841 = vand.u32 %v1868, 4294901760
    %v2842 = vsub.f32 %v1868, %v2841
    %v2843 = vand.u32 %v2842, 4294901760
    %v2844 = vsub.f32 %v2842, %v2843
    %v2845 = vand.u32 %v2844, 4294901760
    %2846 = vmatpush.msra.mxu0 %v2845
    %v2847 = vand.u32 %v1867, 4294901760
    %v2848 = vsub.f32 %v1867, %v2847
    %v2849 = vand.u32 %v2848, 4294901760
    %v2850 = vsub.f32 %v2848, %v2849
    %v2851 = vand.u32 %v2850, 4294901760
    %2852 = vmatpush.msra.mxu0 %v2851
    %v2853 = vand.u32 %v1866, 4294901760
    %v2854 = vsub.f32 %v1866, %v2853
    %v2855 = vand.u32 %v2854, 4294901760
    %v2856 = vsub.f32 %v2854, %v2855
    %v2857 = vand.u32 %v2856, 4294901760
    %2858 = vmatpush.msra.mxu0 %v2857
    %v2859 = vand.u32 %v1865, 4294901760
    %v2860 = vsub.f32 %v1865, %v2859
    %v2861 = vand.u32 %v2860, 4294901760
    %v2862 = vsub.f32 %v2860, %v2861
    %v2863 = vand.u32 %v2862, 4294901760
    %2864 = vmatpush.msra.mxu0 %v2863
    %v2865 = vand.u32 %v2798, 4294901760
    %2866 = vmatmul.f32.gmra.mxu0 %v2865
    %v2867 = vpop.f32.mrf.mxu0
    %v2868 = vadd.f32 %v2827, %v2867
    %2869 = vdwg.mxu0
    %2870 = vmatpush.msra.mxu0 0.0
    %2871 = vmatpush.msra.mxu0 0.0
    %2872 = vmatpush.msra.mxu0 0.0
    %2873 = vmatpush.msra.mxu0 0.0
    %2874 = vmatpush.msra.mxu0 0.0
    %2875 = vmatpush.msra.mxu0 0.0
    %2876 = vmatpush.msra.mxu0 0.0
    %2877 = vmatpush.msra.mxu0 0.0
    %2878 = vmatpush.msra.mxu0 0.0
    %2879 = vmatpush.msra.mxu0 0.0
    %2880 = vmatpush.msra.mxu0 0.0
    %2881 = vmatpush.msra.mxu0 0.0
    %v2882 = vand.u32 %v1868, 4294901760
    %v2883 = vsub.f32 %v1868, %v2882
    %2884 = vmatpush.msra.mxu0 %v2883
    %v2885 = vand.u32 %v1867, 4294901760
    %v2886 = vsub.f32 %v1867, %v2885
    %2887 = vmatpush.msra.mxu0 %v2886
    %v2888 = vand.u32 %v1866, 4294901760
    %v2889 = vsub.f32 %v1866, %v2888
    %2890 = vmatpush.msra.mxu0 %v2889
    %v2891 = vand.u32 %v1865, 4294901760
    %v2892 = vsub.f32 %v1865, %v2891
    %2893 = vmatpush.msra.mxu0 %v2892
    %v2894 = vand.u32 %v2798, 4294901760
    %v2895 = vsub.f32 %v2798, %v2894
    %2896 = vmatmul.f32.gmra.mxu0 %v2895
    %v2897 = vpop.f32.mrf.mxu0
    %v2898 = vadd.f32 %v2868, %v2897
    %2899 = vdwg.mxu0
    %2900 = vmatpush.msra.mxu0 0.0
    %2901 = vmatpush.msra.mxu0 0.0
    %2902 = vmatpush.msra.mxu0 0.0
    %2903 = vmatpush.msra.mxu0 0.0
    %2904 = vmatpush.msra.mxu0 0.0
    %2905 = vmatpush.msra.mxu0 0.0
    %2906 = vmatpush.msra.mxu0 0.0
    %2907 = vmatpush.msra.mxu0 0.0
    %2908 = vmatpush.msra.mxu0 0.0
    %2909 = vmatpush.msra.mxu0 0.0
    %2910 = vmatpush.msra.mxu0 0.0
    %2911 = vmatpush.msra.mxu0 0.0
    %v2912 = vand.u32 %v1868, 4294901760
    %2913 = vmatpush.msra.mxu0 %v2912
    %v2914 = vand.u32 %v1867, 4294901760
    %2915 = vmatpush.msra.mxu0 %v2914
    %v2916 = vand.u32 %v1866, 4294901760
    %2917 = vmatpush.msra.mxu0 %v2916
    %v2918 = vand.u32 %v1865, 4294901760
    %2919 = vmatpush.msra.mxu0 %v2918
    %v2920 = vand.u32 %v2798, 4294901760
    %v2921 = vsub.f32 %v2798, %v2920
    %v2922 = vand.u32 %v2921, 4294901760
    %2923 = vmatmul.f32.gmra.mxu0 %v2922
    %v2924 = vpop.f32.mrf.mxu0
    %v2925 = vadd.f32 %v2898, %v2924
    %2926 = vdwg.mxu0
    %2927 = vmatpush.msra.mxu0 0.0
    %2928 = vmatpush.msra.mxu0 0.0
    %2929 = vmatpush.msra.mxu0 0.0
    %2930 = vmatpush.msra.mxu0 0.0
    %2931 = vmatpush.msra.mxu0 0.0
    %2932 = vmatpush.msra.mxu0 0.0
    %2933 = vmatpush.msra.mxu0 0.0
    %2934 = vmatpush.msra.mxu0 0.0
    %2935 = vmatpush.msra.mxu0 0.0
    %2936 = vmatpush.msra.mxu0 0.0
    %2937 = vmatpush.msra.mxu0 0.0
    %2938 = vmatpush.msra.mxu0 0.0
    %v2939 = vand.u32 %v1868, 4294901760
    %v2940 = vsub.f32 %v1868, %v2939
    %v2941 = vand.u32 %v2940, 4294901760
    %2942 = vmatpush.msra.mxu0 %v2941
    %v2943 = vand.u32 %v1867, 4294901760
    %v2944 = vsub.f32 %v1867, %v2943
    %v2945 = vand.u32 %v2944, 4294901760
    %2946 = vmatpush.msra.mxu0 %v2945
    %v2947 = vand.u32 %v1866, 4294901760
    %v2948 = vsub.f32 %v1866, %v2947
    %v2949 = vand.u32 %v2948, 4294901760
    %2950 = vmatpush.msra.mxu0 %v2949
    %v2951 = vand.u32 %v1865, 4294901760
    %v2952 = vsub.f32 %v1865, %v2951
    %v2953 = vand.u32 %v2952, 4294901760
    %2954 = vmatpush.msra.mxu0 %v2953
    %v2955 = vand.u32 %v2798, 4294901760
    %2956 = vmatmul.f32.gmra.mxu0 %v2955
    %v2957 = vpop.f32.mrf.mxu0
    %v2958 = vadd.f32 %v2925, %v2957
    %2959 = vdwg.mxu0
    %2960 = vmatpush.msra.mxu0 0.0
    %2961 = vmatpush.msra.mxu0 0.0
    %2962 = vmatpush.msra.mxu0 0.0
    %2963 = vmatpush.msra.mxu0 0.0
    %2964 = vmatpush.msra.mxu0 0.0
    %2965 = vmatpush.msra.mxu0 0.0
    %2966 = vmatpush.msra.mxu0 0.0
    %2967 = vmatpush.msra.mxu0 0.0
    %2968 = vmatpush.msra.mxu0 0.0
    %2969 = vmatpush.msra.mxu0 0.0
    %2970 = vmatpush.msra.mxu0 0.0
    %2971 = vmatpush.msra.mxu0 0.0
    %v2972 = vand.u32 %v1868, 4294901760
    %2973 = vmatpush.msra.mxu0 %v2972
    %v2974 = vand.u32 %v1867, 4294901760
    %2975 = vmatpush.msra.mxu0 %v2974
    %v2976 = vand.u32 %v1866, 4294901760
    %2977 = vmatpush.msra.mxu0 %v2976
    %v2978 = vand.u32 %v1865, 4294901760
    %2979 = vmatpush.msra.mxu0 %v2978
    %v2980 = vand.u32 %v2798, 4294901760
    %2981 = vmatmul.f32.gmra.mxu0 %v2980
    %v2982 = vpop.f32.mrf.mxu0
    %v2983 = vadd.f32 %v2958, %v2982
    %2984 = vdwg.mxu0
    %s2985 = smul.u32 5, 2
    %s2986 = smul.addr %s2985, 8
    %s2987 = scalar_lea.vmem [#allocation2], %s2986
    %v2988 = vld [vmem:[%s2987 + $0x8] sm:$0xff]
    %2990 = vrot.lane.b32.xlu0 %v2790, 32
    %v2991 = vpop.permute.xlu0 %2990
    %v2992 = vsel %vm1877, %v2991, 0
    %2994 = vmatpush.msra.mxu0 0.0
    %2995 = vmatpush.msra.mxu0 0.0
    %2996 = vmatpush.msra.mxu0 0.0
    %2997 = vmatpush.msra.mxu0 0.0
    %2998 = vmatpush.msra.mxu0 0.0
    %2999 = vmatpush.msra.mxu0 0.0
    %3000 = vmatpush.msra.mxu0 0.0
    %3001 = vmatpush.msra.mxu0 0.0
    %3002 = vmatpush.msra.mxu0 0.0
    %3003 = vmatpush.msra.mxu0 0.0
    %3004 = vmatpush.msra.mxu0 0.0
    %3005 = vmatpush.msra.mxu0 0.0
    %v3006 = vand.u32 %v1872, 4294901760
    %3007 = vmatpush.msra.mxu0 %v3006
    %v3008 = vand.u32 %v1871, 4294901760
    %3009 = vmatpush.msra.mxu0 %v3008
    %v3010 = vand.u32 %v1870, 4294901760
    %3011 = vmatpush.msra.mxu0 %v3010
    %v3012 = vand.u32 %v1869, 4294901760
    %3013 = vmatpush.msra.mxu0 %v3012
    %v3014 = vand.u32 %v2992, 4294901760
    %v3015 = vsub.f32 %v2992, %v3014
    %v3016 = vand.u32 %v3015, 4294901760
    %v3017 = vsub.f32 %v3015, %v3016
    %v3018 = vand.u32 %v3017, 4294901760
    %3019 = vmatmul.f32.gmra.mxu0 %v3018
    %v3020 = vpop.f32.mrf.mxu0
    %v3021 = vadd.f32 %v2988, %v3020
    %3022 = vdwg.mxu0
    %3023 = vmatpush.msra.mxu0 0.0
    %3024 = vmatpush.msra.mxu0 0.0
    %3025 = vmatpush.msra.mxu0 0.0
    %3026 = vmatpush.msra.mxu0 0.0
    %3027 = vmatpush.msra.mxu0 0.0
    %3028 = vmatpush.msra.mxu0 0.0
    %3029 = vmatpush.msra.mxu0 0.0
    %3030 = vmatpush.msra.mxu0 0.0
    %3031 = vmatpush.msra.mxu0 0.0
    %3032 = vmatpush.msra.mxu0 0.0
    %3033 = vmatpush.msra.mxu0 0.0
    %3034 = vmatpush.msra.mxu0 0.0
    %v3035 = vand.u32 %v1872, 4294901760
    %v3036 = vsub.f32 %v1872, %v3035
    %v3037 = vand.u32 %v3036, 4294901760
    %v3038 = vsub.f32 %v3036, %v3037
    %v3039 = vand.u32 %v3038, 4294901760
    %3040 = vmatpush.msra.mxu0 %v3039
    %v3041 = vand.u32 %v1871, 4294901760
    %v3042 = vsub.f32 %v1871, %v3041
    %v3043 = vand.u32 %v3042, 4294901760
    %v3044 = vsub.f32 %v3042, %v3043
    %v3045 = vand.u32 %v3044, 4294901760
    %3046 = vmatpush.msra.mxu0 %v3045
    %v3047 = vand.u32 %v1870, 4294901760
    %v3048 = vsub.f32 %v1870, %v3047
    %v3049 = vand.u32 %v3048, 4294901760
    %v3050 = vsub.f32 %v3048, %v3049
    %v3051 = vand.u32 %v3050, 4294901760
    %3052 = vmatpush.msra.mxu0 %v3051
    %v3053 = vand.u32 %v1869, 4294901760
    %v3054 = vsub.f32 %v1869, %v3053
    %v3055 = vand.u32 %v3054, 4294901760
    %v3056 = vsub.f32 %v3054, %v3055
    %v3057 = vand.u32 %v3056, 4294901760
    %3058 = vmatpush.msra.mxu0 %v3057
    %v3059 = vand.u32 %v2992, 4294901760
    %3060 = vmatmul.f32.gmra.mxu0 %v3059
    %v3061 = vpop.f32.mrf.mxu0
    %v3062 = vadd.f32 %v3021, %v3061
    %3063 = vdwg.mxu0
    %3064 = vmatpush.msra.mxu0 0.0
    %3065 = vmatpush.msra.mxu0 0.0
    %3066 = vmatpush.msra.mxu0 0.0
    %3067 = vmatpush.msra.mxu0 0.0
    %3068 = vmatpush.msra.mxu0 0.0
    %3069 = vmatpush.msra.mxu0 0.0
    %3070 = vmatpush.msra.mxu0 0.0
    %3071 = vmatpush.msra.mxu0 0.0
    %3072 = vmatpush.msra.mxu0 0.0
    %3073 = vmatpush.msra.mxu0 0.0
    %3074 = vmatpush.msra.mxu0 0.0
    %3075 = vmatpush.msra.mxu0 0.0
    %v3076 = vand.u32 %v1872, 4294901760
    %v3077 = vsub.f32 %v1872, %v3076
    %3078 = vmatpush.msra.mxu0 %v3077
    %v3079 = vand.u32 %v1871, 4294901760
    %v3080 = vsub.f32 %v1871, %v3079
    %3081 = vmatpush.msra.mxu0 %v3080
    %v3082 = vand.u32 %v1870, 4294901760
    %v3083 = vsub.f32 %v1870, %v3082
    %3084 = vmatpush.msra.mxu0 %v3083
    %v3085 = vand.u32 %v1869, 4294901760
    %v3086 = vsub.f32 %v1869, %v3085
    %3087 = vmatpush.msra.mxu0 %v3086
    %v3088 = vand.u32 %v2992, 4294901760
    %v3089 = vsub.f32 %v2992, %v3088
    %3090 = vmatmul.f32.gmra.mxu0 %v3089
    %v3091 = vpop.f32.mrf.mxu0
    %v3092 = vadd.f32 %v3062, %v3091
    %3093 = vdwg.mxu0
    %3094 = vmatpush.msra.mxu0 0.0
    %3095 = vmatpush.msra.mxu0 0.0
    %3096 = vmatpush.msra.mxu0 0.0
    %3097 = vmatpush.msra.mxu0 0.0
    %3098 = vmatpush.msra.mxu0 0.0
    %3099 = vmatpush.msra.mxu0 0.0
    %3100 = vmatpush.msra.mxu0 0.0
    %3101 = vmatpush.msra.mxu0 0.0
    %3102 = vmatpush.msra.mxu0 0.0
    %3103 = vmatpush.msra.mxu0 0.0
    %3104 = vmatpush.msra.mxu0 0.0
    %3105 = vmatpush.msra.mxu0 0.0
    %v3106 = vand.u32 %v1872, 4294901760
    %3107 = vmatpush.msra.mxu0 %v3106
    %v3108 = vand.u32 %v1871, 4294901760
    %3109 = vmatpush.msra.mxu0 %v3108
    %v3110 = vand.u32 %v1870, 4294901760
    %3111 = vmatpush.msra.mxu0 %v3110
    %v3112 = vand.u32 %v1869, 4294901760
    %3113 = vmatpush.msra.mxu0 %v3112
    %v3114 = vand.u32 %v2992, 4294901760
    %v3115 = vsub.f32 %v2992, %v3114
    %v3116 = vand.u32 %v3115, 4294901760
    %3117 = vmatmul.f32.gmra.mxu0 %v3116
    %v3118 = vpop.f32.mrf.mxu0
    %v3119 = vadd.f32 %v3092, %v3118
    %3120 = vdwg.mxu0
    %3121 = vmatpush.msra.mxu0 0.0
    %3122 = vmatpush.msra.mxu0 0.0
    %3123 = vmatpush.msra.mxu0 0.0
    %3124 = vmatpush.msra.mxu0 0.0
    %3125 = vmatpush.msra.mxu0 0.0
    %3126 = vmatpush.msra.mxu0 0.0
    %3127 = vmatpush.msra.mxu0 0.0
    %3128 = vmatpush.msra.mxu0 0.0
    %3129 = vmatpush.msra.mxu0 0.0
    %3130 = vmatpush.msra.mxu0 0.0
    %3131 = vmatpush.msra.mxu0 0.0
    %3132 = vmatpush.msra.mxu0 0.0
    %v3133 = vand.u32 %v1872, 4294901760
    %v3134 = vsub.f32 %v1872, %v3133
    %v3135 = vand.u32 %v3134, 4294901760
    %3136 = vmatpush.msra.mxu0 %v3135
    %v3137 = vand.u32 %v1871, 4294901760
    %v3138 = vsub.f32 %v1871, %v3137
    %v3139 = vand.u32 %v3138, 4294901760
    %3140 = vmatpush.msra.mxu0 %v3139
    %v3141 = vand.u32 %v1870, 4294901760
    %v3142 = vsub.f32 %v1870, %v3141
    %v3143 = vand.u32 %v3142, 4294901760
    %3144 = vmatpush.msra.mxu0 %v3143
    %v3145 = vand.u32 %v1869, 4294901760
    %v3146 = vsub.f32 %v1869, %v3145
    %v3147 = vand.u32 %v3146, 4294901760
    %3148 = vmatpush.msra.mxu0 %v3147
    %v3149 = vand.u32 %v2992, 4294901760
    %3150 = vmatmul.f32.gmra.mxu0 %v3149
    %v3151 = vpop.f32.mrf.mxu0
    %v3152 = vadd.f32 %v3119, %v3151
    %3153 = vdwg.mxu0
    %3154 = vmatpush.msra.mxu0 0.0
    %3155 = vmatpush.msra.mxu0 0.0
    %3156 = vmatpush.msra.mxu0 0.0
    %3157 = vmatpush.msra.mxu0 0.0
    %3158 = vmatpush.msra.mxu0 0.0
    %3159 = vmatpush.msra.mxu0 0.0
    %3160 = vmatpush.msra.mxu0 0.0
    %3161 = vmatpush.msra.mxu0 0.0
    %3162 = vmatpush.msra.mxu0 0.0
    %3163 = vmatpush.msra.mxu0 0.0
    %3164 = vmatpush.msra.mxu0 0.0
    %3165 = vmatpush.msra.mxu0 0.0
    %v3166 = vand.u32 %v1872, 4294901760
    %3167 = vmatpush.msra.mxu0 %v3166
    %v3168 = vand.u32 %v1871, 4294901760
    %3169 = vmatpush.msra.mxu0 %v3168
    %v3170 = vand.u32 %v1870, 4294901760
    %3171 = vmatpush.msra.mxu0 %v3170
    %v3172 = vand.u32 %v1869, 4294901760
    %3173 = vmatpush.msra.mxu0 %v3172
    %v3174 = vand.u32 %v2992, 4294901760
    %3175 = vmatmul.f32.gmra.mxu0 %v3174
    %v3176 = vpop.f32.mrf.mxu0
    %v3177 = vadd.f32 %v3152, %v3176
    %3178 = vdwg.mxu0
    %v3179 = vxor.u32 %v2983, 2147483648
    %v3180 = vmul.f32 %v3179, 1.442695
    %v3181 = vpow.pop %v3180
    %v3182 = vadd.f32 %v3181, 1.0
    %v3183 = vrcp.pop %v3182
    %v3184 = vmul.f32 %v3182, %v3183
    %v3185 = vsub.f32 1.0, %v3184
    %v3186 = vmul.f32 %v3183, %v3185
    %v3187 = vadd.f32 %v3183, %v3186
    %vm3188 = vweird.f32 %v3182
    %vm3189 = vweird.f32 %v3183
    %vm3190 = vmor %vm3188, %vm3189
    %v3191 = vsel %vm3190, %v3183, %v3187
    %v3192 = vand.u32 2147483647, %v3182
    %vm3193 = vcmp.eq.f32.partialorder %v3192, 8.507059e+37
    %v3194 = vand.u32 %v3182, 2147483648
    %v3195 = vor.u32 1.1754944e-38, %v3194
    %v3196 = vsel %vm3193, %v3195, %v3191
    %v3197 = vmul.f32 1.0, %v3196
    %v3198 = vtanh.pop %v2983
    %v3199 = vmul.f32 %v3197, %v2747
    %3201 = vrot.lane.b32.xlu0 %v3198, 64
    %v3202 = vpop.permute.xlu0 %3201
    %v3204 = vmul.f32 %v3197, %v3202
    %3206 = vrot.lane.b32.xlu0 %v3204, 32
    %v3207 = vpop.permute.xlu0 %3206
    %v3209 = vadd.f32 %v3199, %v3207
    %v3210 = vtanh.pop %v3209
    %3212 = vrot.lane.b32.xlu0 %v3210, 64
    %v3213 = vpop.permute.xlu0 %3212
    %v3215 = vmul.f32 %v3197, %v3213
    %v3216 = vxor.u32 %v3177, 2147483648
    %v3217 = vmul.f32 %v3216, 1.442695
    %v3218 = vpow.pop %v3217
    %v3219 = vadd.f32 %v3218, 1.0
    %v3220 = vrcp.pop %v3219
    %v3221 = vmul.f32 %v3219, %v3220
    %v3222 = vsub.f32 1.0, %v3221
    %v3223 = vmul.f32 %v3220, %v3222
    %v3224 = vadd.f32 %v3220, %v3223
    %vm3225 = vweird.f32 %v3219
    %vm3226 = vweird.f32 %v3220
    %vm3227 = vmor %vm3225, %vm3226
    %v3228 = vsel %vm3227, %v3220, %v3224
    %v3229 = vand.u32 2147483647, %v3219
    %vm3230 = vcmp.eq.f32.partialorder %v3229, 8.507059e+37
    %v3231 = vand.u32 %v3219, 2147483648
    %v3232 = vor.u32 1.1754944e-38, %v3231
    %v3233 = vsel %vm3230, %v3232, %v3228
    %v3234 = vmul.f32 1.0, %v3233
    %v3235 = vtanh.pop %v3177
    %v3236 = vmul.f32 %v3234, %v2784
    %3238 = vrot.lane.b32.xlu0 %v3235, 64
    %v3239 = vpop.permute.xlu0 %3238
    %v3241 = vmul.f32 %v3234, %v3239
    %3243 = vrot.lane.b32.xlu0 %v3241, 32
    %v3244 = vpop.permute.xlu0 %3243
    %v3246 = vadd.f32 %v3236, %v3244
    %v3247 = vtanh.pop %v3246
    %3249 = vrot.lane.b32.xlu0 %v3247, 64
    %v3250 = vpop.permute.xlu0 %3249
    %v3252 = vmul.f32 %v3234, %v3250
    %s3253 = smul.u32 3, 2
    %s3254 = smul.addr %s3253, 8
    %s3255 = scalar_lea.vmem [#allocation2], %s3254
    %v3256 = vld [vmem:[%s3255] sm:$0xff]
    %3258 = vrot.lane.b32.xlu0 %v3215, 32
    %v3259 = vpop.permute.xlu0 %3258
    %v3260 = vsel %vm1877, %v3259, 0
    %3262 = vmatpush.msra.mxu0 0.0
    %3263 = vmatpush.msra.mxu0 0.0
    %3264 = vmatpush.msra.mxu0 0.0
    %3265 = vmatpush.msra.mxu0 0.0
    %3266 = vmatpush.msra.mxu0 0.0
    %3267 = vmatpush.msra.mxu0 0.0
    %3268 = vmatpush.msra.mxu0 0.0
    %3269 = vmatpush.msra.mxu0 0.0
    %3270 = vmatpush.msra.mxu0 0.0
    %3271 = vmatpush.msra.mxu0 0.0
    %3272 = vmatpush.msra.mxu0 0.0
    %3273 = vmatpush.msra.mxu0 0.0
    %v3274 = vand.u32 %v1868, 4294901760
    %3275 = vmatpush.msra.mxu0 %v3274
    %v3276 = vand.u32 %v1867, 4294901760
    %3277 = vmatpush.msra.mxu0 %v3276
    %v3278 = vand.u32 %v1866, 4294901760
    %3279 = vmatpush.msra.mxu0 %v3278
    %v3280 = vand.u32 %v1865, 4294901760
    %3281 = vmatpush.msra.mxu0 %v3280
    %v3282 = vand.u32 %v3260, 4294901760
    %v3283 = vsub.f32 %v3260, %v3282
    %v3284 = vand.u32 %v3283, 4294901760
    %v3285 = vsub.f32 %v3283, %v3284
    %v3286 = vand.u32 %v3285, 4294901760
    %3287 = vmatmul.f32.gmra.mxu0 %v3286
    %v3288 = vpop.f32.mrf.mxu0
    %v3289 = vadd.f32 %v3256, %v3288
    %3290 = vdwg.mxu0
    %3291 = vmatpush.msra.mxu0 0.0
    %3292 = vmatpush.msra.mxu0 0.0
    %3293 = vmatpush.msra.mxu0 0.0
    %3294 = vmatpush.msra.mxu0 0.0
    %3295 = vmatpush.msra.mxu0 0.0
    %3296 = vmatpush.msra.mxu0 0.0
    %3297 = vmatpush.msra.mxu0 0.0
    %3298 = vmatpush.msra.mxu0 0.0
    %3299 = vmatpush.msra.mxu0 0.0
    %3300 = vmatpush.msra.mxu0 0.0
    %3301 = vmatpush.msra.mxu0 0.0
    %3302 = vmatpush.msra.mxu0 0.0
    %v3303 = vand.u32 %v1868, 4294901760
    %v3304 = vsub.f32 %v1868, %v3303
    %v3305 = vand.u32 %v3304, 4294901760
    %v3306 = vsub.f32 %v3304, %v3305
    %v3307 = vand.u32 %v3306, 4294901760
    %3308 = vmatpush.msra.mxu0 %v3307
    %v3309 = vand.u32 %v1867, 4294901760
    %v3310 = vsub.f32 %v1867, %v3309
    %v3311 = vand.u32 %v3310, 4294901760
    %v3312 = vsub.f32 %v3310, %v3311
    %v3313 = vand.u32 %v3312, 4294901760
    %3314 = vmatpush.msra.mxu0 %v3313
    %v3315 = vand.u32 %v1866, 4294901760
    %v3316 = vsub.f32 %v1866, %v3315
    %v3317 = vand.u32 %v3316, 4294901760
    %v3318 = vsub.f32 %v3316, %v3317
    %v3319 = vand.u32 %v3318, 4294901760
    %3320 = vmatpush.msra.mxu0 %v3319
    %v3321 = vand.u32 %v1865, 4294901760
    %v3322 = vsub.f32 %v1865, %v3321
    %v3323 = vand.u32 %v3322, 4294901760
    %v3324 = vsub.f32 %v3322, %v3323
    %v3325 = vand.u32 %v3324, 4294901760
    %3326 = vmatpush.msra.mxu0 %v3325
    %v3327 = vand.u32 %v3260, 4294901760
    %3328 = vmatmul.f32.gmra.mxu0 %v3327
    %v3329 = vpop.f32.mrf.mxu0
    %v3330 = vadd.f32 %v3289, %v3329
    %3331 = vdwg.mxu0
    %3332 = vmatpush.msra.mxu0 0.0
    %3333 = vmatpush.msra.mxu0 0.0
    %3334 = vmatpush.msra.mxu0 0.0
    %3335 = vmatpush.msra.mxu0 0.0
    %3336 = vmatpush.msra.mxu0 0.0
    %3337 = vmatpush.msra.mxu0 0.0
    %3338 = vmatpush.msra.mxu0 0.0
    %3339 = vmatpush.msra.mxu0 0.0
    %3340 = vmatpush.msra.mxu0 0.0
    %3341 = vmatpush.msra.mxu0 0.0
    %3342 = vmatpush.msra.mxu0 0.0
    %3343 = vmatpush.msra.mxu0 0.0
    %v3344 = vand.u32 %v1868, 4294901760
    %v3345 = vsub.f32 %v1868, %v3344
    %3346 = vmatpush.msra.mxu0 %v3345
    %v3347 = vand.u32 %v1867, 4294901760
    %v3348 = vsub.f32 %v1867, %v3347
    %3349 = vmatpush.msra.mxu0 %v3348
    %v3350 = vand.u32 %v1866, 4294901760
    %v3351 = vsub.f32 %v1866, %v3350
    %3352 = vmatpush.msra.mxu0 %v3351
    %v3353 = vand.u32 %v1865, 4294901760
    %v3354 = vsub.f32 %v1865, %v3353
    %3355 = vmatpush.msra.mxu0 %v3354
    %v3356 = vand.u32 %v3260, 4294901760
    %v3357 = vsub.f32 %v3260, %v3356
    %3358 = vmatmul.f32.gmra.mxu0 %v3357
    %v3359 = vpop.f32.mrf.mxu0
    %v3360 = vadd.f32 %v3330, %v3359
    %3361 = vdwg.mxu0
    %3362 = vmatpush.msra.mxu0 0.0
    %3363 = vmatpush.msra.mxu0 0.0
    %3364 = vmatpush.msra.mxu0 0.0
    %3365 = vmatpush.msra.mxu0 0.0
    %3366 = vmatpush.msra.mxu0 0.0
    %3367 = vmatpush.msra.mxu0 0.0
    %3368 = vmatpush.msra.mxu0 0.0
    %3369 = vmatpush.msra.mxu0 0.0
    %3370 = vmatpush.msra.mxu0 0.0
    %3371 = vmatpush.msra.mxu0 0.0
    %3372 = vmatpush.msra.mxu0 0.0
    %3373 = vmatpush.msra.mxu0 0.0
    %v3374 = vand.u32 %v1868, 4294901760
    %3375 = vmatpush.msra.mxu0 %v3374
    %v3376 = vand.u32 %v1867, 4294901760
    %3377 = vmatpush.msra.mxu0 %v3376
    %v3378 = vand.u32 %v1866, 4294901760
    %3379 = vmatpush.msra.mxu0 %v3378
    %v3380 = vand.u32 %v1865, 4294901760
    %3381 = vmatpush.msra.mxu0 %v3380
    %v3382 = vand.u32 %v3260, 4294901760
    %v3383 = vsub.f32 %v3260, %v3382
    %v3384 = vand.u32 %v3383, 4294901760
    %3385 = vmatmul.f32.gmra.mxu0 %v3384
    %v3386 = vpop.f32.mrf.mxu0
    %v3387 = vadd.f32 %v3360, %v3386
    %3388 = vdwg.mxu0
    %3389 = vmatpush.msra.mxu0 0.0
    %3390 = vmatpush.msra.mxu0 0.0
    %3391 = vmatpush.msra.mxu0 0.0
    %3392 = vmatpush.msra.mxu0 0.0
    %3393 = vmatpush.msra.mxu0 0.0
    %3394 = vmatpush.msra.mxu0 0.0
    %3395 = vmatpush.msra.mxu0 0.0
    %3396 = vmatpush.msra.mxu0 0.0
    %3397 = vmatpush.msra.mxu0 0.0
    %3398 = vmatpush.msra.mxu0 0.0
    %3399 = vmatpush.msra.mxu0 0.0
    %3400 = vmatpush.msra.mxu0 0.0
    %v3401 = vand.u32 %v1868, 4294901760
    %v3402 = vsub.f32 %v1868, %v3401
    %v3403 = vand.u32 %v3402, 4294901760
    %3404 = vmatpush.msra.mxu0 %v3403
    %v3405 = vand.u32 %v1867, 4294901760
    %v3406 = vsub.f32 %v1867, %v3405
    %v3407 = vand.u32 %v3406, 4294901760
    %3408 = vmatpush.msra.mxu0 %v3407
    %v3409 = vand.u32 %v1866, 4294901760
    %v3410 = vsub.f32 %v1866, %v3409
    %v3411 = vand.u32 %v3410, 4294901760
    %3412 = vmatpush.msra.mxu0 %v3411
    %v3413 = vand.u32 %v1865, 4294901760
    %v3414 = vsub.f32 %v1865, %v3413
    %v3415 = vand.u32 %v3414, 4294901760
    %3416 = vmatpush.msra.mxu0 %v3415
    %v3417 = vand.u32 %v3260, 4294901760
    %3418 = vmatmul.f32.gmra.mxu0 %v3417
    %v3419 = vpop.f32.mrf.mxu0
    %v3420 = vadd.f32 %v3387, %v3419
    %3421 = vdwg.mxu0
    %3422 = vmatpush.msra.mxu0 0.0
    %3423 = vmatpush.msra.mxu0 0.0
    %3424 = vmatpush.msra.mxu0 0.0
    %3425 = vmatpush.msra.mxu0 0.0
    %3426 = vmatpush.msra.mxu0 0.0
    %3427 = vmatpush.msra.mxu0 0.0
    %3428 = vmatpush.msra.mxu0 0.0
    %3429 = vmatpush.msra.mxu0 0.0
    %3430 = vmatpush.msra.mxu0 0.0
    %3431 = vmatpush.msra.mxu0 0.0
    %3432 = vmatpush.msra.mxu0 0.0
    %3433 = vmatpush.msra.mxu0 0.0
    %v3434 = vand.u32 %v1868, 4294901760
    %3435 = vmatpush.msra.mxu0 %v3434
    %v3436 = vand.u32 %v1867, 4294901760
    %3437 = vmatpush.msra.mxu0 %v3436
    %v3438 = vand.u32 %v1866, 4294901760
    %3439 = vmatpush.msra.mxu0 %v3438
    %v3440 = vand.u32 %v1865, 4294901760
    %3441 = vmatpush.msra.mxu0 %v3440
    %v3442 = vand.u32 %v3260, 4294901760
    %3443 = vmatmul.f32.gmra.mxu0 %v3442
    %v3444 = vpop.f32.mrf.mxu0
    %v3445 = vadd.f32 %v3420, %v3444
    %3446 = vdwg.mxu0
    %s3447 = smul.u32 4, 2
    %s3448 = smul.addr %s3447, 8
    %s3449 = scalar_lea.vmem [#allocation2], %s3448
    %v3450 = vld [vmem:[%s3449 + $0x8] sm:$0xff]
    %3452 = vrot.lane.b32.xlu0 %v3252, 32
    %v3453 = vpop.permute.xlu0 %3452
    %v3454 = vsel %vm1877, %v3453, 0
    %3456 = vmatpush.msra.mxu0 0.0
    %3457 = vmatpush.msra.mxu0 0.0
    %3458 = vmatpush.msra.mxu0 0.0
    %3459 = vmatpush.msra.mxu0 0.0
    %3460 = vmatpush.msra.mxu0 0.0
    %3461 = vmatpush.msra.mxu0 0.0
    %3462 = vmatpush.msra.mxu0 0.0
    %3463 = vmatpush.msra.mxu0 0.0
    %3464 = vmatpush.msra.mxu0 0.0
    %3465 = vmatpush.msra.mxu0 0.0
    %3466 = vmatpush.msra.mxu0 0.0
    %3467 = vmatpush.msra.mxu0 0.0
    %v3468 = vand.u32 %v1872, 4294901760
    %3469 = vmatpush.msra.mxu0 %v3468
    %v3470 = vand.u32 %v1871, 4294901760
    %3471 = vmatpush.msra.mxu0 %v3470
    %v3472 = vand.u32 %v1870, 4294901760
    %3473 = vmatpush.msra.mxu0 %v3472
    %v3474 = vand.u32 %v1869, 4294901760
    %3475 = vmatpush.msra.mxu0 %v3474
    %v3476 = vand.u32 %v3454, 4294901760
    %v3477 = vsub.f32 %v3454, %v3476
    %v3478 = vand.u32 %v3477, 4294901760
    %v3479 = vsub.f32 %v3477, %v3478
    %v3480 = vand.u32 %v3479, 4294901760
    %3481 = vmatmul.f32.gmra.mxu0 %v3480
    %v3482 = vpop.f32.mrf.mxu0
    %v3483 = vadd.f32 %v3450, %v3482
    %3484 = vdwg.mxu0
    %3485 = vmatpush.msra.mxu0 0.0
    %3486 = vmatpush.msra.mxu0 0.0
    %3487 = vmatpush.msra.mxu0 0.0
    %3488 = vmatpush.msra.mxu0 0.0
    %3489 = vmatpush.msra.mxu0 0.0
    %3490 = vmatpush.msra.mxu0 0.0
    %3491 = vmatpush.msra.mxu0 0.0
    %3492 = vmatpush.msra.mxu0 0.0
    %3493 = vmatpush.msra.mxu0 0.0
    %3494 = vmatpush.msra.mxu0 0.0
    %3495 = vmatpush.msra.mxu0 0.0
    %3496 = vmatpush.msra.mxu0 0.0
    %v3497 = vand.u32 %v1872, 4294901760
    %v3498 = vsub.f32 %v1872, %v3497
    %v3499 = vand.u32 %v3498, 4294901760
    %v3500 = vsub.f32 %v3498, %v3499
    %v3501 = vand.u32 %v3500, 4294901760
    %3502 = vmatpush.msra.mxu0 %v3501
    %v3503 = vand.u32 %v1871, 4294901760
    %v3504 = vsub.f32 %v1871, %v3503
    %v3505 = vand.u32 %v3504, 4294901760
    %v3506 = vsub.f32 %v3504, %v3505
    %v3507 = vand.u32 %v3506, 4294901760
    %3508 = vmatpush.msra.mxu0 %v3507
    %v3509 = vand.u32 %v1870, 4294901760
    %v3510 = vsub.f32 %v1870, %v3509
    %v3511 = vand.u32 %v3510, 4294901760
    %v3512 = vsub.f32 %v3510, %v3511
    %v3513 = vand.u32 %v3512, 4294901760
    %3514 = vmatpush.msra.mxu0 %v3513
    %v3515 = vand.u32 %v1869, 4294901760
    %v3516 = vsub.f32 %v1869, %v3515
    %v3517 = vand.u32 %v3516, 4294901760
    %v3518 = vsub.f32 %v3516, %v3517
    %v3519 = vand.u32 %v3518, 4294901760
    %3520 = vmatpush.msra.mxu0 %v3519
    %v3521 = vand.u32 %v3454, 4294901760
    %3522 = vmatmul.f32.gmra.mxu0 %v3521
    %v3523 = vpop.f32.mrf.mxu0
    %v3524 = vadd.f32 %v3483, %v3523
    %3525 = vdwg.mxu0
    %3526 = vmatpush.msra.mxu0 0.0
    %3527 = vmatpush.msra.mxu0 0.0
    %3528 = vmatpush.msra.mxu0 0.0
    %3529 = vmatpush.msra.mxu0 0.0
    %3530 = vmatpush.msra.mxu0 0.0
    %3531 = vmatpush.msra.mxu0 0.0
    %3532 = vmatpush.msra.mxu0 0.0
    %3533 = vmatpush.msra.mxu0 0.0
    %3534 = vmatpush.msra.mxu0 0.0
    %3535 = vmatpush.msra.mxu0 0.0
    %3536 = vmatpush.msra.mxu0 0.0
    %3537 = vmatpush.msra.mxu0 0.0
    %v3538 = vand.u32 %v1872, 4294901760
    %v3539 = vsub.f32 %v1872, %v3538
    %3540 = vmatpush.msra.mxu0 %v3539
    %v3541 = vand.u32 %v1871, 4294901760
    %v3542 = vsub.f32 %v1871, %v3541
    %3543 = vmatpush.msra.mxu0 %v3542
    %v3544 = vand.u32 %v1870, 4294901760
    %v3545 = vsub.f32 %v1870, %v3544
    %3546 = vmatpush.msra.mxu0 %v3545
    %v3547 = vand.u32 %v1869, 4294901760
    %v3548 = vsub.f32 %v1869, %v3547
    %3549 = vmatpush.msra.mxu0 %v3548
    %v3550 = vand.u32 %v3454, 4294901760
    %v3551 = vsub.f32 %v3454, %v3550
    %3552 = vmatmul.f32.gmra.mxu0 %v3551
    %v3553 = vpop.f32.mrf.mxu0
    %v3554 = vadd.f32 %v3524, %v3553
    %3555 = vdwg.mxu0
    %3556 = vmatpush.msra.mxu0 0.0
    %3557 = vmatpush.msra.mxu0 0.0
    %3558 = vmatpush.msra.mxu0 0.0
    %3559 = vmatpush.msra.mxu0 0.0
    %3560 = vmatpush.msra.mxu0 0.0
    %3561 = vmatpush.msra.mxu0 0.0
    %3562 = vmatpush.msra.mxu0 0.0
    %3563 = vmatpush.msra.mxu0 0.0
    %3564 = vmatpush.msra.mxu0 0.0
    %3565 = vmatpush.msra.mxu0 0.0
    %3566 = vmatpush.msra.mxu0 0.0
    %3567 = vmatpush.msra.mxu0 0.0
    %v3568 = vand.u32 %v1872, 4294901760
    %3569 = vmatpush.msra.mxu0 %v3568
    %v3570 = vand.u32 %v1871, 4294901760
    %3571 = vmatpush.msra.mxu0 %v3570
    %v3572 = vand.u32 %v1870, 4294901760
    %3573 = vmatpush.msra.mxu0 %v3572
    %v3574 = vand.u32 %v1869, 4294901760
    %3575 = vmatpush.msra.mxu0 %v3574
    %v3576 = vand.u32 %v3454, 4294901760
    %v3577 = vsub.f32 %v3454, %v3576
    %v3578 = vand.u32 %v3577, 4294901760
    %3579 = vmatmul.f32.gmra.mxu0 %v3578
    %v3580 = vpop.f32.mrf.mxu0
    %v3581 = vadd.f32 %v3554, %v3580
    %3582 = vdwg.mxu0
    %3583 = vmatpush.msra.mxu0 0.0
    %3584 = vmatpush.msra.mxu0 0.0
    %3585 = vmatpush.msra.mxu0 0.0
    %3586 = vmatpush.msra.mxu0 0.0
    %3587 = vmatpush.msra.mxu0 0.0
    %3588 = vmatpush.msra.mxu0 0.0
    %3589 = vmatpush.msra.mxu0 0.0
    %3590 = vmatpush.msra.mxu0 0.0
    %3591 = vmatpush.msra.mxu0 0.0
    %3592 = vmatpush.msra.mxu0 0.0
    %3593 = vmatpush.msra.mxu0 0.0
    %3594 = vmatpush.msra.mxu0 0.0
    %v3595 = vand.u32 %v1872, 4294901760
    %v3596 = vsub.f32 %v1872, %v3595
    %v3597 = vand.u32 %v3596, 4294901760
    %3598 = vmatpush.msra.mxu0 %v3597
    %v3599 = vand.u32 %v1871, 4294901760
    %v3600 = vsub.f32 %v1871, %v3599
    %v3601 = vand.u32 %v3600, 4294901760
    %3602 = vmatpush.msra.mxu0 %v3601
    %v3603 = vand.u32 %v1870, 4294901760
    %v3604 = vsub.f32 %v1870, %v3603
    %v3605 = vand.u32 %v3604, 4294901760
    %3606 = vmatpush.msra.mxu0 %v3605
    %v3607 = vand.u32 %v1869, 4294901760
    %v3608 = vsub.f32 %v1869, %v3607
    %v3609 = vand.u32 %v3608, 4294901760
    %3610 = vmatpush.msra.mxu0 %v3609
    %v3611 = vand.u32 %v3454, 4294901760
    %3612 = vmatmul.f32.gmra.mxu0 %v3611
    %v3613 = vpop.f32.mrf.mxu0
    %v3614 = vadd.f32 %v3581, %v3613
    %3615 = vdwg.mxu0
    %3616 = vmatpush.msra.mxu0 0.0
    %3617 = vmatpush.msra.mxu0 0.0
    %3618 = vmatpush.msra.mxu0 0.0
    %3619 = vmatpush.msra.mxu0 0.0
    %3620 = vmatpush.msra.mxu0 0.0
    %3621 = vmatpush.msra.mxu0 0.0
    %3622 = vmatpush.msra.mxu0 0.0
    %3623 = vmatpush.msra.mxu0 0.0
    %3624 = vmatpush.msra.mxu0 0.0
    %3625 = vmatpush.msra.mxu0 0.0
    %3626 = vmatpush.msra.mxu0 0.0
    %3627 = vmatpush.msra.mxu0 0.0
    %v3628 = vand.u32 %v1872, 4294901760
    %3629 = vmatpush.msra.mxu0 %v3628
    %v3630 = vand.u32 %v1871, 4294901760
    %3631 = vmatpush.msra.mxu0 %v3630
    %v3632 = vand.u32 %v1870, 4294901760
    %3633 = vmatpush.msra.mxu0 %v3632
    %v3634 = vand.u32 %v1869, 4294901760
    %3635 = vmatpush.msra.mxu0 %v3634
    %v3636 = vand.u32 %v3454, 4294901760
    %3637 = vmatmul.f32.gmra.mxu0 %v3636
    %v3638 = vpop.f32.mrf.mxu0
    %v3639 = vadd.f32 %v3614, %v3638
    %3640 = vdwg.mxu0
    %v3641 = vxor.u32 %v3445, 2147483648
    %v3642 = vmul.f32 %v3641, 1.442695
    %v3643 = vpow.pop %v3642
    %v3644 = vadd.f32 %v3643, 1.0
    %v3645 = vrcp.pop %v3644
    %v3646 = vmul.f32 %v3644, %v3645
    %v3647 = vsub.f32 1.0, %v3646
    %v3648 = vmul.f32 %v3645, %v3647
    %v3649 = vadd.f32 %v3645, %v3648
    %vm3650 = vweird.f32 %v3644
    %vm3651 = vweird.f32 %v3645
    %vm3652 = vmor %vm3650, %vm3651
    %v3653 = vsel %vm3652, %v3645, %v3649
    %v3654 = vand.u32 2147483647, %v3644
    %vm3655 = vcmp.eq.f32.partialorder %v3654, 8.507059e+37
    %v3656 = vand.u32 %v3644, 2147483648
    %v3657 = vor.u32 1.1754944e-38, %v3656
    %v3658 = vsel %vm3655, %v3657, %v3653
    %v3659 = vmul.f32 1.0, %v3658
    %v3660 = vtanh.pop %v3445
    %v3661 = vmul.f32 %v3659, %v3209
    %3663 = vrot.lane.b32.xlu0 %v3660, 64
    %v3664 = vpop.permute.xlu0 %3663
    %v3666 = vmul.f32 %v3659, %v3664
    %3668 = vrot.lane.b32.xlu0 %v3666, 32
    %v3669 = vpop.permute.xlu0 %3668
    %v3671 = vadd.f32 %v3661, %v3669
    %v3672 = vtanh.pop %v3671
    %3674 = vrot.lane.b32.xlu0 %v3672, 64
    %v3675 = vpop.permute.xlu0 %3674
    %v3677 = vmul.f32 %v3659, %v3675
    %v3678 = vxor.u32 %v3639, 2147483648
    %v3679 = vmul.f32 %v3678, 1.442695
    %v3680 = vpow.pop %v3679
    %v3681 = vadd.f32 %v3680, 1.0
    %v3682 = vrcp.pop %v3681
    %v3683 = vmul.f32 %v3681, %v3682
    %v3684 = vsub.f32 1.0, %v3683
    %v3685 = vmul.f32 %v3682, %v3684
    %v3686 = vadd.f32 %v3682, %v3685
    %vm3687 = vweird.f32 %v3681
    %vm3688 = vweird.f32 %v3682
    %vm3689 = vmor %vm3687, %vm3688
    %v3690 = vsel %vm3689, %v3682, %v3686
    %v3691 = vand.u32 2147483647, %v3681
    %vm3692 = vcmp.eq.f32.partialorder %v3691, 8.507059e+37
    %v3693 = vand.u32 %v3681, 2147483648
    %v3694 = vor.u32 1.1754944e-38, %v3693
    %v3695 = vsel %vm3692, %v3694, %v3690
    %v3696 = vmul.f32 1.0, %v3695
    %v3697 = vtanh.pop %v3639
    %v3698 = vmul.f32 %v3696, %v3246
    %3700 = vrot.lane.b32.xlu0 %v3697, 64
    %v3701 = vpop.permute.xlu0 %3700
    %v3703 = vmul.f32 %v3696, %v3701
    %3705 = vrot.lane.b32.xlu0 %v3703, 32
    %v3706 = vpop.permute.xlu0 %3705
    %v3708 = vadd.f32 %v3698, %v3706
    %v3709 = vtanh.pop %v3708
    %3711 = vrot.lane.b32.xlu0 %v3709, 64
    %v3712 = vpop.permute.xlu0 %3711
    %v3714 = vmul.f32 %v3696, %v3712
    %v3715 = vld [vmem:[%s3449] sm:$0xff]
    %3717 = vrot.lane.b32.xlu0 %v3677, 32
    %v3718 = vpop.permute.xlu0 %3717
    %v3719 = vsel %vm1877, %v3718, 0
    %3721 = vmatpush.msra.mxu0 0.0
    %3722 = vmatpush.msra.mxu0 0.0
    %3723 = vmatpush.msra.mxu0 0.0
    %3724 = vmatpush.msra.mxu0 0.0
    %3725 = vmatpush.msra.mxu0 0.0
    %3726 = vmatpush.msra.mxu0 0.0
    %3727 = vmatpush.msra.mxu0 0.0
    %3728 = vmatpush.msra.mxu0 0.0
    %3729 = vmatpush.msra.mxu0 0.0
    %3730 = vmatpush.msra.mxu0 0.0
    %3731 = vmatpush.msra.mxu0 0.0
    %3732 = vmatpush.msra.mxu0 0.0
    %v3733 = vand.u32 %v1868, 4294901760
    %3734 = vmatpush.msra.mxu0 %v3733
    %v3735 = vand.u32 %v1867, 4294901760
    %3736 = vmatpush.msra.mxu0 %v3735
    %v3737 = vand.u32 %v1866, 4294901760
    %3738 = vmatpush.msra.mxu0 %v3737
    %v3739 = vand.u32 %v1865, 4294901760
    %3740 = vmatpush.msra.mxu0 %v3739
    %v3741 = vand.u32 %v3719, 4294901760
    %v3742 = vsub.f32 %v3719, %v3741
    %v3743 = vand.u32 %v3742, 4294901760
    %v3744 = vsub.f32 %v3742, %v3743
    %v3745 = vand.u32 %v3744, 4294901760
    %3746 = vmatmul.f32.gmra.mxu0 %v3745
    %v3747 = vpop.f32.mrf.mxu0
    %v3748 = vadd.f32 %v3715, %v3747
    %3749 = vdwg.mxu0
    %3750 = vmatpush.msra.mxu0 0.0
    %3751 = vmatpush.msra.mxu0 0.0
    %3752 = vmatpush.msra.mxu0 0.0
    %3753 = vmatpush.msra.mxu0 0.0
    %3754 = vmatpush.msra.mxu0 0.0
    %3755 = vmatpush.msra.mxu0 0.0
    %3756 = vmatpush.msra.mxu0 0.0
    %3757 = vmatpush.msra.mxu0 0.0
    %3758 = vmatpush.msra.mxu0 0.0
    %3759 = vmatpush.msra.mxu0 0.0
    %3760 = vmatpush.msra.mxu0 0.0
    %3761 = vmatpush.msra.mxu0 0.0
    %v3762 = vand.u32 %v1868, 4294901760
    %v3763 = vsub.f32 %v1868, %v3762
    %v3764 = vand.u32 %v3763, 4294901760
    %v3765 = vsub.f32 %v3763, %v3764
    %v3766 = vand.u32 %v3765, 4294901760
    %3767 = vmatpush.msra.mxu0 %v3766
    %v3768 = vand.u32 %v1867, 4294901760
    %v3769 = vsub.f32 %v1867, %v3768
    %v3770 = vand.u32 %v3769, 4294901760
    %v3771 = vsub.f32 %v3769, %v3770
    %v3772 = vand.u32 %v3771, 4294901760
    %3773 = vmatpush.msra.mxu0 %v3772
    %v3774 = vand.u32 %v1866, 4294901760
    %v3775 = vsub.f32 %v1866, %v3774
    %v3776 = vand.u32 %v3775, 4294901760
    %v3777 = vsub.f32 %v3775, %v3776
    %v3778 = vand.u32 %v3777, 4294901760
    %3779 = vmatpush.msra.mxu0 %v3778
    %v3780 = vand.u32 %v1865, 4294901760
    %v3781 = vsub.f32 %v1865, %v3780
    %v3782 = vand.u32 %v3781, 4294901760
    %v3783 = vsub.f32 %v3781, %v3782
    %v3784 = vand.u32 %v3783, 4294901760
    %3785 = vmatpush.msra.mxu0 %v3784
    %v3786 = vand.u32 %v3719, 4294901760
    %3787 = vmatmul.f32.gmra.mxu0 %v3786
    %v3788 = vpop.f32.mrf.mxu0
    %v3789 = vadd.f32 %v3748, %v3788
    %3790 = vdwg.mxu0
    %3791 = vmatpush.msra.mxu0 0.0
    %3792 = vmatpush.msra.mxu0 0.0
    %3793 = vmatpush.msra.mxu0 0.0
    %3794 = vmatpush.msra.mxu0 0.0
    %3795 = vmatpush.msra.mxu0 0.0
    %3796 = vmatpush.msra.mxu0 0.0
    %3797 = vmatpush.msra.mxu0 0.0
    %3798 = vmatpush.msra.mxu0 0.0
    %3799 = vmatpush.msra.mxu0 0.0
    %3800 = vmatpush.msra.mxu0 0.0
    %3801 = vmatpush.msra.mxu0 0.0
    %3802 = vmatpush.msra.mxu0 0.0
    %v3803 = vand.u32 %v1868, 4294901760
    %v3804 = vsub.f32 %v1868, %v3803
    %3805 = vmatpush.msra.mxu0 %v3804
    %v3806 = vand.u32 %v1867, 4294901760
    %v3807 = vsub.f32 %v1867, %v3806
    %3808 = vmatpush.msra.mxu0 %v3807
    %v3809 = vand.u32 %v1866, 4294901760
    %v3810 = vsub.f32 %v1866, %v3809
    %3811 = vmatpush.msra.mxu0 %v3810
    %v3812 = vand.u32 %v1865, 4294901760
    %v3813 = vsub.f32 %v1865, %v3812
    %3814 = vmatpush.msra.mxu0 %v3813
    %v3815 = vand.u32 %v3719, 4294901760
    %v3816 = vsub.f32 %v3719, %v3815
    %3817 = vmatmul.f32.gmra.mxu0 %v3816
    %v3818 = vpop.f32.mrf.mxu0
    %v3819 = vadd.f32 %v3789, %v3818
    %3820 = vdwg.mxu0
    %3821 = vmatpush.msra.mxu0 0.0
    %3822 = vmatpush.msra.mxu0 0.0
    %3823 = vmatpush.msra.mxu0 0.0
    %3824 = vmatpush.msra.mxu0 0.0
    %3825 = vmatpush.msra.mxu0 0.0
    %3826 = vmatpush.msra.mxu0 0.0
    %3827 = vmatpush.msra.mxu0 0.0
    %3828 = vmatpush.msra.mxu0 0.0
    %3829 = vmatpush.msra.mxu0 0.0
    %3830 = vmatpush.msra.mxu0 0.0
    %3831 = vmatpush.msra.mxu0 0.0
    %3832 = vmatpush.msra.mxu0 0.0
    %v3833 = vand.u32 %v1868, 4294901760
    %3834 = vmatpush.msra.mxu0 %v3833
    %v3835 = vand.u32 %v1867, 4294901760
    %3836 = vmatpush.msra.mxu0 %v3835
    %v3837 = vand.u32 %v1866, 4294901760
    %3838 = vmatpush.msra.mxu0 %v3837
    %v3839 = vand.u32 %v1865, 4294901760
    %3840 = vmatpush.msra.mxu0 %v3839
    %v3841 = vand.u32 %v3719, 4294901760
    %v3842 = vsub.f32 %v3719, %v3841
    %v3843 = vand.u32 %v3842, 4294901760
    %3844 = vmatmul.f32.gmra.mxu0 %v3843
    %v3845 = vpop.f32.mrf.mxu0
    %v3846 = vadd.f32 %v3819, %v3845
    %3847 = vdwg.mxu0
    %3848 = vmatpush.msra.mxu0 0.0
    %3849 = vmatpush.msra.mxu0 0.0
    %3850 = vmatpush.msra.mxu0 0.0
    %3851 = vmatpush.msra.mxu0 0.0
    %3852 = vmatpush.msra.mxu0 0.0
    %3853 = vmatpush.msra.mxu0 0.0
    %3854 = vmatpush.msra.mxu0 0.0
    %3855 = vmatpush.msra.mxu0 0.0
    %3856 = vmatpush.msra.mxu0 0.0
    %3857 = vmatpush.msra.mxu0 0.0
    %3858 = vmatpush.msra.mxu0 0.0
    %3859 = vmatpush.msra.mxu0 0.0
    %v3860 = vand.u32 %v1868, 4294901760
    %v3861 = vsub.f32 %v1868, %v3860
    %v3862 = vand.u32 %v3861, 4294901760
    %3863 = vmatpush.msra.mxu0 %v3862
    %v3864 = vand.u32 %v1867, 4294901760
    %v3865 = vsub.f32 %v1867, %v3864
    %v3866 = vand.u32 %v3865, 4294901760
    %3867 = vmatpush.msra.mxu0 %v3866
    %v3868 = vand.u32 %v1866, 4294901760
    %v3869 = vsub.f32 %v1866, %v3868
    %v3870 = vand.u32 %v3869, 4294901760
    %3871 = vmatpush.msra.mxu0 %v3870
    %v3872 = vand.u32 %v1865, 4294901760
    %v3873 = vsub.f32 %v1865, %v3872
    %v3874 = vand.u32 %v3873, 4294901760
    %3875 = vmatpush.msra.mxu0 %v3874
    %v3876 = vand.u32 %v3719, 4294901760
    %3877 = vmatmul.f32.gmra.mxu0 %v3876
    %v3878 = vpop.f32.mrf.mxu0
    %v3879 = vadd.f32 %v3846, %v3878
    %3880 = vdwg.mxu0
    %3881 = vmatpush.msra.mxu0 0.0
    %3882 = vmatpush.msra.mxu0 0.0
    %3883 = vmatpush.msra.mxu0 0.0
    %3884 = vmatpush.msra.mxu0 0.0
    %3885 = vmatpush.msra.mxu0 0.0
    %3886 = vmatpush.msra.mxu0 0.0
    %3887 = vmatpush.msra.mxu0 0.0
    %3888 = vmatpush.msra.mxu0 0.0
    %3889 = vmatpush.msra.mxu0 0.0
    %3890 = vmatpush.msra.mxu0 0.0
    %3891 = vmatpush.msra.mxu0 0.0
    %3892 = vmatpush.msra.mxu0 0.0
    %v3893 = vand.u32 %v1868, 4294901760
    %3894 = vmatpush.msra.mxu0 %v3893
    %v3895 = vand.u32 %v1867, 4294901760
    %3896 = vmatpush.msra.mxu0 %v3895
    %v3897 = vand.u32 %v1866, 4294901760
    %3898 = vmatpush.msra.mxu0 %v3897
    %v3899 = vand.u32 %v1865, 4294901760
    %3900 = vmatpush.msra.mxu0 %v3899
    %v3901 = vand.u32 %v3719, 4294901760
    %3902 = vmatmul.f32.gmra.mxu0 %v3901
    %v3903 = vpop.f32.mrf.mxu0
    %v3904 = vadd.f32 %v3879, %v3903
    %3905 = vdwg.mxu0
    %v3906 = vld [vmem:[%s3255 + $0x8] sm:$0xff]
    %3908 = vrot.lane.b32.xlu0 %v3714, 32
    %v3909 = vpop.permute.xlu0 %3908
    %v3910 = vsel %vm1877, %v3909, 0
    %3912 = vmatpush.msra.mxu0 0.0
    %3913 = vmatpush.msra.mxu0 0.0
    %3914 = vmatpush.msra.mxu0 0.0
    %3915 = vmatpush.msra.mxu0 0.0
    %3916 = vmatpush.msra.mxu0 0.0
    %3917 = vmatpush.msra.mxu0 0.0
    %3918 = vmatpush.msra.mxu0 0.0
    %3919 = vmatpush.msra.mxu0 0.0
    %3920 = vmatpush.msra.mxu0 0.0
    %3921 = vmatpush.msra.mxu0 0.0
    %3922 = vmatpush.msra.mxu0 0.0
    %3923 = vmatpush.msra.mxu0 0.0
    %v3924 = vand.u32 %v1872, 4294901760
    %3925 = vmatpush.msra.mxu0 %v3924
    %v3926 = vand.u32 %v1871, 4294901760
    %3927 = vmatpush.msra.mxu0 %v3926
    %v3928 = vand.u32 %v1870, 4294901760
    %3929 = vmatpush.msra.mxu0 %v3928
    %v3930 = vand.u32 %v1869, 4294901760
    %3931 = vmatpush.msra.mxu0 %v3930
    %v3932 = vand.u32 %v3910, 4294901760
    %v3933 = vsub.f32 %v3910, %v3932
    %v3934 = vand.u32 %v3933, 4294901760
    %v3935 = vsub.f32 %v3933, %v3934
    %v3936 = vand.u32 %v3935, 4294901760
    %3937 = vmatmul.f32.gmra.mxu0 %v3936
    %v3938 = vpop.f32.mrf.mxu0
    %v3939 = vadd.f32 %v3906, %v3938
    %3940 = vdwg.mxu0
    %3941 = vmatpush.msra.mxu0 0.0
    %3942 = vmatpush.msra.mxu0 0.0
    %3943 = vmatpush.msra.mxu0 0.0
    %3944 = vmatpush.msra.mxu0 0.0
    %3945 = vmatpush.msra.mxu0 0.0
    %3946 = vmatpush.msra.mxu0 0.0
    %3947 = vmatpush.msra.mxu0 0.0
    %3948 = vmatpush.msra.mxu0 0.0
    %3949 = vmatpush.msra.mxu0 0.0
    %3950 = vmatpush.msra.mxu0 0.0
    %3951 = vmatpush.msra.mxu0 0.0
    %3952 = vmatpush.msra.mxu0 0.0
    %v3953 = vand.u32 %v1872, 4294901760
    %v3954 = vsub.f32 %v1872, %v3953
    %v3955 = vand.u32 %v3954, 4294901760
    %v3956 = vsub.f32 %v3954, %v3955
    %v3957 = vand.u32 %v3956, 4294901760
    %3958 = vmatpush.msra.mxu0 %v3957
    %v3959 = vand.u32 %v1871, 4294901760
    %v3960 = vsub.f32 %v1871, %v3959
    %v3961 = vand.u32 %v3960, 4294901760
    %v3962 = vsub.f32 %v3960, %v3961
    %v3963 = vand.u32 %v3962, 4294901760
    %3964 = vmatpush.msra.mxu0 %v3963
    %v3965 = vand.u32 %v1870, 4294901760
    %v3966 = vsub.f32 %v1870, %v3965
    %v3967 = vand.u32 %v3966, 4294901760
    %v3968 = vsub.f32 %v3966, %v3967
    %v3969 = vand.u32 %v3968, 4294901760
    %3970 = vmatpush.msra.mxu0 %v3969
    %v3971 = vand.u32 %v1869, 4294901760
    %v3972 = vsub.f32 %v1869, %v3971
    %v3973 = vand.u32 %v3972, 4294901760
    %v3974 = vsub.f32 %v3972, %v3973
    %v3975 = vand.u32 %v3974, 4294901760
    %3976 = vmatpush.msra.mxu0 %v3975
    %v3977 = vand.u32 %v3910, 4294901760
    %3978 = vmatmul.f32.gmra.mxu0 %v3977
    %v3979 = vpop.f32.mrf.mxu0
    %v3980 = vadd.f32 %v3939, %v3979
    %3981 = vdwg.mxu0
    %3982 = vmatpush.msra.mxu0 0.0
    %3983 = vmatpush.msra.mxu0 0.0
    %3984 = vmatpush.msra.mxu0 0.0
    %3985 = vmatpush.msra.mxu0 0.0
    %3986 = vmatpush.msra.mxu0 0.0
    %3987 = vmatpush.msra.mxu0 0.0
    %3988 = vmatpush.msra.mxu0 0.0
    %3989 = vmatpush.msra.mxu0 0.0
    %3990 = vmatpush.msra.mxu0 0.0
    %3991 = vmatpush.msra.mxu0 0.0
    %3992 = vmatpush.msra.mxu0 0.0
    %3993 = vmatpush.msra.mxu0 0.0
    %v3994 = vand.u32 %v1872, 4294901760
    %v3995 = vsub.f32 %v1872, %v3994
    %3996 = vmatpush.msra.mxu0 %v3995
    %v3997 = vand.u32 %v1871, 4294901760
    %v3998 = vsub.f32 %v1871, %v3997
    %3999 = vmatpush.msra.mxu0 %v3998
    %v4000 = vand.u32 %v1870, 4294901760
    %v4001 = vsub.f32 %v1870, %v4000
    %4002 = vmatpush.msra.mxu0 %v4001
    %v4003 = vand.u32 %v1869, 4294901760
    %v4004 = vsub.f32 %v1869, %v4003
    %4005 = vmatpush.msra.mxu0 %v4004
    %v4006 = vand.u32 %v3910, 4294901760
    %v4007 = vsub.f32 %v3910, %v4006
    %4008 = vmatmul.f32.gmra.mxu0 %v4007
    %v4009 = vpop.f32.mrf.mxu0
    %v4010 = vadd.f32 %v3980, %v4009
    %4011 = vdwg.mxu0
    %4012 = vmatpush.msra.mxu0 0.0
    %4013 = vmatpush.msra.mxu0 0.0
    %4014 = vmatpush.msra.mxu0 0.0
    %4015 = vmatpush.msra.mxu0 0.0
    %4016 = vmatpush.msra.mxu0 0.0
    %4017 = vmatpush.msra.mxu0 0.0
    %4018 = vmatpush.msra.mxu0 0.0
    %4019 = vmatpush.msra.mxu0 0.0
    %4020 = vmatpush.msra.mxu0 0.0
    %4021 = vmatpush.msra.mxu0 0.0
    %4022 = vmatpush.msra.mxu0 0.0
    %4023 = vmatpush.msra.mxu0 0.0
    %v4024 = vand.u32 %v1872, 4294901760
    %4025 = vmatpush.msra.mxu0 %v4024
    %v4026 = vand.u32 %v1871, 4294901760
    %4027 = vmatpush.msra.mxu0 %v4026
    %v4028 = vand.u32 %v1870, 4294901760
    %4029 = vmatpush.msra.mxu0 %v4028
    %v4030 = vand.u32 %v1869, 4294901760
    %4031 = vmatpush.msra.mxu0 %v4030
    %v4032 = vand.u32 %v3910, 4294901760
    %v4033 = vsub.f32 %v3910, %v4032
    %v4034 = vand.u32 %v4033, 4294901760
    %4035 = vmatmul.f32.gmra.mxu0 %v4034
    %v4036 = vpop.f32.mrf.mxu0
    %v4037 = vadd.f32 %v4010, %v4036
    %4038 = vdwg.mxu0
    %4039 = vmatpush.msra.mxu0 0.0
    %4040 = vmatpush.msra.mxu0 0.0
    %4041 = vmatpush.msra.mxu0 0.0
    %4042 = vmatpush.msra.mxu0 0.0
    %4043 = vmatpush.msra.mxu0 0.0
    %4044 = vmatpush.msra.mxu0 0.0
    %4045 = vmatpush.msra.mxu0 0.0
    %4046 = vmatpush.msra.mxu0 0.0
    %4047 = vmatpush.msra.mxu0 0.0
    %4048 = vmatpush.msra.mxu0 0.0
    %4049 = vmatpush.msra.mxu0 0.0
    %4050 = vmatpush.msra.mxu0 0.0
    %v4051 = vand.u32 %v1872, 4294901760
    %v4052 = vsub.f32 %v1872, %v4051
    %v4053 = vand.u32 %v4052, 4294901760
    %4054 = vmatpush.msra.mxu0 %v4053
    %v4055 = vand.u32 %v1871, 4294901760
    %v4056 = vsub.f32 %v1871, %v4055
    %v4057 = vand.u32 %v4056, 4294901760
    %4058 = vmatpush.msra.mxu0 %v4057
    %v4059 = vand.u32 %v1870, 4294901760
    %v4060 = vsub.f32 %v1870, %v4059
    %v4061 = vand.u32 %v4060, 4294901760
    %4062 = vmatpush.msra.mxu0 %v4061
    %v4063 = vand.u32 %v1869, 4294901760
    %v4064 = vsub.f32 %v1869, %v4063
    %v4065 = vand.u32 %v4064, 4294901760
    %4066 = vmatpush.msra.mxu0 %v4065
    %v4067 = vand.u32 %v3910, 4294901760
    %4068 = vmatmul.f32.gmra.mxu0 %v4067
    %v4069 = vpop.f32.mrf.mxu0
    %v4070 = vadd.f32 %v4037, %v4069
    %4071 = vdwg.mxu0
    %4072 = vmatpush.msra.mxu0 0.0
    %4073 = vmatpush.msra.mxu0 0.0
    %4074 = vmatpush.msra.mxu0 0.0
    %4075 = vmatpush.msra.mxu0 0.0
    %4076 = vmatpush.msra.mxu0 0.0
    %4077 = vmatpush.msra.mxu0 0.0
    %4078 = vmatpush.msra.mxu0 0.0
    %4079 = vmatpush.msra.mxu0 0.0
    %4080 = vmatpush.msra.mxu0 0.0
    %4081 = vmatpush.msra.mxu0 0.0
    %4082 = vmatpush.msra.mxu0 0.0
    %4083 = vmatpush.msra.mxu0 0.0
    %v4084 = vand.u32 %v1872, 4294901760
    %4085 = vmatpush.msra.mxu0 %v4084
    %v4086 = vand.u32 %v1871, 4294901760
    %4087 = vmatpush.msra.mxu0 %v4086
    %v4088 = vand.u32 %v1870, 4294901760
    %4089 = vmatpush.msra.mxu0 %v4088
    %v4090 = vand.u32 %v1869, 4294901760
    %4091 = vmatpush.msra.mxu0 %v4090
    %v4092 = vand.u32 %v3910, 4294901760
    %4093 = vmatmul.f32.gmra.mxu0 %v4092
    %v4094 = vpop.f32.mrf.mxu0
    %v4095 = vadd.f32 %v4070, %v4094
    %4096 = vdwg.mxu0
    %v4097 = vxor.u32 %v3904, 2147483648
    %v4098 = vmul.f32 %v4097, 1.442695
    %v4099 = vpow.pop %v4098
    %v4100 = vadd.f32 %v4099, 1.0
    %v4101 = vrcp.pop %v4100
    %v4102 = vmul.f32 %v4100, %v4101
    %v4103 = vsub.f32 1.0, %v4102
    %v4104 = vmul.f32 %v4101, %v4103
    %v4105 = vadd.f32 %v4101, %v4104
    %vm4106 = vweird.f32 %v4100
    %vm4107 = vweird.f32 %v4101
    %vm4108 = vmor %vm4106, %vm4107
    %v4109 = vsel %vm4108, %v4101, %v4105
    %v4110 = vand.u32 2147483647, %v4100
    %vm4111 = vcmp.eq.f32.partialorder %v4110, 8.507059e+37
    %v4112 = vand.u32 %v4100, 2147483648
    %v4113 = vor.u32 1.1754944e-38, %v4112
    %v4114 = vsel %vm4111, %v4113, %v4109
    %v4115 = vmul.f32 1.0, %v4114
    %v4116 = vtanh.pop %v3904
    %v4117 = vmul.f32 %v4115, %v3671
    %4119 = vrot.lane.b32.xlu0 %v4116, 64
    %v4120 = vpop.permute.xlu0 %4119
    %v4122 = vmul.f32 %v4115, %v4120
    %4124 = vrot.lane.b32.xlu0 %v4122, 32
    %v4125 = vpop.permute.xlu0 %4124
    %v4127 = vadd.f32 %v4117, %v4125
    %v4128 = vtanh.pop %v4127
    %4130 = vrot.lane.b32.xlu0 %v4128, 64
    %v4131 = vpop.permute.xlu0 %4130
    %v4133 = vmul.f32 %v4115, %v4131
    %v4134 = vxor.u32 %v4095, 2147483648
    %v4135 = vmul.f32 %v4134, 1.442695
    %v4136 = vpow.pop %v4135
    %v4137 = vadd.f32 %v4136, 1.0
    %v4138 = vrcp.pop %v4137
    %v4139 = vmul.f32 %v4137, %v4138
    %v4140 = vsub.f32 1.0, %v4139
    %v4141 = vmul.f32 %v4138, %v4140
    %v4142 = vadd.f32 %v4138, %v4141
    %vm4143 = vweird.f32 %v4137
    %vm4144 = vweird.f32 %v4138
    %vm4145 = vmor %vm4143, %vm4144
    %v4146 = vsel %vm4145, %v4138, %v4142
    %v4147 = vand.u32 2147483647, %v4137
    %vm4148 = vcmp.eq.f32.partialorder %v4147, 8.507059e+37
    %v4149 = vand.u32 %v4137, 2147483648
    %v4150 = vor.u32 1.1754944e-38, %v4149
    %v4151 = vsel %vm4148, %v4150, %v4146
    %v4152 = vmul.f32 1.0, %v4151
    %v4153 = vtanh.pop %v4095
    %v4154 = vmul.f32 %v4152, %v3708
    %4156 = vrot.lane.b32.xlu0 %v4153, 64
    %v4157 = vpop.permute.xlu0 %4156
    %v4159 = vmul.f32 %v4152, %v4157
    %4161 = vrot.lane.b32.xlu0 %v4159, 32
    %v4162 = vpop.permute.xlu0 %4161
    %v4164 = vadd.f32 %v4154, %v4162
    %v4165 = vtanh.pop %v4164
    %4167 = vrot.lane.b32.xlu0 %v4165, 64
    %v4168 = vpop.permute.xlu0 %4167
    %v4170 = vmul.f32 %v4152, %v4168
    %v4171 = vld [vmem:[%s2987] sm:$0xff]
    %4173 = vrot.lane.b32.xlu0 %v4133, 32
    %v4174 = vpop.permute.xlu0 %4173
    %v4175 = vsel %vm1877, %v4174, 0
    %4177 = vmatpush.msra.mxu0 0.0
    %4178 = vmatpush.msra.mxu0 0.0
    %4179 = vmatpush.msra.mxu0 0.0
    %4180 = vmatpush.msra.mxu0 0.0
    %4181 = vmatpush.msra.mxu0 0.0
    %4182 = vmatpush.msra.mxu0 0.0
    %4183 = vmatpush.msra.mxu0 0.0
    %4184 = vmatpush.msra.mxu0 0.0
    %4185 = vmatpush.msra.mxu0 0.0
    %4186 = vmatpush.msra.mxu0 0.0
    %4187 = vmatpush.msra.mxu0 0.0
    %4188 = vmatpush.msra.mxu0 0.0
    %v4189 = vand.u32 %v1868, 4294901760
    %4190 = vmatpush.msra.mxu0 %v4189
    %v4191 = vand.u32 %v1867, 4294901760
    %4192 = vmatpush.msra.mxu0 %v4191
    %v4193 = vand.u32 %v1866, 4294901760
    %4194 = vmatpush.msra.mxu0 %v4193
    %v4195 = vand.u32 %v1865, 4294901760
    %4196 = vmatpush.msra.mxu0 %v4195
    %v4197 = vand.u32 %v4175, 4294901760
    %v4198 = vsub.f32 %v4175, %v4197
    %v4199 = vand.u32 %v4198, 4294901760
    %v4200 = vsub.f32 %v4198, %v4199
    %v4201 = vand.u32 %v4200, 4294901760
    %4202 = vmatmul.f32.gmra.mxu0 %v4201
    %v4203 = vpop.f32.mrf.mxu0
    %v4204 = vadd.f32 %v4171, %v4203
    %4205 = vdwg.mxu0
    %4206 = vmatpush.msra.mxu0 0.0
    %4207 = vmatpush.msra.mxu0 0.0
    %4208 = vmatpush.msra.mxu0 0.0
    %4209 = vmatpush.msra.mxu0 0.0
    %4210 = vmatpush.msra.mxu0 0.0
    %4211 = vmatpush.msra.mxu0 0.0
    %4212 = vmatpush.msra.mxu0 0.0
    %4213 = vmatpush.msra.mxu0 0.0
    %4214 = vmatpush.msra.mxu0 0.0
    %4215 = vmatpush.msra.mxu0 0.0
    %4216 = vmatpush.msra.mxu0 0.0
    %4217 = vmatpush.msra.mxu0 0.0
    %v4218 = vand.u32 %v1868, 4294901760
    %v4219 = vsub.f32 %v1868, %v4218
    %v4220 = vand.u32 %v4219, 4294901760
    %v4221 = vsub.f32 %v4219, %v4220
    %v4222 = vand.u32 %v4221, 4294901760
    %4223 = vmatpush.msra.mxu0 %v4222
    %v4224 = vand.u32 %v1867, 4294901760
    %v4225 = vsub.f32 %v1867, %v4224
    %v4226 = vand.u32 %v4225, 4294901760
    %v4227 = vsub.f32 %v4225, %v4226
    %v4228 = vand.u32 %v4227, 4294901760
    %4229 = vmatpush.msra.mxu0 %v4228
    %v4230 = vand.u32 %v1866, 4294901760
    %v4231 = vsub.f32 %v1866, %v4230
    %v4232 = vand.u32 %v4231, 4294901760
    %v4233 = vsub.f32 %v4231, %v4232
    %v4234 = vand.u32 %v4233, 4294901760
    %4235 = vmatpush.msra.mxu0 %v4234
    %v4236 = vand.u32 %v1865, 4294901760
    %v4237 = vsub.f32 %v1865, %v4236
    %v4238 = vand.u32 %v4237, 4294901760
    %v4239 = vsub.f32 %v4237, %v4238
    %v4240 = vand.u32 %v4239, 4294901760
    %4241 = vmatpush.msra.mxu0 %v4240
    %v4242 = vand.u32 %v4175, 4294901760
    %4243 = vmatmul.f32.gmra.mxu0 %v4242
    %v4244 = vpop.f32.mrf.mxu0
    %v4245 = vadd.f32 %v4204, %v4244
    %4246 = vdwg.mxu0
    %4247 = vmatpush.msra.mxu0 0.0
    %4248 = vmatpush.msra.mxu0 0.0
    %4249 = vmatpush.msra.mxu0 0.0
    %4250 = vmatpush.msra.mxu0 0.0
    %4251 = vmatpush.msra.mxu0 0.0
    %4252 = vmatpush.msra.mxu0 0.0
    %4253 = vmatpush.msra.mxu0 0.0
    %4254 = vmatpush.msra.mxu0 0.0
    %4255 = vmatpush.msra.mxu0 0.0
    %4256 = vmatpush.msra.mxu0 0.0
    %4257 = vmatpush.msra.mxu0 0.0
    %4258 = vmatpush.msra.mxu0 0.0
    %v4259 = vand.u32 %v1868, 4294901760
    %v4260 = vsub.f32 %v1868, %v4259
    %4261 = vmatpush.msra.mxu0 %v4260
    %v4262 = vand.u32 %v1867, 4294901760
    %v4263 = vsub.f32 %v1867, %v4262
    %4264 = vmatpush.msra.mxu0 %v4263
    %v4265 = vand.u32 %v1866, 4294901760
    %v4266 = vsub.f32 %v1866, %v4265
    %4267 = vmatpush.msra.mxu0 %v4266
    %v4268 = vand.u32 %v1865, 4294901760
    %v4269 = vsub.f32 %v1865, %v4268
    %4270 = vmatpush.msra.mxu0 %v4269
    %v4271 = vand.u32 %v4175, 4294901760
    %v4272 = vsub.f32 %v4175, %v4271
    %4273 = vmatmul.f32.gmra.mxu0 %v4272
    %v4274 = vpop.f32.mrf.mxu0
    %v4275 = vadd.f32 %v4245, %v4274
    %4276 = vdwg.mxu0
    %4277 = vmatpush.msra.mxu0 0.0
    %4278 = vmatpush.msra.mxu0 0.0
    %4279 = vmatpush.msra.mxu0 0.0
    %4280 = vmatpush.msra.mxu0 0.0
    %4281 = vmatpush.msra.mxu0 0.0
    %4282 = vmatpush.msra.mxu0 0.0
    %4283 = vmatpush.msra.mxu0 0.0
    %4284 = vmatpush.msra.mxu0 0.0
    %4285 = vmatpush.msra.mxu0 0.0
    %4286 = vmatpush.msra.mxu0 0.0
    %4287 = vmatpush.msra.mxu0 0.0
    %4288 = vmatpush.msra.mxu0 0.0
    %v4289 = vand.u32 %v1868, 4294901760
    %4290 = vmatpush.msra.mxu0 %v4289
    %v4291 = vand.u32 %v1867, 4294901760
    %4292 = vmatpush.msra.mxu0 %v4291
    %v4293 = vand.u32 %v1866, 4294901760
    %4294 = vmatpush.msra.mxu0 %v4293
    %v4295 = vand.u32 %v1865, 4294901760
    %4296 = vmatpush.msra.mxu0 %v4295
    %v4297 = vand.u32 %v4175, 4294901760
    %v4298 = vsub.f32 %v4175, %v4297
    %v4299 = vand.u32 %v4298, 4294901760
    %4300 = vmatmul.f32.gmra.mxu0 %v4299
    %v4301 = vpop.f32.mrf.mxu0
    %v4302 = vadd.f32 %v4275, %v4301
    %4303 = vdwg.mxu0
    %4304 = vmatpush.msra.mxu0 0.0
    %4305 = vmatpush.msra.mxu0 0.0
    %4306 = vmatpush.msra.mxu0 0.0
    %4307 = vmatpush.msra.mxu0 0.0
    %4308 = vmatpush.msra.mxu0 0.0
    %4309 = vmatpush.msra.mxu0 0.0
    %4310 = vmatpush.msra.mxu0 0.0
    %4311 = vmatpush.msra.mxu0 0.0
    %4312 = vmatpush.msra.mxu0 0.0
    %4313 = vmatpush.msra.mxu0 0.0
    %4314 = vmatpush.msra.mxu0 0.0
    %4315 = vmatpush.msra.mxu0 0.0
    %v4316 = vand.u32 %v1868, 4294901760
    %v4317 = vsub.f32 %v1868, %v4316
    %v4318 = vand.u32 %v4317, 4294901760
    %4319 = vmatpush.msra.mxu0 %v4318
    %v4320 = vand.u32 %v1867, 4294901760
    %v4321 = vsub.f32 %v1867, %v4320
    %v4322 = vand.u32 %v4321, 4294901760
    %4323 = vmatpush.msra.mxu0 %v4322
    %v4324 = vand.u32 %v1866, 4294901760
    %v4325 = vsub.f32 %v1866, %v4324
    %v4326 = vand.u32 %v4325, 4294901760
    %4327 = vmatpush.msra.mxu0 %v4326
    %v4328 = vand.u32 %v1865, 4294901760
    %v4329 = vsub.f32 %v1865, %v4328
    %v4330 = vand.u32 %v4329, 4294901760
    %4331 = vmatpush.msra.mxu0 %v4330
    %v4332 = vand.u32 %v4175, 4294901760
    %4333 = vmatmul.f32.gmra.mxu0 %v4332
    %v4334 = vpop.f32.mrf.mxu0
    %v4335 = vadd.f32 %v4302, %v4334
    %4336 = vdwg.mxu0
    %4337 = vmatpush.msra.mxu0 0.0
    %4338 = vmatpush.msra.mxu0 0.0
    %4339 = vmatpush.msra.mxu0 0.0
    %4340 = vmatpush.msra.mxu0 0.0
    %4341 = vmatpush.msra.mxu0 0.0
    %4342 = vmatpush.msra.mxu0 0.0
    %4343 = vmatpush.msra.mxu0 0.0
    %4344 = vmatpush.msra.mxu0 0.0
    %4345 = vmatpush.msra.mxu0 0.0
    %4346 = vmatpush.msra.mxu0 0.0
    %4347 = vmatpush.msra.mxu0 0.0
    %4348 = vmatpush.msra.mxu0 0.0
    %v4349 = vand.u32 %v1868, 4294901760
    %4350 = vmatpush.msra.mxu0 %v4349
    %v4351 = vand.u32 %v1867, 4294901760
    %4352 = vmatpush.msra.mxu0 %v4351
    %v4353 = vand.u32 %v1866, 4294901760
    %4354 = vmatpush.msra.mxu0 %v4353
    %v4355 = vand.u32 %v1865, 4294901760
    %4356 = vmatpush.msra.mxu0 %v4355
    %v4357 = vand.u32 %v4175, 4294901760
    %4358 = vmatmul.f32.gmra.mxu0 %v4357
    %v4359 = vpop.f32.mrf.mxu0
    %v4360 = vadd.f32 %v4335, %v4359
    %4361 = vdwg.mxu0
    %v4362 = vld [vmem:[%s2793 + $0x8] sm:$0xff]
    %4364 = vrot.lane.b32.xlu0 %v4170, 32
    %v4365 = vpop.permute.xlu0 %4364
    %v4366 = vsel %vm1877, %v4365, 0
    %4368 = vmatpush.msra.mxu0 0.0
    %4369 = vmatpush.msra.mxu0 0.0
    %4370 = vmatpush.msra.mxu0 0.0
    %4371 = vmatpush.msra.mxu0 0.0
    %4372 = vmatpush.msra.mxu0 0.0
    %4373 = vmatpush.msra.mxu0 0.0
    %4374 = vmatpush.msra.mxu0 0.0
    %4375 = vmatpush.msra.mxu0 0.0
    %4376 = vmatpush.msra.mxu0 0.0
    %4377 = vmatpush.msra.mxu0 0.0
    %4378 = vmatpush.msra.mxu0 0.0
    %4379 = vmatpush.msra.mxu0 0.0
    %v4380 = vand.u32 %v1872, 4294901760
    %4381 = vmatpush.msra.mxu0 %v4380
    %v4382 = vand.u32 %v1871, 4294901760
    %4383 = vmatpush.msra.mxu0 %v4382
    %v4384 = vand.u32 %v1870, 4294901760
    %4385 = vmatpush.msra.mxu0 %v4384
    %v4386 = vand.u32 %v1869, 4294901760
    %4387 = vmatpush.msra.mxu0 %v4386
    %v4388 = vand.u32 %v4366, 4294901760
    %v4389 = vsub.f32 %v4366, %v4388
    %v4390 = vand.u32 %v4389, 4294901760
    %v4391 = vsub.f32 %v4389, %v4390
    %v4392 = vand.u32 %v4391, 4294901760
    %4393 = vmatmul.f32.gmra.mxu0 %v4392
    %v4394 = vpop.f32.mrf.mxu0
    %v4395 = vadd.f32 %v4362, %v4394
    %4396 = vdwg.mxu0
    %4397 = vmatpush.msra.mxu0 0.0
    %4398 = vmatpush.msra.mxu0 0.0
    %4399 = vmatpush.msra.mxu0 0.0
    %4400 = vmatpush.msra.mxu0 0.0
    %4401 = vmatpush.msra.mxu0 0.0
    %4402 = vmatpush.msra.mxu0 0.0
    %4403 = vmatpush.msra.mxu0 0.0
    %4404 = vmatpush.msra.mxu0 0.0
    %4405 = vmatpush.msra.mxu0 0.0
    %4406 = vmatpush.msra.mxu0 0.0
    %4407 = vmatpush.msra.mxu0 0.0
    %4408 = vmatpush.msra.mxu0 0.0
    %v4409 = vand.u32 %v1872, 4294901760
    %v4410 = vsub.f32 %v1872, %v4409
    %v4411 = vand.u32 %v4410, 4294901760
    %v4412 = vsub.f32 %v4410, %v4411
    %v4413 = vand.u32 %v4412, 4294901760
    %4414 = vmatpush.msra.mxu0 %v4413
    %v4415 = vand.u32 %v1871, 4294901760
    %v4416 = vsub.f32 %v1871, %v4415
    %v4417 = vand.u32 %v4416, 4294901760
    %v4418 = vsub.f32 %v4416, %v4417
    %v4419 = vand.u32 %v4418, 4294901760
    %4420 = vmatpush.msra.mxu0 %v4419
    %v4421 = vand.u32 %v1870, 4294901760
    %v4422 = vsub.f32 %v1870, %v4421
    %v4423 = vand.u32 %v4422, 4294901760
    %v4424 = vsub.f32 %v4422, %v4423
    %v4425 = vand.u32 %v4424, 4294901760
    %4426 = vmatpush.msra.mxu0 %v4425
    %v4427 = vand.u32 %v1869, 4294901760
    %v4428 = vsub.f32 %v1869, %v4427
    %v4429 = vand.u32 %v4428, 4294901760
    %v4430 = vsub.f32 %v4428, %v4429
    %v4431 = vand.u32 %v4430, 4294901760
    %4432 = vmatpush.msra.mxu0 %v4431
    %v4433 = vand.u32 %v4366, 4294901760
    %4434 = vmatmul.f32.gmra.mxu0 %v4433
    %v4435 = vpop.f32.mrf.mxu0
    %v4436 = vadd.f32 %v4395, %v4435
    %4437 = vdwg.mxu0
    %4438 = vmatpush.msra.mxu0 0.0
    %4439 = vmatpush.msra.mxu0 0.0
    %4440 = vmatpush.msra.mxu0 0.0
    %4441 = vmatpush.msra.mxu0 0.0
    %4442 = vmatpush.msra.mxu0 0.0
    %4443 = vmatpush.msra.mxu0 0.0
    %4444 = vmatpush.msra.mxu0 0.0
    %4445 = vmatpush.msra.mxu0 0.0
    %4446 = vmatpush.msra.mxu0 0.0
    %4447 = vmatpush.msra.mxu0 0.0
    %4448 = vmatpush.msra.mxu0 0.0
    %4449 = vmatpush.msra.mxu0 0.0
    %v4450 = vand.u32 %v1872, 4294901760
    %v4451 = vsub.f32 %v1872, %v4450
    %4452 = vmatpush.msra.mxu0 %v4451
    %v4453 = vand.u32 %v1871, 4294901760
    %v4454 = vsub.f32 %v1871, %v4453
    %4455 = vmatpush.msra.mxu0 %v4454
    %v4456 = vand.u32 %v1870, 4294901760
    %v4457 = vsub.f32 %v1870, %v4456
    %4458 = vmatpush.msra.mxu0 %v4457
    %v4459 = vand.u32 %v1869, 4294901760
    %v4460 = vsub.f32 %v1869, %v4459
    %4461 = vmatpush.msra.mxu0 %v4460
    %v4462 = vand.u32 %v4366, 4294901760
    %v4463 = vsub.f32 %v4366, %v4462
    %4464 = vmatmul.f32.gmra.mxu0 %v4463
    %v4465 = vpop.f32.mrf.mxu0
    %v4466 = vadd.f32 %v4436, %v4465
    %4467 = vdwg.mxu0
    %4468 = vmatpush.msra.mxu0 0.0
    %4469 = vmatpush.msra.mxu0 0.0
    %4470 = vmatpush.msra.mxu0 0.0
    %4471 = vmatpush.msra.mxu0 0.0
    %4472 = vmatpush.msra.mxu0 0.0
    %4473 = vmatpush.msra.mxu0 0.0
    %4474 = vmatpush.msra.mxu0 0.0
    %4475 = vmatpush.msra.mxu0 0.0
    %4476 = vmatpush.msra.mxu0 0.0
    %4477 = vmatpush.msra.mxu0 0.0
    %4478 = vmatpush.msra.mxu0 0.0
    %4479 = vmatpush.msra.mxu0 0.0
    %v4480 = vand.u32 %v1872, 4294901760
    %4481 = vmatpush.msra.mxu0 %v4480
    %v4482 = vand.u32 %v1871, 4294901760
    %4483 = vmatpush.msra.mxu0 %v4482
    %v4484 = vand.u32 %v1870, 4294901760
    %4485 = vmatpush.msra.mxu0 %v4484
    %v4486 = vand.u32 %v1869, 4294901760
    %4487 = vmatpush.msra.mxu0 %v4486
    %v4488 = vand.u32 %v4366, 4294901760
    %v4489 = vsub.f32 %v4366, %v4488
    %v4490 = vand.u32 %v4489, 4294901760
    %4491 = vmatmul.f32.gmra.mxu0 %v4490
    %v4492 = vpop.f32.mrf.mxu0
    %v4493 = vadd.f32 %v4466, %v4492
    %4494 = vdwg.mxu0
    %4495 = vmatpush.msra.mxu0 0.0
    %4496 = vmatpush.msra.mxu0 0.0
    %4497 = vmatpush.msra.mxu0 0.0
    %4498 = vmatpush.msra.mxu0 0.0
    %4499 = vmatpush.msra.mxu0 0.0
    %4500 = vmatpush.msra.mxu0 0.0
    %4501 = vmatpush.msra.mxu0 0.0
    %4502 = vmatpush.msra.mxu0 0.0
    %4503 = vmatpush.msra.mxu0 0.0
    %4504 = vmatpush.msra.mxu0 0.0
    %4505 = vmatpush.msra.mxu0 0.0
    %4506 = vmatpush.msra.mxu0 0.0
    %v4507 = vand.u32 %v1872, 4294901760
    %v4508 = vsub.f32 %v1872, %v4507
    %v4509 = vand.u32 %v4508, 4294901760
    %4510 = vmatpush.msra.mxu0 %v4509
    %v4511 = vand.u32 %v1871, 4294901760
    %v4512 = vsub.f32 %v1871, %v4511
    %v4513 = vand.u32 %v4512, 4294901760
    %4514 = vmatpush.msra.mxu0 %v4513
    %v4515 = vand.u32 %v1870, 4294901760
    %v4516 = vsub.f32 %v1870, %v4515
    %v4517 = vand.u32 %v4516, 4294901760
    %4518 = vmatpush.msra.mxu0 %v4517
    %v4519 = vand.u32 %v1869, 4294901760
    %v4520 = vsub.f32 %v1869, %v4519
    %v4521 = vand.u32 %v4520, 4294901760
    %4522 = vmatpush.msra.mxu0 %v4521
    %v4523 = vand.u32 %v4366, 4294901760
    %4524 = vmatmul.f32.gmra.mxu0 %v4523
    %v4525 = vpop.f32.mrf.mxu0
    %v4526 = vadd.f32 %v4493, %v4525
    %4527 = vdwg.mxu0
    %4528 = vmatpush.msra.mxu0 0.0
    %4529 = vmatpush.msra.mxu0 0.0
    %4530 = vmatpush.msra.mxu0 0.0
    %4531 = vmatpush.msra.mxu0 0.0
    %4532 = vmatpush.msra.mxu0 0.0
    %4533 = vmatpush.msra.mxu0 0.0
    %4534 = vmatpush.msra.mxu0 0.0
    %4535 = vmatpush.msra.mxu0 0.0
    %4536 = vmatpush.msra.mxu0 0.0
    %4537 = vmatpush.msra.mxu0 0.0
    %4538 = vmatpush.msra.mxu0 0.0
    %4539 = vmatpush.msra.mxu0 0.0
    %v4540 = vand.u32 %v1872, 4294901760
    %4541 = vmatpush.msra.mxu0 %v4540
    %v4542 = vand.u32 %v1871, 4294901760
    %4543 = vmatpush.msra.mxu0 %v4542
    %v4544 = vand.u32 %v1870, 4294901760
    %4545 = vmatpush.msra.mxu0 %v4544
    %v4546 = vand.u32 %v1869, 4294901760
    %4547 = vmatpush.msra.mxu0 %v4546
    %v4548 = vand.u32 %v4366, 4294901760
    %4549 = vmatmul.f32.gmra.mxu0 %v4548
    %v4550 = vpop.f32.mrf.mxu0
    %v4551 = vadd.f32 %v4526, %v4550
    %4552 = vdwg.mxu0
    %v4553 = vxor.u32 %v4360, 2147483648
    %v4554 = vmul.f32 %v4553, 1.442695
    %v4555 = vpow.pop %v4554
    %v4556 = vadd.f32 %v4555, 1.0
    %v4557 = vrcp.pop %v4556
    %v4558 = vmul.f32 %v4556, %v4557
    %v4559 = vsub.f32 1.0, %v4558
    %v4560 = vmul.f32 %v4557, %v4559
    %v4561 = vadd.f32 %v4557, %v4560
    %vm4562 = vweird.f32 %v4556
    %vm4563 = vweird.f32 %v4557
    %vm4564 = vmor %vm4562, %vm4563
    %v4565 = vsel %vm4564, %v4557, %v4561
    %v4566 = vand.u32 2147483647, %v4556
    %vm4567 = vcmp.eq.f32.partialorder %v4566, 8.507059e+37
    %v4568 = vand.u32 %v4556, 2147483648
    %v4569 = vor.u32 1.1754944e-38, %v4568
    %v4570 = vsel %vm4567, %v4569, %v4565
    %v4571 = vmul.f32 1.0, %v4570
    %v4572 = vtanh.pop %v4360
    %v4573 = vmul.f32 %v4571, %v4127
    %4575 = vrot.lane.b32.xlu0 %v4572, 64
    %v4576 = vpop.permute.xlu0 %4575
    %v4578 = vmul.f32 %v4571, %v4576
    %4580 = vrot.lane.b32.xlu0 %v4578, 32
    %v4581 = vpop.permute.xlu0 %4580
    %v4583 = vadd.f32 %v4573, %v4581
    %v4584 = vtanh.pop %v4583
    %4586 = vrot.lane.b32.xlu0 %v4584, 64
    %v4587 = vpop.permute.xlu0 %4586
    %v4589 = vmul.f32 %v4571, %v4587
    %v4590 = vxor.u32 %v4551, 2147483648
    %v4591 = vmul.f32 %v4590, 1.442695
    %v4592 = vpow.pop %v4591
    %v4593 = vadd.f32 %v4592, 1.0
    %v4594 = vrcp.pop %v4593
    %v4595 = vmul.f32 %v4593, %v4594
    %v4596 = vsub.f32 1.0, %v4595
    %v4597 = vmul.f32 %v4594, %v4596
    %v4598 = vadd.f32 %v4594, %v4597
    %vm4599 = vweird.f32 %v4593
    %vm4600 = vweird.f32 %v4594
    %vm4601 = vmor %vm4599, %vm4600
    %v4602 = vsel %vm4601, %v4594, %v4598
    %v4603 = vand.u32 2147483647, %v4593
    %vm4604 = vcmp.eq.f32.partialorder %v4603, 8.507059e+37
    %v4605 = vand.u32 %v4593, 2147483648
    %v4606 = vor.u32 1.1754944e-38, %v4605
    %v4607 = vsel %vm4604, %v4606, %v4602
    %v4608 = vmul.f32 1.0, %v4607
    %v4609 = vtanh.pop %v4551
    %v4610 = vmul.f32 %v4608, %v4164
    %4612 = vrot.lane.b32.xlu0 %v4609, 64
    %v4613 = vpop.permute.xlu0 %4612
    %v4615 = vmul.f32 %v4608, %v4613
    %4617 = vrot.lane.b32.xlu0 %v4615, 32
    %v4618 = vpop.permute.xlu0 %4617
    %v4620 = vadd.f32 %v4610, %v4618
    %v4621 = vtanh.pop %v4620
    %4623 = vrot.lane.b32.xlu0 %v4621, 64
    %v4624 = vpop.permute.xlu0 %4623
    %v4626 = vmul.f32 %v4608, %v4624
    %v4627 = vld [vmem:[%s2525] sm:$0xff]
    %4629 = vrot.lane.b32.xlu0 %v4589, 32
    %v4630 = vpop.permute.xlu0 %4629
    %v4631 = vsel %vm1877, %v4630, 0
    %4633 = vmatpush.msra.mxu0 0.0
    %4634 = vmatpush.msra.mxu0 0.0
    %4635 = vmatpush.msra.mxu0 0.0
    %4636 = vmatpush.msra.mxu0 0.0
    %4637 = vmatpush.msra.mxu0 0.0
    %4638 = vmatpush.msra.mxu0 0.0
    %4639 = vmatpush.msra.mxu0 0.0
    %4640 = vmatpush.msra.mxu0 0.0
    %4641 = vmatpush.msra.mxu0 0.0
    %4642 = vmatpush.msra.mxu0 0.0
    %4643 = vmatpush.msra.mxu0 0.0
    %4644 = vmatpush.msra.mxu0 0.0
    %v4645 = vand.u32 %v1868, 4294901760
    %4646 = vmatpush.msra.mxu0 %v4645
    %v4647 = vand.u32 %v1867, 4294901760
    %4648 = vmatpush.msra.mxu0 %v4647
    %v4649 = vand.u32 %v1866, 4294901760
    %4650 = vmatpush.msra.mxu0 %v4649
    %v4651 = vand.u32 %v1865, 4294901760
    %4652 = vmatpush.msra.mxu0 %v4651
    %v4653 = vand.u32 %v4631, 4294901760
    %v4654 = vsub.f32 %v4631, %v4653
    %v4655 = vand.u32 %v4654, 4294901760
    %v4656 = vsub.f32 %v4654, %v4655
    %v4657 = vand.u32 %v4656, 4294901760
    %4658 = vmatmul.f32.gmra.mxu0 %v4657
    %v4659 = vpop.f32.mrf.mxu0
    %v4660 = vadd.f32 %v4627, %v4659
    %4661 = vdwg.mxu0
    %4662 = vmatpush.msra.mxu0 0.0
    %4663 = vmatpush.msra.mxu0 0.0
    %4664 = vmatpush.msra.mxu0 0.0
    %4665 = vmatpush.msra.mxu0 0.0
    %4666 = vmatpush.msra.mxu0 0.0
    %4667 = vmatpush.msra.mxu0 0.0
    %4668 = vmatpush.msra.mxu0 0.0
    %4669 = vmatpush.msra.mxu0 0.0
    %4670 = vmatpush.msra.mxu0 0.0
    %4671 = vmatpush.msra.mxu0 0.0
    %4672 = vmatpush.msra.mxu0 0.0
    %4673 = vmatpush.msra.mxu0 0.0
    %v4674 = vand.u32 %v1868, 4294901760
    %v4675 = vsub.f32 %v1868, %v4674
    %v4676 = vand.u32 %v4675, 4294901760
    %v4677 = vsub.f32 %v4675, %v4676
    %v4678 = vand.u32 %v4677, 4294901760
    %4679 = vmatpush.msra.mxu0 %v4678
    %v4680 = vand.u32 %v1867, 4294901760
    %v4681 = vsub.f32 %v1867, %v4680
    %v4682 = vand.u32 %v4681, 4294901760
    %v4683 = vsub.f32 %v4681, %v4682
    %v4684 = vand.u32 %v4683, 4294901760
    %4685 = vmatpush.msra.mxu0 %v4684
    %v4686 = vand.u32 %v1866, 4294901760
    %v4687 = vsub.f32 %v1866, %v4686
    %v4688 = vand.u32 %v4687, 4294901760
    %v4689 = vsub.f32 %v4687, %v4688
    %v4690 = vand.u32 %v4689, 4294901760
    %4691 = vmatpush.msra.mxu0 %v4690
    %v4692 = vand.u32 %v1865, 4294901760
    %v4693 = vsub.f32 %v1865, %v4692
    %v4694 = vand.u32 %v4693, 4294901760
    %v4695 = vsub.f32 %v4693, %v4694
    %v4696 = vand.u32 %v4695, 4294901760
    %4697 = vmatpush.msra.mxu0 %v4696
    %v4698 = vand.u32 %v4631, 4294901760
    %4699 = vmatmul.f32.gmra.mxu0 %v4698
    %v4700 = vpop.f32.mrf.mxu0
    %v4701 = vadd.f32 %v4660, %v4700
    %4702 = vdwg.mxu0
    %4703 = vmatpush.msra.mxu0 0.0
    %4704 = vmatpush.msra.mxu0 0.0
    %4705 = vmatpush.msra.mxu0 0.0
    %4706 = vmatpush.msra.mxu0 0.0
    %4707 = vmatpush.msra.mxu0 0.0
    %4708 = vmatpush.msra.mxu0 0.0
    %4709 = vmatpush.msra.mxu0 0.0
    %4710 = vmatpush.msra.mxu0 0.0
    %4711 = vmatpush.msra.mxu0 0.0
    %4712 = vmatpush.msra.mxu0 0.0
    %4713 = vmatpush.msra.mxu0 0.0
    %4714 = vmatpush.msra.mxu0 0.0
    %v4715 = vand.u32 %v1868, 4294901760
    %v4716 = vsub.f32 %v1868, %v4715
    %4717 = vmatpush.msra.mxu0 %v4716
    %v4718 = vand.u32 %v1867, 4294901760
    %v4719 = vsub.f32 %v1867, %v4718
    %4720 = vmatpush.msra.mxu0 %v4719
    %v4721 = vand.u32 %v1866, 4294901760
    %v4722 = vsub.f32 %v1866, %v4721
    %4723 = vmatpush.msra.mxu0 %v4722
    %v4724 = vand.u32 %v1865, 4294901760
    %v4725 = vsub.f32 %v1865, %v4724
    %4726 = vmatpush.msra.mxu0 %v4725
    %v4727 = vand.u32 %v4631, 4294901760
    %v4728 = vsub.f32 %v4631, %v4727
    %4729 = vmatmul.f32.gmra.mxu0 %v4728
    %v4730 = vpop.f32.mrf.mxu0
    %v4731 = vadd.f32 %v4701, %v4730
    %4732 = vdwg.mxu0
    %4733 = vmatpush.msra.mxu0 0.0
    %4734 = vmatpush.msra.mxu0 0.0
    %4735 = vmatpush.msra.mxu0 0.0
    %4736 = vmatpush.msra.mxu0 0.0
    %4737 = vmatpush.msra.mxu0 0.0
    %4738 = vmatpush.msra.mxu0 0.0
    %4739 = vmatpush.msra.mxu0 0.0
    %4740 = vmatpush.msra.mxu0 0.0
    %4741 = vmatpush.msra.mxu0 0.0
    %4742 = vmatpush.msra.mxu0 0.0
    %4743 = vmatpush.msra.mxu0 0.0
    %4744 = vmatpush.msra.mxu0 0.0
    %v4745 = vand.u32 %v1868, 4294901760
    %4746 = vmatpush.msra.mxu0 %v4745
    %v4747 = vand.u32 %v1867, 4294901760
    %4748 = vmatpush.msra.mxu0 %v4747
    %v4749 = vand.u32 %v1866, 4294901760
    %4750 = vmatpush.msra.mxu0 %v4749
    %v4751 = vand.u32 %v1865, 4294901760
    %4752 = vmatpush.msra.mxu0 %v4751
    %v4753 = vand.u32 %v4631, 4294901760
    %v4754 = vsub.f32 %v4631, %v4753
    %v4755 = vand.u32 %v4754, 4294901760
    %4756 = vmatmul.f32.gmra.mxu0 %v4755
    %v4757 = vpop.f32.mrf.mxu0
    %v4758 = vadd.f32 %v4731, %v4757
    %4759 = vdwg.mxu0
    %4760 = vmatpush.msra.mxu0 0.0
    %4761 = vmatpush.msra.mxu0 0.0
    %4762 = vmatpush.msra.mxu0 0.0
    %4763 = vmatpush.msra.mxu0 0.0
    %4764 = vmatpush.msra.mxu0 0.0
    %4765 = vmatpush.msra.mxu0 0.0
    %4766 = vmatpush.msra.mxu0 0.0
    %4767 = vmatpush.msra.mxu0 0.0
    %4768 = vmatpush.msra.mxu0 0.0
    %4769 = vmatpush.msra.mxu0 0.0
    %4770 = vmatpush.msra.mxu0 0.0
    %4771 = vmatpush.msra.mxu0 0.0
    %v4772 = vand.u32 %v1868, 4294901760
    %v4773 = vsub.f32 %v1868, %v4772
    %v4774 = vand.u32 %v4773, 4294901760
    %4775 = vmatpush.msra.mxu0 %v4774
    %v4776 = vand.u32 %v1867, 4294901760
    %v4777 = vsub.f32 %v1867, %v4776
    %v4778 = vand.u32 %v4777, 4294901760
    %4779 = vmatpush.msra.mxu0 %v4778
    %v4780 = vand.u32 %v1866, 4294901760
    %v4781 = vsub.f32 %v1866, %v4780
    %v4782 = vand.u32 %v4781, 4294901760
    %4783 = vmatpush.msra.mxu0 %v4782
    %v4784 = vand.u32 %v1865, 4294901760
    %v4785 = vsub.f32 %v1865, %v4784
    %v4786 = vand.u32 %v4785, 4294901760
    %4787 = vmatpush.msra.mxu0 %v4786
    %v4788 = vand.u32 %v4631, 4294901760
    %4789 = vmatmul.f32.gmra.mxu0 %v4788
    %v4790 = vpop.f32.mrf.mxu0
    %v4791 = vadd.f32 %v4758, %v4790
    %4792 = vdwg.mxu0
    %4793 = vmatpush.msra.mxu0 0.0
    %4794 = vmatpush.msra.mxu0 0.0
    %4795 = vmatpush.msra.mxu0 0.0
    %4796 = vmatpush.msra.mxu0 0.0
    %4797 = vmatpush.msra.mxu0 0.0
    %4798 = vmatpush.msra.mxu0 0.0
    %4799 = vmatpush.msra.mxu0 0.0
    %4800 = vmatpush.msra.mxu0 0.0
    %4801 = vmatpush.msra.mxu0 0.0
    %4802 = vmatpush.msra.mxu0 0.0
    %4803 = vmatpush.msra.mxu0 0.0
    %4804 = vmatpush.msra.mxu0 0.0
    %v4805 = vand.u32 %v1868, 4294901760
    %4806 = vmatpush.msra.mxu0 %v4805
    %v4807 = vand.u32 %v1867, 4294901760
    %4808 = vmatpush.msra.mxu0 %v4807
    %v4809 = vand.u32 %v1866, 4294901760
    %4810 = vmatpush.msra.mxu0 %v4809
    %v4811 = vand.u32 %v1865, 4294901760
    %4812 = vmatpush.msra.mxu0 %v4811
    %v4813 = vand.u32 %v4631, 4294901760
    %4814 = vmatmul.f32.gmra.mxu0 %v4813
    %v4815 = vpop.f32.mrf.mxu0
    %v4816 = vadd.f32 %v4791, %v4815
    %4817 = vdwg.mxu0
    %v4818 = vld [vmem:[%s2331 + $0x8] sm:$0xff]
    %4820 = vrot.lane.b32.xlu0 %v4626, 32
    %v4821 = vpop.permute.xlu0 %4820
    %v4822 = vsel %vm1877, %v4821, 0
    %4824 = vmatpush.msra.mxu0 0.0
    %4825 = vmatpush.msra.mxu0 0.0
    %4826 = vmatpush.msra.mxu0 0.0
    %4827 = vmatpush.msra.mxu0 0.0
    %4828 = vmatpush.msra.mxu0 0.0
    %4829 = vmatpush.msra.mxu0 0.0
    %4830 = vmatpush.msra.mxu0 0.0
    %4831 = vmatpush.msra.mxu0 0.0
    %4832 = vmatpush.msra.mxu0 0.0
    %4833 = vmatpush.msra.mxu0 0.0
    %4834 = vmatpush.msra.mxu0 0.0
    %4835 = vmatpush.msra.mxu0 0.0
    %v4836 = vand.u32 %v1872, 4294901760
    %4837 = vmatpush.msra.mxu0 %v4836
    %v4838 = vand.u32 %v1871, 4294901760
    %4839 = vmatpush.msra.mxu0 %v4838
    %v4840 = vand.u32 %v1870, 4294901760
    %4841 = vmatpush.msra.mxu0 %v4840
    %v4842 = vand.u32 %v1869, 4294901760
    %4843 = vmatpush.msra.mxu0 %v4842
    %v4844 = vand.u32 %v4822, 4294901760
    %v4845 = vsub.f32 %v4822, %v4844
    %v4846 = vand.u32 %v4845, 4294901760
    %v4847 = vsub.f32 %v4845, %v4846
    %v4848 = vand.u32 %v4847, 4294901760
    %4849 = vmatmul.f32.gmra.mxu0 %v4848
    %v4850 = vpop.f32.mrf.mxu0
    %v4851 = vadd.f32 %v4818, %v4850
    %4852 = vdwg.mxu0
    %4853 = vmatpush.msra.mxu0 0.0
    %4854 = vmatpush.msra.mxu0 0.0
    %4855 = vmatpush.msra.mxu0 0.0
    %4856 = vmatpush.msra.mxu0 0.0
    %4857 = vmatpush.msra.mxu0 0.0
    %4858 = vmatpush.msra.mxu0 0.0
    %4859 = vmatpush.msra.mxu0 0.0
    %4860 = vmatpush.msra.mxu0 0.0
    %4861 = vmatpush.msra.mxu0 0.0
    %4862 = vmatpush.msra.mxu0 0.0
    %4863 = vmatpush.msra.mxu0 0.0
    %4864 = vmatpush.msra.mxu0 0.0
    %v4865 = vand.u32 %v1872, 4294901760
    %v4866 = vsub.f32 %v1872, %v4865
    %v4867 = vand.u32 %v4866, 4294901760
    %v4868 = vsub.f32 %v4866, %v4867
    %v4869 = vand.u32 %v4868, 4294901760
    %4870 = vmatpush.msra.mxu0 %v4869
    %v4871 = vand.u32 %v1871, 4294901760
    %v4872 = vsub.f32 %v1871, %v4871
    %v4873 = vand.u32 %v4872, 4294901760
    %v4874 = vsub.f32 %v4872, %v4873
    %v4875 = vand.u32 %v4874, 4294901760
    %4876 = vmatpush.msra.mxu0 %v4875
    %v4877 = vand.u32 %v1870, 4294901760
    %v4878 = vsub.f32 %v1870, %v4877
    %v4879 = vand.u32 %v4878, 4294901760
    %v4880 = vsub.f32 %v4878, %v4879
    %v4881 = vand.u32 %v4880, 4294901760
    %4882 = vmatpush.msra.mxu0 %v4881
    %v4883 = vand.u32 %v1869, 4294901760
    %v4884 = vsub.f32 %v1869, %v4883
    %v4885 = vand.u32 %v4884, 4294901760
    %v4886 = vsub.f32 %v4884, %v4885
    %v4887 = vand.u32 %v4886, 4294901760
    %4888 = vmatpush.msra.mxu0 %v4887
    %v4889 = vand.u32 %v4822, 4294901760
    %4890 = vmatmul.f32.gmra.mxu0 %v4889
    %v4891 = vpop.f32.mrf.mxu0
    %v4892 = vadd.f32 %v4851, %v4891
    %4893 = vdwg.mxu0
    %4894 = vmatpush.msra.mxu0 0.0
    %4895 = vmatpush.msra.mxu0 0.0
    %4896 = vmatpush.msra.mxu0 0.0
    %4897 = vmatpush.msra.mxu0 0.0
    %4898 = vmatpush.msra.mxu0 0.0
    %4899 = vmatpush.msra.mxu0 0.0
    %4900 = vmatpush.msra.mxu0 0.0
    %4901 = vmatpush.msra.mxu0 0.0
    %4902 = vmatpush.msra.mxu0 0.0
    %4903 = vmatpush.msra.mxu0 0.0
    %4904 = vmatpush.msra.mxu0 0.0
    %4905 = vmatpush.msra.mxu0 0.0
    %v4906 = vand.u32 %v1872, 4294901760
    %v4907 = vsub.f32 %v1872, %v4906
    %4908 = vmatpush.msra.mxu0 %v4907
    %v4909 = vand.u32 %v1871, 4294901760
    %v4910 = vsub.f32 %v1871, %v4909
    %4911 = vmatpush.msra.mxu0 %v4910
    %v4912 = vand.u32 %v1870, 4294901760
    %v4913 = vsub.f32 %v1870, %v4912
    %4914 = vmatpush.msra.mxu0 %v4913
    %v4915 = vand.u32 %v1869, 4294901760
    %v4916 = vsub.f32 %v1869, %v4915
    %4917 = vmatpush.msra.mxu0 %v4916
    %v4918 = vand.u32 %v4822, 4294901760
    %v4919 = vsub.f32 %v4822, %v4918
    %4920 = vmatmul.f32.gmra.mxu0 %v4919
    %v4921 = vpop.f32.mrf.mxu0
    %v4922 = vadd.f32 %v4892, %v4921
    %4923 = vdwg.mxu0
    %4924 = vmatpush.msra.mxu0 0.0
    %4925 = vmatpush.msra.mxu0 0.0
    %4926 = vmatpush.msra.mxu0 0.0
    %4927 = vmatpush.msra.mxu0 0.0
    %4928 = vmatpush.msra.mxu0 0.0
    %4929 = vmatpush.msra.mxu0 0.0
    %4930 = vmatpush.msra.mxu0 0.0
    %4931 = vmatpush.msra.mxu0 0.0
    %4932 = vmatpush.msra.mxu0 0.0
    %4933 = vmatpush.msra.mxu0 0.0
    %4934 = vmatpush.msra.mxu0 0.0
    %4935 = vmatpush.msra.mxu0 0.0
    %v4936 = vand.u32 %v1872, 4294901760
    %4937 = vmatpush.msra.mxu0 %v4936
    %v4938 = vand.u32 %v1871, 4294901760
    %4939 = vmatpush.msra.mxu0 %v4938
    %v4940 = vand.u32 %v1870, 4294901760
    %4941 = vmatpush.msra.mxu0 %v4940
    %v4942 = vand.u32 %v1869, 4294901760
    %4943 = vmatpush.msra.mxu0 %v4942
    %v4944 = vand.u32 %v4822, 4294901760
    %v4945 = vsub.f32 %v4822, %v4944
    %v4946 = vand.u32 %v4945, 4294901760
    %4947 = vmatmul.f32.gmra.mxu0 %v4946
    %v4948 = vpop.f32.mrf.mxu0
    %v4949 = vadd.f32 %v4922, %v4948
    %4950 = vdwg.mxu0
    %4951 = vmatpush.msra.mxu0 0.0
    %4952 = vmatpush.msra.mxu0 0.0
    %4953 = vmatpush.msra.mxu0 0.0
    %4954 = vmatpush.msra.mxu0 0.0
    %4955 = vmatpush.msra.mxu0 0.0
    %4956 = vmatpush.msra.mxu0 0.0
    %4957 = vmatpush.msra.mxu0 0.0
    %4958 = vmatpush.msra.mxu0 0.0
    %4959 = vmatpush.msra.mxu0 0.0
    %4960 = vmatpush.msra.mxu0 0.0
    %4961 = vmatpush.msra.mxu0 0.0
    %4962 = vmatpush.msra.mxu0 0.0
    %v4963 = vand.u32 %v1872, 4294901760
    %v4964 = vsub.f32 %v1872, %v4963
    %v4965 = vand.u32 %v4964, 4294901760
    %4966 = vmatpush.msra.mxu0 %v4965
    %v4967 = vand.u32 %v1871, 4294901760
    %v4968 = vsub.f32 %v1871, %v4967
    %v4969 = vand.u32 %v4968, 4294901760
    %4970 = vmatpush.msra.mxu0 %v4969
    %v4971 = vand.u32 %v1870, 4294901760
    %v4972 = vsub.f32 %v1870, %v4971
    %v4973 = vand.u32 %v4972, 4294901760
    %4974 = vmatpush.msra.mxu0 %v4973
    %v4975 = vand.u32 %v1869, 4294901760
    %v4976 = vsub.f32 %v1869, %v4975
    %v4977 = vand.u32 %v4976, 4294901760
    %4978 = vmatpush.msra.mxu0 %v4977
    %v4979 = vand.u32 %v4822, 4294901760
    %4980 = vmatmul.f32.gmra.mxu0 %v4979
    %v4981 = vpop.f32.mrf.mxu0
    %v4982 = vadd.f32 %v4949, %v4981
    %4983 = vdwg.mxu0
    %4984 = vmatpush.msra.mxu0 0.0
    %4985 = vmatpush.msra.mxu0 0.0
    %4986 = vmatpush.msra.mxu0 0.0
    %4987 = vmatpush.msra.mxu0 0.0
    %4988 = vmatpush.msra.mxu0 0.0
    %4989 = vmatpush.msra.mxu0 0.0
    %4990 = vmatpush.msra.mxu0 0.0
    %4991 = vmatpush.msra.mxu0 0.0
    %4992 = vmatpush.msra.mxu0 0.0
    %4993 = vmatpush.msra.mxu0 0.0
    %4994 = vmatpush.msra.mxu0 0.0
    %4995 = vmatpush.msra.mxu0 0.0
    %v4996 = vand.u32 %v1872, 4294901760
    %4997 = vmatpush.msra.mxu0 %v4996
    %v4998 = vand.u32 %v1871, 4294901760
    %4999 = vmatpush.msra.mxu0 %v4998
    %v5000 = vand.u32 %v1870, 4294901760
    %5001 = vmatpush.msra.mxu0 %v5000
    %v5002 = vand.u32 %v1869, 4294901760
    %5003 = vmatpush.msra.mxu0 %v5002
    %v5004 = vand.u32 %v4822, 4294901760
    %5005 = vmatmul.f32.gmra.mxu0 %v5004
    %v5006 = vpop.f32.mrf.mxu0
    %v5007 = vadd.f32 %v4982, %v5006
    %5008 = vdwg.mxu0
    %v5009 = vxor.u32 %v4816, 2147483648
    %v5010 = vmul.f32 %v5009, 1.442695
    %v5011 = vpow.pop %v5010
    %v5012 = vadd.f32 %v5011, 1.0
    %v5013 = vrcp.pop %v5012
    %v5014 = vmul.f32 %v5012, %v5013
    %v5015 = vsub.f32 1.0, %v5014
    %v5016 = vmul.f32 %v5013, %v5015
    %v5017 = vadd.f32 %v5013, %v5016
    %vm5018 = vweird.f32 %v5012
    %vm5019 = vweird.f32 %v5013
    %vm5020 = vmor %vm5018, %vm5019
    %v5021 = vsel %vm5020, %v5013, %v5017
    %v5022 = vand.u32 2147483647, %v5012
    %vm5023 = vcmp.eq.f32.partialorder %v5022, 8.507059e+37
    %v5024 = vand.u32 %v5012, 2147483648
    %v5025 = vor.u32 1.1754944e-38, %v5024
    %v5026 = vsel %vm5023, %v5025, %v5021
    %v5027 = vmul.f32 1.0, %v5026
    %v5028 = vtanh.pop %v4816
    %v5029 = vmul.f32 %v5027, %v4583
    %5031 = vrot.lane.b32.xlu0 %v5028, 64
    %v5032 = vpop.permute.xlu0 %5031
    %v5034 = vmul.f32 %v5027, %v5032
    %5036 = vrot.lane.b32.xlu0 %v5034, 32
    %v5037 = vpop.permute.xlu0 %5036
    %v5039 = vadd.f32 %v5029, %v5037
    %v5040 = vtanh.pop %v5039
    %5042 = vrot.lane.b32.xlu0 %v5040, 64
    %v5043 = vpop.permute.xlu0 %5042
    %v5045 = vmul.f32 %v5027, %v5043
    %v5046 = vxor.u32 %v5007, 2147483648
    %v5047 = vmul.f32 %v5046, 1.442695
    %v5048 = vpow.pop %v5047
    %v5049 = vadd.f32 %v5048, 1.0
    %v5050 = vrcp.pop %v5049
    %v5051 = vmul.f32 %v5049, %v5050
    %v5052 = vsub.f32 1.0, %v5051
    %v5053 = vmul.f32 %v5050, %v5052
    %v5054 = vadd.f32 %v5050, %v5053
    %vm5055 = vweird.f32 %v5049
    %vm5056 = vweird.f32 %v5050
    %vm5057 = vmor %vm5055, %vm5056
    %v5058 = vsel %vm5057, %v5050, %v5054
    %v5059 = vand.u32 2147483647, %v5049
    %vm5060 = vcmp.eq.f32.partialorder %v5059, 8.507059e+37
    %v5061 = vand.u32 %v5049, 2147483648
    %v5062 = vor.u32 1.1754944e-38, %v5061
    %v5063 = vsel %vm5060, %v5062, %v5058
    %v5064 = vmul.f32 1.0, %v5063
    %v5065 = vtanh.pop %v5007
    %v5066 = vmul.f32 %v5064, %v4620
    %5068 = vrot.lane.b32.xlu0 %v5065, 64
    %v5069 = vpop.permute.xlu0 %5068
    %v5071 = vmul.f32 %v5064, %v5069
    %5073 = vrot.lane.b32.xlu0 %v5071, 32
    %v5074 = vpop.permute.xlu0 %5073
    %v5076 = vadd.f32 %v5066, %v5074
    %v5077 = vtanh.pop %v5076
    %5079 = vrot.lane.b32.xlu0 %v5077, 64
    %v5080 = vpop.permute.xlu0 %5079
    %v5082 = vmul.f32 %v5064, %v5080
    %v5083 = vld [vmem:[%s2068] sm:$0xff]
    %5085 = vrot.lane.b32.xlu0 %v5045, 32
    %v5086 = vpop.permute.xlu0 %5085
    %v5087 = vsel %vm1877, %v5086, 0
    %5089 = vmatpush.msra.mxu0 0.0
    %5090 = vmatpush.msra.mxu0 0.0
    %5091 = vmatpush.msra.mxu0 0.0
    %5092 = vmatpush.msra.mxu0 0.0
    %5093 = vmatpush.msra.mxu0 0.0
    %5094 = vmatpush.msra.mxu0 0.0
    %5095 = vmatpush.msra.mxu0 0.0
    %5096 = vmatpush.msra.mxu0 0.0
    %5097 = vmatpush.msra.mxu0 0.0
    %5098 = vmatpush.msra.mxu0 0.0
    %5099 = vmatpush.msra.mxu0 0.0
    %5100 = vmatpush.msra.mxu0 0.0
    %v5101 = vand.u32 %v1868, 4294901760
    %5102 = vmatpush.msra.mxu0 %v5101
    %v5103 = vand.u32 %v1867, 4294901760
    %5104 = vmatpush.msra.mxu0 %v5103
    %v5105 = vand.u32 %v1866, 4294901760
    %5106 = vmatpush.msra.mxu0 %v5105
    %v5107 = vand.u32 %v1865, 4294901760
    %5108 = vmatpush.msra.mxu0 %v5107
    %v5109 = vand.u32 %v5087, 4294901760
    %v5110 = vsub.f32 %v5087, %v5109
    %v5111 = vand.u32 %v5110, 4294901760
    %v5112 = vsub.f32 %v5110, %v5111
    %v5113 = vand.u32 %v5112, 4294901760
    %5114 = vmatmul.f32.gmra.mxu0 %v5113
    %v5115 = vpop.f32.mrf.mxu0
    %v5116 = vadd.f32 %v5083, %v5115
    %5117 = vdwg.mxu0
    %5118 = vmatpush.msra.mxu0 0.0
    %5119 = vmatpush.msra.mxu0 0.0
    %5120 = vmatpush.msra.mxu0 0.0
    %5121 = vmatpush.msra.mxu0 0.0
    %5122 = vmatpush.msra.mxu0 0.0
    %5123 = vmatpush.msra.mxu0 0.0
    %5124 = vmatpush.msra.mxu0 0.0
    %5125 = vmatpush.msra.mxu0 0.0
    %5126 = vmatpush.msra.mxu0 0.0
    %5127 = vmatpush.msra.mxu0 0.0
    %5128 = vmatpush.msra.mxu0 0.0
    %5129 = vmatpush.msra.mxu0 0.0
    %v5130 = vand.u32 %v1868, 4294901760
    %v5131 = vsub.f32 %v1868, %v5130
    %v5132 = vand.u32 %v5131, 4294901760
    %v5133 = vsub.f32 %v5131, %v5132
    %v5134 = vand.u32 %v5133, 4294901760
    %5135 = vmatpush.msra.mxu0 %v5134
    %v5136 = vand.u32 %v1867, 4294901760
    %v5137 = vsub.f32 %v1867, %v5136
    %v5138 = vand.u32 %v5137, 4294901760
    %v5139 = vsub.f32 %v5137, %v5138
    %v5140 = vand.u32 %v5139, 4294901760
    %5141 = vmatpush.msra.mxu0 %v5140
    %v5142 = vand.u32 %v1866, 4294901760
    %v5143 = vsub.f32 %v1866, %v5142
    %v5144 = vand.u32 %v5143, 4294901760
    %v5145 = vsub.f32 %v5143, %v5144
    %v5146 = vand.u32 %v5145, 4294901760
    %5147 = vmatpush.msra.mxu0 %v5146
    %v5148 = vand.u32 %v1865, 4294901760
    %v5149 = vsub.f32 %v1865, %v5148
    %v5150 = vand.u32 %v5149, 4294901760
    %v5151 = vsub.f32 %v5149, %v5150
    %v5152 = vand.u32 %v5151, 4294901760
    %5153 = vmatpush.msra.mxu0 %v5152
    %v5154 = vand.u32 %v5087, 4294901760
    %5155 = vmatmul.f32.gmra.mxu0 %v5154
    %v5156 = vpop.f32.mrf.mxu0
    %v5157 = vadd.f32 %v5116, %v5156
    %5158 = vdwg.mxu0
    %5159 = vmatpush.msra.mxu0 0.0
    %5160 = vmatpush.msra.mxu0 0.0
    %5161 = vmatpush.msra.mxu0 0.0
    %5162 = vmatpush.msra.mxu0 0.0
    %5163 = vmatpush.msra.mxu0 0.0
    %5164 = vmatpush.msra.mxu0 0.0
    %5165 = vmatpush.msra.mxu0 0.0
    %5166 = vmatpush.msra.mxu0 0.0
    %5167 = vmatpush.msra.mxu0 0.0
    %5168 = vmatpush.msra.mxu0 0.0
    %5169 = vmatpush.msra.mxu0 0.0
    %5170 = vmatpush.msra.mxu0 0.0
    %v5171 = vand.u32 %v1868, 4294901760
    %v5172 = vsub.f32 %v1868, %v5171
    %5173 = vmatpush.msra.mxu0 %v5172
    %v5174 = vand.u32 %v1867, 4294901760
    %v5175 = vsub.f32 %v1867, %v5174
    %5176 = vmatpush.msra.mxu0 %v5175
    %v5177 = vand.u32 %v1866, 4294901760
    %v5178 = vsub.f32 %v1866, %v5177
    %5179 = vmatpush.msra.mxu0 %v5178
    %v5180 = vand.u32 %v1865, 4294901760
    %v5181 = vsub.f32 %v1865, %v5180
    %5182 = vmatpush.msra.mxu0 %v5181
    %v5183 = vand.u32 %v5087, 4294901760
    %v5184 = vsub.f32 %v5087, %v5183
    %5185 = vmatmul.f32.gmra.mxu0 %v5184
    %v5186 = vpop.f32.mrf.mxu0
    %v5187 = vadd.f32 %v5157, %v5186
    %5188 = vdwg.mxu0
    %5189 = vmatpush.msra.mxu0 0.0
    %5190 = vmatpush.msra.mxu0 0.0
    %5191 = vmatpush.msra.mxu0 0.0
    %5192 = vmatpush.msra.mxu0 0.0
    %5193 = vmatpush.msra.mxu0 0.0
    %5194 = vmatpush.msra.mxu0 0.0
    %5195 = vmatpush.msra.mxu0 0.0
    %5196 = vmatpush.msra.mxu0 0.0
    %5197 = vmatpush.msra.mxu0 0.0
    %5198 = vmatpush.msra.mxu0 0.0
    %5199 = vmatpush.msra.mxu0 0.0
    %5200 = vmatpush.msra.mxu0 0.0
    %v5201 = vand.u32 %v1868, 4294901760
    %5202 = vmatpush.msra.mxu0 %v5201
    %v5203 = vand.u32 %v1867, 4294901760
    %5204 = vmatpush.msra.mxu0 %v5203
    %v5205 = vand.u32 %v1866, 4294901760
    %5206 = vmatpush.msra.mxu0 %v5205
    %v5207 = vand.u32 %v1865, 4294901760
    %5208 = vmatpush.msra.mxu0 %v5207
    %v5209 = vand.u32 %v5087, 4294901760
    %v5210 = vsub.f32 %v5087, %v5209
    %v5211 = vand.u32 %v5210, 4294901760
    %5212 = vmatmul.f32.gmra.mxu0 %v5211
    %v5213 = vpop.f32.mrf.mxu0
    %v5214 = vadd.f32 %v5187, %v5213
    %5215 = vdwg.mxu0
    %5216 = vmatpush.msra.mxu0 0.0
    %5217 = vmatpush.msra.mxu0 0.0
    %5218 = vmatpush.msra.mxu0 0.0
    %5219 = vmatpush.msra.mxu0 0.0
    %5220 = vmatpush.msra.mxu0 0.0
    %5221 = vmatpush.msra.mxu0 0.0
    %5222 = vmatpush.msra.mxu0 0.0
    %5223 = vmatpush.msra.mxu0 0.0
    %5224 = vmatpush.msra.mxu0 0.0
    %5225 = vmatpush.msra.mxu0 0.0
    %5226 = vmatpush.msra.mxu0 0.0
    %5227 = vmatpush.msra.mxu0 0.0
    %v5228 = vand.u32 %v1868, 4294901760
    %v5229 = vsub.f32 %v1868, %v5228
    %v5230 = vand.u32 %v5229, 4294901760
    %5231 = vmatpush.msra.mxu0 %v5230
    %v5232 = vand.u32 %v1867, 4294901760
    %v5233 = vsub.f32 %v1867, %v5232
    %v5234 = vand.u32 %v5233, 4294901760
    %5235 = vmatpush.msra.mxu0 %v5234
    %v5236 = vand.u32 %v1866, 4294901760
    %v5237 = vsub.f32 %v1866, %v5236
    %v5238 = vand.u32 %v5237, 4294901760
    %5239 = vmatpush.msra.mxu0 %v5238
    %v5240 = vand.u32 %v1865, 4294901760
    %v5241 = vsub.f32 %v1865, %v5240
    %v5242 = vand.u32 %v5241, 4294901760
    %5243 = vmatpush.msra.mxu0 %v5242
    %v5244 = vand.u32 %v5087, 4294901760
    %5245 = vmatmul.f32.gmra.mxu0 %v5244
    %v5246 = vpop.f32.mrf.mxu0
    %v5247 = vadd.f32 %v5214, %v5246
    %5248 = vdwg.mxu0
    %5249 = vmatpush.msra.mxu0 0.0
    %5250 = vmatpush.msra.mxu0 0.0
    %5251 = vmatpush.msra.mxu0 0.0
    %5252 = vmatpush.msra.mxu0 0.0
    %5253 = vmatpush.msra.mxu0 0.0
    %5254 = vmatpush.msra.mxu0 0.0
    %5255 = vmatpush.msra.mxu0 0.0
    %5256 = vmatpush.msra.mxu0 0.0
    %5257 = vmatpush.msra.mxu0 0.0
    %5258 = vmatpush.msra.mxu0 0.0
    %5259 = vmatpush.msra.mxu0 0.0
    %5260 = vmatpush.msra.mxu0 0.0
    %v5261 = vand.u32 %v1868, 4294901760
    %5262 = vmatpush.msra.mxu0 %v5261
    %v5263 = vand.u32 %v1867, 4294901760
    %5264 = vmatpush.msra.mxu0 %v5263
    %v5265 = vand.u32 %v1866, 4294901760
    %5266 = vmatpush.msra.mxu0 %v5265
    %v5267 = vand.u32 %v1865, 4294901760
    %5268 = vmatpush.msra.mxu0 %v5267
    %v5269 = vand.u32 %v5087, 4294901760
    %5270 = vmatmul.f32.gmra.mxu0 %v5269
    %v5271 = vpop.f32.mrf.mxu0
    %v5272 = vadd.f32 %v5247, %v5271
    %5273 = vdwg.mxu0
    %v5274 = vld [vmem:[%s1875 + $0x8] sm:$0xff]
    %5276 = vrot.lane.b32.xlu0 %v5082, 32
    %v5277 = vpop.permute.xlu0 %5276
    %v5278 = vsel %vm1877, %v5277, 0
    %5280 = vmatpush.msra.mxu0 0.0
    %5281 = vmatpush.msra.mxu0 0.0
    %5282 = vmatpush.msra.mxu0 0.0
    %5283 = vmatpush.msra.mxu0 0.0
    %5284 = vmatpush.msra.mxu0 0.0
    %5285 = vmatpush.msra.mxu0 0.0
    %5286 = vmatpush.msra.mxu0 0.0
    %5287 = vmatpush.msra.mxu0 0.0
    %5288 = vmatpush.msra.mxu0 0.0
    %5289 = vmatpush.msra.mxu0 0.0
    %5290 = vmatpush.msra.mxu0 0.0
    %5291 = vmatpush.msra.mxu0 0.0
    %v5292 = vand.u32 %v1872, 4294901760
    %5293 = vmatpush.msra.mxu0 %v5292
    %v5294 = vand.u32 %v1871, 4294901760
    %5295 = vmatpush.msra.mxu0 %v5294
    %v5296 = vand.u32 %v1870, 4294901760
    %5297 = vmatpush.msra.mxu0 %v5296
    %v5298 = vand.u32 %v1869, 4294901760
    %5299 = vmatpush.msra.mxu0 %v5298
    %v5300 = vand.u32 %v5278, 4294901760
    %v5301 = vsub.f32 %v5278, %v5300
    %v5302 = vand.u32 %v5301, 4294901760
    %v5303 = vsub.f32 %v5301, %v5302
    %v5304 = vand.u32 %v5303, 4294901760
    %5305 = vmatmul.f32.gmra.mxu0 %v5304
    %v5306 = vpop.f32.mrf.mxu0
    %v5307 = vadd.f32 %v5274, %v5306
    %5308 = vdwg.mxu0
    %5309 = vmatpush.msra.mxu0 0.0
    %5310 = vmatpush.msra.mxu0 0.0
    %5311 = vmatpush.msra.mxu0 0.0
    %5312 = vmatpush.msra.mxu0 0.0
    %5313 = vmatpush.msra.mxu0 0.0
    %5314 = vmatpush.msra.mxu0 0.0
    %5315 = vmatpush.msra.mxu0 0.0
    %5316 = vmatpush.msra.mxu0 0.0
    %5317 = vmatpush.msra.mxu0 0.0
    %5318 = vmatpush.msra.mxu0 0.0
    %5319 = vmatpush.msra.mxu0 0.0
    %5320 = vmatpush.msra.mxu0 0.0
    %v5321 = vand.u32 %v1872, 4294901760
    %v5322 = vsub.f32 %v1872, %v5321
    %v5323 = vand.u32 %v5322, 4294901760
    %v5324 = vsub.f32 %v5322, %v5323
    %v5325 = vand.u32 %v5324, 4294901760
    %5326 = vmatpush.msra.mxu0 %v5325
    %v5327 = vand.u32 %v1871, 4294901760
    %v5328 = vsub.f32 %v1871, %v5327
    %v5329 = vand.u32 %v5328, 4294901760
    %v5330 = vsub.f32 %v5328, %v5329
    %v5331 = vand.u32 %v5330, 4294901760
    %5332 = vmatpush.msra.mxu0 %v5331
    %v5333 = vand.u32 %v1870, 4294901760
    %v5334 = vsub.f32 %v1870, %v5333
    %v5335 = vand.u32 %v5334, 4294901760
    %v5336 = vsub.f32 %v5334, %v5335
    %v5337 = vand.u32 %v5336, 4294901760
    %5338 = vmatpush.msra.mxu0 %v5337
    %v5339 = vand.u32 %v1869, 4294901760
    %v5340 = vsub.f32 %v1869, %v5339
    %v5341 = vand.u32 %v5340, 4294901760
    %v5342 = vsub.f32 %v5340, %v5341
    %v5343 = vand.u32 %v5342, 4294901760
    %5344 = vmatpush.msra.mxu0 %v5343
    %v5345 = vand.u32 %v5278, 4294901760
    %5346 = vmatmul.f32.gmra.mxu0 %v5345
    %v5347 = vpop.f32.mrf.mxu0
    %v5348 = vadd.f32 %v5307, %v5347
    %5349 = vdwg.mxu0
    %5350 = vmatpush.msra.mxu0 0.0
    %5351 = vmatpush.msra.mxu0 0.0
    %5352 = vmatpush.msra.mxu0 0.0
    %5353 = vmatpush.msra.mxu0 0.0
    %5354 = vmatpush.msra.mxu0 0.0
    %5355 = vmatpush.msra.mxu0 0.0
    %5356 = vmatpush.msra.mxu0 0.0
    %5357 = vmatpush.msra.mxu0 0.0
    %5358 = vmatpush.msra.mxu0 0.0
    %5359 = vmatpush.msra.mxu0 0.0
    %5360 = vmatpush.msra.mxu0 0.0
    %5361 = vmatpush.msra.mxu0 0.0
    %v5362 = vand.u32 %v1872, 4294901760
    %v5363 = vsub.f32 %v1872, %v5362
    %5364 = vmatpush.msra.mxu0 %v5363
    %v5365 = vand.u32 %v1871, 4294901760
    %v5366 = vsub.f32 %v1871, %v5365
    %5367 = vmatpush.msra.mxu0 %v5366
    %v5368 = vand.u32 %v1870, 4294901760
    %v5369 = vsub.f32 %v1870, %v5368
    %5370 = vmatpush.msra.mxu0 %v5369
    %v5371 = vand.u32 %v1869, 4294901760
    %v5372 = vsub.f32 %v1869, %v5371
    %5373 = vmatpush.msra.mxu0 %v5372
    %v5374 = vand.u32 %v5278, 4294901760
    %v5375 = vsub.f32 %v5278, %v5374
    %5376 = vmatmul.f32.gmra.mxu0 %v5375
    %v5377 = vpop.f32.mrf.mxu0
    %v5378 = vadd.f32 %v5348, %v5377
    %5379 = vdwg.mxu0
    %5380 = vmatpush.msra.mxu0 0.0
    %5381 = vmatpush.msra.mxu0 0.0
    %5382 = vmatpush.msra.mxu0 0.0
    %5383 = vmatpush.msra.mxu0 0.0
    %5384 = vmatpush.msra.mxu0 0.0
    %5385 = vmatpush.msra.mxu0 0.0
    %5386 = vmatpush.msra.mxu0 0.0
    %5387 = vmatpush.msra.mxu0 0.0
    %5388 = vmatpush.msra.mxu0 0.0
    %5389 = vmatpush.msra.mxu0 0.0
    %5390 = vmatpush.msra.mxu0 0.0
    %5391 = vmatpush.msra.mxu0 0.0
    %v5392 = vand.u32 %v1872, 4294901760
    %5393 = vmatpush.msra.mxu0 %v5392
    %v5394 = vand.u32 %v1871, 4294901760
    %5395 = vmatpush.msra.mxu0 %v5394
    %v5396 = vand.u32 %v1870, 4294901760
    %5397 = vmatpush.msra.mxu0 %v5396
    %v5398 = vand.u32 %v1869, 4294901760
    %5399 = vmatpush.msra.mxu0 %v5398
    %v5400 = vand.u32 %v5278, 4294901760
    %v5401 = vsub.f32 %v5278, %v5400
    %v5402 = vand.u32 %v5401, 4294901760
    %5403 = vmatmul.f32.gmra.mxu0 %v5402
    %v5404 = vpop.f32.mrf.mxu0
    %v5405 = vadd.f32 %v5378, %v5404
    %5406 = vdwg.mxu0
    %5407 = vmatpush.msra.mxu0 0.0
    %5408 = vmatpush.msra.mxu0 0.0
    %5409 = vmatpush.msra.mxu0 0.0
    %5410 = vmatpush.msra.mxu0 0.0
    %5411 = vmatpush.msra.mxu0 0.0
    %5412 = vmatpush.msra.mxu0 0.0
    %5413 = vmatpush.msra.mxu0 0.0
    %5414 = vmatpush.msra.mxu0 0.0
    %5415 = vmatpush.msra.mxu0 0.0
    %5416 = vmatpush.msra.mxu0 0.0
    %5417 = vmatpush.msra.mxu0 0.0
    %5418 = vmatpush.msra.mxu0 0.0
    %v5419 = vand.u32 %v1872, 4294901760
    %v5420 = vsub.f32 %v1872, %v5419
    %v5421 = vand.u32 %v5420, 4294901760
    %5422 = vmatpush.msra.mxu0 %v5421
    %v5423 = vand.u32 %v1871, 4294901760
    %v5424 = vsub.f32 %v1871, %v5423
    %v5425 = vand.u32 %v5424, 4294901760
    %5426 = vmatpush.msra.mxu0 %v5425
    %v5427 = vand.u32 %v1870, 4294901760
    %v5428 = vsub.f32 %v1870, %v5427
    %v5429 = vand.u32 %v5428, 4294901760
    %5430 = vmatpush.msra.mxu0 %v5429
    %v5431 = vand.u32 %v1869, 4294901760
    %v5432 = vsub.f32 %v1869, %v5431
    %v5433 = vand.u32 %v5432, 4294901760
    %5434 = vmatpush.msra.mxu0 %v5433
    %v5435 = vand.u32 %v5278, 4294901760
    %5436 = vmatmul.f32.gmra.mxu0 %v5435
    %v5437 = vpop.f32.mrf.mxu0
    %v5438 = vadd.f32 %v5405, %v5437
    %5439 = vdwg.mxu0
    %5440 = vmatpush.msra.mxu0 0.0
    %5441 = vmatpush.msra.mxu0 0.0
    %5442 = vmatpush.msra.mxu0 0.0
    %5443 = vmatpush.msra.mxu0 0.0
    %5444 = vmatpush.msra.mxu0 0.0
    %5445 = vmatpush.msra.mxu0 0.0
    %5446 = vmatpush.msra.mxu0 0.0
    %5447 = vmatpush.msra.mxu0 0.0
    %5448 = vmatpush.msra.mxu0 0.0
    %5449 = vmatpush.msra.mxu0 0.0
    %5450 = vmatpush.msra.mxu0 0.0
    %5451 = vmatpush.msra.mxu0 0.0
    %v5452 = vand.u32 %v1872, 4294901760
    %5453 = vmatpush.msra.mxu0 %v5452
    %v5454 = vand.u32 %v1871, 4294901760
    %5455 = vmatpush.msra.mxu0 %v5454
    %v5456 = vand.u32 %v1870, 4294901760
    %5457 = vmatpush.msra.mxu0 %v5456
    %v5458 = vand.u32 %v1869, 4294901760
    %5459 = vmatpush.msra.mxu0 %v5458
    %v5460 = vand.u32 %v5278, 4294901760
    %5461 = vmatmul.f32.gmra.mxu0 %v5460
    %v5462 = vpop.f32.mrf.mxu0
    %v5463 = vadd.f32 %v5438, %v5462
    %5464 = vdwg.mxu0
    %v5465 = vxor.u32 %v5272, 2147483648
    %v5466 = vmul.f32 %v5465, 1.442695
    %v5467 = vpow.pop %v5466
    %v5468 = vadd.f32 %v5467, 1.0
    %v5469 = vrcp.pop %v5468
    %v5470 = vmul.f32 %v5468, %v5469
    %v5471 = vsub.f32 1.0, %v5470
    %v5472 = vmul.f32 %v5469, %v5471
    %v5473 = vadd.f32 %v5469, %v5472
    %vm5474 = vweird.f32 %v5468
    %vm5475 = vweird.f32 %v5469
    %vm5476 = vmor %vm5474, %vm5475
    %v5477 = vsel %vm5476, %v5469, %v5473
    %v5478 = vand.u32 2147483647, %v5468
    %vm5479 = vcmp.eq.f32.partialorder %v5478, 8.507059e+37
    %v5480 = vand.u32 %v5468, 2147483648
    %v5481 = vor.u32 1.1754944e-38, %v5480
    %v5482 = vsel %vm5479, %v5481, %v5477
    %v5483 = vmul.f32 1.0, %v5482
    %v5484 = vtanh.pop %v5272
    %v5485 = vmul.f32 %v5483, %v5039
    %5487 = vrot.lane.b32.xlu0 %v5484, 64
    %v5488 = vpop.permute.xlu0 %5487
    %v5490 = vmul.f32 %v5483, %v5488
    %5492 = vrot.lane.b32.xlu0 %v5490, 32
    %v5493 = vpop.permute.xlu0 %5492
    %v5495 = vadd.f32 %v5485, %v5493
    %v5496 = vtanh.pop %v5495
    %5498 = vrot.lane.b32.xlu0 %v5496, 64
    %v5499 = vpop.permute.xlu0 %5498
    %v5501 = vmul.f32 %v5483, %v5499
    %v5502 = vxor.u32 %v5463, 2147483648
    %v5503 = vmul.f32 %v5502, 1.442695
    %v5504 = vpow.pop %v5503
    %v5505 = vadd.f32 %v5504, 1.0
    %v5506 = vrcp.pop %v5505
    %v5507 = vmul.f32 %v5505, %v5506
    %v5508 = vsub.f32 1.0, %v5507
    %v5509 = vmul.f32 %v5506, %v5508
    %v5510 = vadd.f32 %v5506, %v5509
    %vm5511 = vweird.f32 %v5505
    %vm5512 = vweird.f32 %v5506
    %vm5513 = vmor %vm5511, %vm5512
    %v5514 = vsel %vm5513, %v5506, %v5510
    %v5515 = vand.u32 2147483647, %v5505
    %vm5516 = vcmp.eq.f32.partialorder %v5515, 8.507059e+37
    %v5517 = vand.u32 %v5505, 2147483648
    %v5518 = vor.u32 1.1754944e-38, %v5517
    %v5519 = vsel %vm5516, %v5518, %v5514
    %v5520 = vmul.f32 1.0, %v5519
    %v5521 = vtanh.pop %v5463
    %v5522 = vmul.f32 %v5520, %v5076
    %5524 = vrot.lane.b32.xlu0 %v5521, 64
    %v5525 = vpop.permute.xlu0 %5524
    %v5527 = vmul.f32 %v5520, %v5525
    %5529 = vrot.lane.b32.xlu0 %v5527, 32
    %v5530 = vpop.permute.xlu0 %5529
    %v5532 = vadd.f32 %v5522, %v5530
    %v5533 = vtanh.pop %v5532
    %5535 = vrot.lane.b32.xlu0 %v5533, 64
    %v5536 = vpop.permute.xlu0 %5535
    %v5538 = vmul.f32 %v5520, %v5536
    %v5539 = vld [vmem:[%s6] sm:$0x1]
    %v5540 = vld [vmem:[#allocation3] sm:$0x1]
    %v5542 = vperm.slane %v5539, 0
    %5543 = vrot.lane.b32.xlu0 %v5542, 96
    %v5544 = vpop.permute.xlu0 %5543
    %v5546 = vmul.f32 %v5501, %v5544
    %5548 = vrot.lane.b32.xlu0 %v5546, 32
    %v5549 = vpop.permute.xlu0 %5548
    %v5551 = vsel %vm1877, %v5549, 0.0
    %5552 = vadd.xlane.f32.xlu0 %v5551
    %v5553 = vpop.xlane.xlu0 %5552
    %5554 = vrot.lane.b32.xlu0 %v5542, 64
    %v5555 = vpop.permute.xlu0 %5554
    %v5557 = vmul.f32 %v5538, %v5555
    %5559 = vrot.lane.b32.xlu0 %v5557, 32
    %v5560 = vpop.permute.xlu0 %5559
    %v5562 = vsel %vm1877, %v5560, 0.0
    %5563 = vadd.xlane.f32.xlu0 %v5562
    %v5564 = vpop.xlane.xlu0 %5563
    %v5565 = vadd.f32 %v5553, %v5564
    %v5567 = vperm.slane %v5540, 0
    %v5569 = vadd.f32 %v5565, %v5567
    %vm5570 = vcmask 7168
    %5571 = vst.msk [vmem:[%s8] sm:$0xff] %vm5570, %v5569
    // Predicated region
    $region42: #{tpu_custom_call.1} parent=1 // pred_check
      _
    $region43: #{tpu_custom_call.1} parent=1 // pred_check_branch
      %5573 = sbr.rel (0) target = $region45
    $region44: #{tpu_custom_call.1} parent=1 // pred_region
      _
    $region45: #{tpu_custom_call.1} parent=1 // pred_fallthru
      _
    // Predicated region
    $region46: #{tpu_custom_call.1} parent=1 // pred_check
      _
    $region47: #{tpu_custom_call.1} parent=1 // pred_check_branch
      %5575 = sbr.rel (0) target = $region49
    $region48: #{tpu_custom_call.1} parent=1 // pred_region
      _
    $region49: #{tpu_custom_call.1} parent=1 // pred_fallthru
      _
    %5576 = vsyncpa [#allocation5], 1
    %5577 = vsyncpa [#allocation7], 1

</llo_original>
